<compile_context>
chip_gen: v7x
topology: tpu7x:2x2x1
jax: 0.10.0
libtpu: 0.0.40
codegen_flags: <defaults>
</compile_context>

<pallas_src>
import functools

import jax
import jax.numpy as jnp
from jax import lax
from jax.experimental import pallas as pl
from jax.experimental.pallas import tpu as pltpu


# ----------------------------- tiling helper ------------------------------- #

def _plan_tiles(B, T, target_rows=256):
    """Pad T so the (T_pad*B)-row token slab tiles evenly into ~target_rows tiles."""
    t_chunk = max(1, min(T, max(1, target_rows // max(B, 1))))
    while (B * t_chunk) % 8 != 0:          # row tile must be a multiple of 8 sublanes
        t_chunk += 1
    t_pad = ((T + t_chunk - 1) // t_chunk) * t_chunk
    return t_pad, B * t_chunk              # (padded time steps, rows per tile)


# ----------------------------- Pallas kernels ------------------------------ #

def _linear_kernel(x_ref, w_ref, b_ref, o_ref, *, relu):
    y = jnp.dot(x_ref[...], w_ref[...], preferred_element_type=jnp.float32) + b_ref[...]
    if relu:
        y = jnp.maximum(y, 0.0)
    o_ref[...] = y.astype(o_ref.dtype)


def pallas_linear(x, w, b, tile, relu=False, out_dtype=jnp.float32):
    n, k = x.shape
    m = w.shape[1]
    return pl.pallas_call(
        functools.partial(_linear_kernel, relu=relu),
        out_shape=jax.ShapeDtypeStruct((n, m), out_dtype),
        grid=(n // tile,),
        in_specs=[pl.BlockSpec((tile, k), lambda i: (i, 0)),
                  pl.BlockSpec((k, m), lambda i: (0, 0)),       # weights VMEM-resident
                  pl.BlockSpec((1, m), lambda i: (0, 0))],
        out_specs=pl.BlockSpec((tile, m), lambda i: (i, 0)),
        compiler_params=pltpu.CompilerParams(dimension_semantics=("parallel",)),
    )(x, w, b.reshape(1, m).astype(jnp.float32))


def _layer_proj_kernel(x_ref, w_ref, b_ref, xgf_ref, xgb_ref, gh_ref, *, H):
    # one matmul producing [xg_fwd | xg_bwd | gate_pre | highway_pre] (width 12H)
    y = jnp.dot(x_ref[...], w_ref[...], preferred_element_type=jnp.float32) + b_ref[...]
    xgf_ref[...] = y[:, 0 * H:4 * H]
    xgb_ref[...] = y[:, 4 * H:8 * H]
    gh_ref[...] = y[:, 8 * H:12 * H]


def pallas_layer_proj(x, w_all, b_all, H, tile):
    n, k = x.shape
    m = w_all.shape[1]                                           # 12H
    out4 = jax.ShapeDtypeStruct((n, 4 * H), jnp.float32)
    return pl.pallas_call(
        functools.partial(_layer_proj_kernel, H=H),
        out_shape=(out4, out4, out4),
        grid=(n // tile,),
        in_specs=[pl.BlockSpec((tile, k), lambda i: (i, 0)),
                  pl.BlockSpec((k, m), lambda i: (0, 0)),
                  pl.BlockSpec((1, m), lambda i: (0, 0))],
        out_specs=(pl.BlockSpec((tile, 4 * H), lambda i: (i, 0)),
                   pl.BlockSpec((tile, 4 * H), lambda i: (i, 0)),
                   pl.BlockSpec((tile, 4 * H), lambda i: (i, 0))),
        compiler_params=pltpu.CompilerParams(dimension_semantics=("parallel",)),
    )(x, w_all, b_all.reshape(1, m))


def _bilstm_kernel(xgf_ref, xgb_ref, mf_ref, mb_ref, whhf_ref, whhb_ref,
                   hf_out, hb_out, hf_s, cf_s, hb_s, cb_s, *, H):
    # Fused bidirectional LSTM step: grid axis = time ("arbitrary").
    # Forward reads xg at t; backward reads xg at T-1-t (index_map) and gates its
    # state with the validity mask -> exact pack_padded_sequence reverse semantics.
    t = pl.program_id(0)

    @pl.when(t == 0)
    def _():
        hf_s[...] = jnp.zeros_like(hf_s)
        cf_s[...] = jnp.zeros_like(cf_s)
        hb_s[...] = jnp.zeros_like(hb_s)
        cb_s[...] = jnp.zeros_like(cb_s)

    def cell(xg, h, c, whh):
        g = xg + jnp.dot(h, whh, preferred_element_type=jnp.float32)
        # TODO(synk): gate lane-spans are not 128-padded (H small); keeps MXU work minimal.
        i = jax.nn.sigmoid(g[:, 0 * H:1 * H])
        f = jax.nn.sigmoid(g[:, 1 * H:2 * H])
        gg = jnp.tanh(g[:, 2 * H:3 * H])
        o = jax.nn.sigmoid(g[:, 3 * H:4 * H])
        c2 = f * c + i * gg
        return o * jnp.tanh(c2), c2

    mf = mf_ref[0]                                   # (B, 1) validity at time t
    h2, c2 = cell(xgf_ref[0], hf_s[...], cf_s[...], whhf_ref[...])
    hf_s[...] = mf * h2 + (1.0 - mf) * hf_s[...]
    cf_s[...] = mf * c2 + (1.0 - mf) * cf_s[...]
    hf_out[0] = hf_s[...]

    mb = mb_ref[0]                                   # (B, 1) validity at time T-1-t
    h2b, c2b = cell(xgb_ref[0], hb_s[...], cb_s[...], whhb_ref[...])
    hb_s[...] = mb * h2b + (1.0 - mb) * hb_s[...]
    cb_s[...] = mb * c2b + (1.0 - mb) * cb_s[...]
    hb_out[0] = hb_s[...]


def pallas_bilstm(xgf, xgb, mask, whh_f, whh_b, H):
    T, B, H4 = xgf.shape
    out = jax.ShapeDtypeStruct((T, B, H), jnp.float32)
    return pl.pallas_call(
        functools.partial(_bilstm_kernel, H=H),
        out_shape=(out, out),
        grid=(T,),
        in_specs=[pl.BlockSpec((1, B, H4), lambda t: (t, 0, 0)),
                  pl.BlockSpec((1, B, H4), lambda t: (T - 1 - t, 0, 0)),
                  pl.BlockSpec((1, B, 1), lambda t: (t, 0, 0)),
                  pl.BlockSpec((1, B, 1), lambda t: (T - 1 - t, 0, 0)),
                  pl.BlockSpec((H, H4), lambda t: (0, 0)),
                  pl.BlockSpec((H, H4), lambda t: (0, 0))],
        out_specs=(pl.BlockSpec((1, B, H), lambda t: (t, 0, 0)),
                   pl.BlockSpec((1, B, H), lambda t: (T - 1 - t, 0, 0))),
        scratch_shapes=[pltpu.VMEM((B, H), jnp.float32) for _ in range(4)],
        compiler_params=pltpu.CompilerParams(dimension_semantics=("arbitrary",)),
    )(xgf, xgb, mask, mask, whh_f, whh_b)


def _combine_kernel(hf_ref, hb_ref, gh_ref, m_ref, o_ref, *, H):
    # HighwayLSTM combine: lstm_out + sigmoid(gate(x)) * tanh(highway(x)), masked.
    gh = gh_ref[...]
    gate = jax.nn.sigmoid(gh[:, 0:2 * H])
    hw = jnp.tanh(gh[:, 2 * H:4 * H])
    lstm = jnp.concatenate([hf_ref[...], hb_ref[...]], axis=1)
    o_ref[...] = ((lstm + gate * hw) * m_ref[...]).astype(o_ref.dtype)


def pallas_highway_combine(hf, hb, gh, mask_col, H, tile):
    n = hf.shape[0]
    return pl.pallas_call(
        functools.partial(_combine_kernel, H=H),
        out_shape=jax.ShapeDtypeStruct((n, 2 * H), jnp.bfloat16),
        grid=(n // tile,),
        in_specs=[pl.BlockSpec((tile, H), lambda i: (i, 0)),
                  pl.BlockSpec((tile, H), lambda i: (i, 0)),
                  pl.BlockSpec((tile, 4 * H), lambda i: (i, 0)),
                  pl.BlockSpec((tile, 1), lambda i: (i, 0))],
        out_specs=pl.BlockSpec((tile, 2 * H), lambda i: (i, 0)),
        compiler_params=pltpu.CompilerParams(dimension_semantics=("parallel",)),
    )(hf, hb, gh, mask_col)


def _heads_kernel(hid_ref, w_ref, b_ref, lab_ref, probs_ref, loss_ref,
                  *, segs, c_pad, n_heads):
    # All classifier heads fused: one (tile, DB)@(DB, C_pad) matmul, then per-head
    # softmax (ignore_index=0 NLL reduced in-kernel to per-tile [sum, count] pairs).
    logits = jnp.dot(hid_ref[...], w_ref[...], preferred_element_type=jnp.float32) + b_ref[...]
    labs = lab_ref[...]
    parts, stats = [], []
    used = 0
    for h, (s0, cs) in enumerate(segs):
        lg = logits[:, s0:s0 + cs]
        lab = labs[:, h:h + 1]
        m = jnp.max(lg, axis=-1, keepdims=True)
        e = jnp.exp(lg - m)
        s = jnp.sum(e, axis=-1, keepdims=True)
        parts.append(e * pl.reciprocal(s, approx=True))
        lse = m + jnp.log(s)
        iota = lax.broadcasted_iota(jnp.int32, lg.shape, 1)
        picked = jnp.sum(jnp.where(iota == lab, lg, 0.0), axis=-1, keepdims=True)
        vmask = (lab != 0).astype(jnp.float32)          # CrossEntropy ignore_index=0
        nll = (lse - picked) * vmask
        stats.append(jnp.sum(nll, axis=0, keepdims=True))     # (1, 1)
        stats.append(jnp.sum(vmask, axis=0, keepdims=True))   # (1, 1)
        used = s0 + cs
    if c_pad > used:
        parts.append(jnp.zeros((logits.shape[0], c_pad - used), jnp.float32))
    probs_ref[...] = jnp.concatenate(parts, axis=1)           # lane-dense full-width store
    row = jnp.concatenate(stats, axis=1)                      # (1, 2*n_heads)
    row = jnp.concatenate([row, jnp.zeros((1, 128 - 2 * n_heads), jnp.float32)], axis=1)
    loss_ref[...] = jnp.concatenate([row, jnp.zeros((7, 128), jnp.float32)], axis=0)


def pallas_heads(hid, w, b, labels, segs, c_pad, tile):
    n, k = hid.shape
    n_heads = labels.shape[1]
    num_tiles = n // tile
    return pl.pallas_call(
        functools.partial(_heads_kernel, segs=tuple(segs), c_pad=c_pad, n_heads=n_heads),
        out_shape=(jax.ShapeDtypeStruct((n, c_pad), jnp.float32),
                   jax.ShapeDtypeStruct((num_tiles * 8, 128), jnp.float32)),
        grid=(num_tiles,),
        in_specs=[pl.BlockSpec((tile, k), lambda i: (i, 0)),
                  pl.BlockSpec((k, c_pad), lambda i: (0, 0)),
                  pl.BlockSpec((1, c_pad), lambda i: (0, 0)),
                  pl.BlockSpec((tile, n_heads), lambda i: (i, 0))],
        out_specs=(pl.BlockSpec((tile, c_pad), lambda i: (i, 0)),
                   pl.BlockSpec((8, 128), lambda i: (i, 0))),
        compiler_params=pltpu.CompilerParams(dimension_semantics=("parallel",)),
    )(hid, w, b.reshape(1, c_pad), labels)


# ------------------------------ JAX glue ----------------------------------- #

def tagger_forward(p, cfg, word, pretrained, upos, xpos, ufeats, sentlens):
    B, T = word.shape
    H = cfg['hidden_dim']
    feats_lens = cfg['feats_lens']
    n_heads = 2 + len(feats_lens)
    T_pad, tile = _plan_tiles(B, T)
    N = B * T_pad

    def to_tm(x2d):                                   # (B, T) -> time-major (T_pad, B)
        return jnp.pad(jnp.transpose(x2d), ((0, T_pad - T), (0, 0)))

    valid_tm = jnp.arange(T_pad)[:, None] < sentlens[None, :]      # (T_pad, B)
    mask_tm = valid_tm.astype(jnp.float32)
    mask_col = mask_tm.reshape(N, 1)
    mask_tb1 = mask_tm[:, :, None]                                 # (T_pad, B, 1)

    # embeddings (gather is glue); tables stored bf16 so matmul inputs are bf16
    we = jnp.take(p['word_emb'], to_tm(word), axis=0)              # (T_pad, B, We)
    pe = jnp.take(p['pretrained_emb'], to_tm(pretrained), axis=0)  # (T_pad, B, Pe)
    pe_t = pallas_linear(pe.reshape(N, -1), p['trans_w'],
                         jnp.zeros((p['trans_w'].shape[1],), jnp.float32),
                         tile, out_dtype=jnp.bfloat16)
    x = jnp.concatenate([we.reshape(N, -1), pe_t], axis=-1)
    x = (x * mask_col).astype(jnp.bfloat16)
    # TODO(synk): CharacterModel branch (args['char']) and train-time WordDropout/Dropout
    #             omitted; eval-mode identity semantics.

    # HighwayLSTM (bidirectional, highway_func=tanh)
    for layer in p['lstm']:
        xgf, xgb, gh = pallas_layer_proj(x, layer['w_all'], layer['b_all'], H, tile)
        hf, hb = pallas_bilstm(xgf.reshape(T_pad, B, 4 * H),
                               xgb.reshape(T_pad, B, 4 * H),
                               mask_tb1, layer['whh_f'], layer['whh_b'], H)
        x = pallas_highway_combine(hf.reshape(N, H), hb.reshape(N, H), gh, mask_col, H, tile)

    hid = pallas_linear(x, p['upos_hid_w'], p['upos_hid_b'], tile,
                        relu=True, out_dtype=jnp.bfloat16)

    # labels: pads -> 0 so CrossEntropy's ignore_index=0 skips them
    labels_list = [upos, xpos] + [ufeats[:, :, i] for i in range(len(feats_lens))]
    labels_tm = jnp.stack([to_tm(l).astype(jnp.int32) * valid_tm.astype(jnp.int32)
                           for l in labels_list], axis=-1).reshape(N, n_heads)

    probs_all, loss_parts = pallas_heads(hid, p['heads_w'], p['heads_b'], labels_tm,
                                         p['segs'], p['c_pad'], tile)

    stats = loss_parts.reshape(-1, 8, 128)[:, 0, :2 * n_heads].sum(axis=0)
    loss = jnp.float32(0.0)
    for h in range(n_heads):
        loss = loss + stats[2 * h] / jnp.maximum(stats[2 * h + 1], 1.0)

    mask_bt = jnp.transpose(mask_tm)[:, :T]                        # (B, T)

    def head_probs(hidx):
        s0, cs = p['segs'][hidx]
        pr = probs_all[:, s0:s0 + cs].reshape(T_pad, B, cs)
        return jnp.transpose(pr, (1, 0, 2))[:, :T]                 # (B, T, cs)

    preds = [head_probs(0) * mask_bt[:, :, None],
             head_probs(1) * mask_bt[:, :, None]]
    max_feat_len = max(feats_lens)
    uf_preds = []
    for i, li in enumerate(feats_lens):
        pr = head_probs(2 + i)
        pad_len = max_feat_len - li
        if pad_len:
            pr = jnp.concatenate([pr, -jnp.ones((B, T, pad_len), jnp.float32)], axis=-1)
        uf_preds.append(pr * mask_bt[:, :, None])
    preds.append(jnp.stack(uf_preds, axis=-1))                     # (B, T, max_feat_len, n_feats)
    return loss, preds


# --------------------------- parameter init -------------------------------- #

def init_params(key, cfg):
    keys = iter(jax.random.split(key, 64))

    def rnd(shape, scale=0.1):
        return (scale * jax.random.normal(next(keys), shape)).astype(jnp.float32)

    H = cfg['hidden_dim']
    p = {}
    p['word_emb'] = rnd((cfg['n_word'], cfg['word_emb_dim'])).at[0].set(0.0).astype(jnp.bfloat16)
    p['pretrained_emb'] = rnd((cfg['n_pretrained'], cfg['pretrained_dim'])).astype(jnp.bfloat16)
    p['trans_w'] = rnd((cfg['pretrained_dim'], cfg['transformed_dim'])).astype(jnp.bfloat16)  # bias=False

    lstm = []
    d_in = cfg['word_emb_dim'] + cfg['transformed_dim']
    for _ in range(cfg['num_layers']):
        wih_f = rnd((d_in, 4 * H)); wih_b = rnd((d_in, 4 * H))
        wg = rnd((d_in, 2 * H)); wh = rnd((d_in, 2 * H))
        b_f = rnd((4 * H,)); b_b = rnd((4 * H,))                   # b_ih + b_hh folded
        bg = jnp.zeros((2 * H,), jnp.float32)                      # gate bias zeroed in __init__
        bh = jnp.zeros((2 * H,), jnp.float32)                      # highway bias zeroed
        lstm.append(dict(
            w_all=jnp.concatenate([wih_f, wih_b, wg, wh], axis=1).astype(jnp.bfloat16),
            b_all=jnp.concatenate([b_f, b_b, bg, bh]),
            whh_f=rnd((H, 4 * H)), whh_b=rnd((H, 4 * H)),
        ))
        d_in = 2 * H
    p['lstm'] = lstm

    DB = cfg['deep_biaff_hidden_dim']
    p['upos_hid_w'] = rnd((2 * H, DB)).astype(jnp.bfloat16)
    p['upos_hid_b'] = rnd((DB,))

    # NOTE: reference __init__ zero-initializes classifier weights/biases; random
    # deterministic init is used so the fused head kernel computes non-trivial values.
    head_sizes = [cfg['n_upos'], cfg['n_xpos']] + list(cfg['feats_lens'])
    c_total = sum(head_sizes)
    c_pad = ((c_total + 127) // 128) * 128
    ws, bs, segs, off = [], [], [], 0
    for c in head_sizes:
        ws.append(rnd((DB, c))); bs.append(rnd((c,)))
        segs.append((off, c)); off += c
    w_heads = jnp.concatenate(ws, axis=1)
    b_heads = jnp.concatenate(bs)
    if c_pad > c_total:
        w_heads = jnp.concatenate([w_heads, jnp.zeros((DB, c_pad - c_total), jnp.float32)], axis=1)
        b_heads = jnp.concatenate([b_heads, jnp.zeros((c_pad - c_total,), jnp.float32)])
    p['heads_w'] = w_heads.astype(jnp.bfloat16)
    p['heads_b'] = b_heads
    p['segs'] = tuple(segs)
    p['c_pad'] = c_pad
    return p


# --------------------------------- main ------------------------------------ #

if __name__ == "__main__":
    cfg = dict(word_emb_dim=16, transformed_dim=8, pretrained_dim=24,
               hidden_dim=16, num_layers=2, deep_biaff_hidden_dim=32,
               n_word=20, n_pretrained=20, n_upos=10, n_xpos=12,
               feats_lens=[4, 6, 3])

    key = jax.random.PRNGKey(0)
    pkey, dkey = jax.random.split(key)
    params = init_params(pkey, cfg)

    B, T = 2, 8
    sentlens = jnp.array([8, 5], dtype=jnp.int32)
    ks = jax.random.split(dkey, 5)
    word = jax.random.randint(ks[0], (B, T), 1, cfg['n_word'])
    pretrained = jax.random.randint(ks[1], (B, T), 1, cfg['n_pretrained'])
    upos = jax.random.randint(ks[2], (B, T), 1, cfg['n_upos'])
    xpos = jax.random.randint(ks[3], (B, T), 1, cfg['n_xpos'])
    fk = jax.random.split(ks[4], len(cfg['feats_lens']))
    ufeats = jnp.stack([jax.random.randint(fk[i], (B, T), 1, li)
                        for i, li in enumerate(cfg['feats_lens'])], axis=-1)

    fwd = jax.jit(lambda w, pt, up, xp, uf, sl:
                  tagger_forward(params, cfg, w, pt, up, xp, uf, sl))
    loss, preds = fwd(word, pretrained, upos, xpos, ufeats, sentlens)
    jax.block_until_ready((loss, preds))

    assert jnp.isfinite(loss)
    assert preds[0].shape == (B, T, cfg['n_upos'])
    assert preds[1].shape == (B, T, cfg['n_xpos'])
    assert preds[2].shape == (B, T, max(cfg['feats_lens']), len(cfg['feats_lens']))
    print("KERNEL_OK")
</pallas_src>

<mosaic_0001>
module attributes {stable_mosaic.version = 11 : i64} {
  func.func @_layer_proj_kernel(%arg0: i32, %arg1: memref<16x24xbf16, #tpu.memory_space<vmem>>, %arg2: memref<24x192xbf16, #tpu.memory_space<vmem>>, %arg3: memref<1x192xf32, #tpu.memory_space<vmem>>, %arg4: memref<16x64xf32, #tpu.memory_space<vmem>>, %arg5: memref<16x64xf32, #tpu.memory_space<vmem>>, %arg6: memref<16x64xf32, #tpu.memory_space<vmem>>) attributes {dimension_semantics = [#tpu.dimension_semantics<parallel>], iteration_bounds = array<i64: 1>, scalar_prefetch = 0 : i64, scratch_operands = 0 : i64, tpu.core_type = #tpu.core_type<tc>, window_params = [{transform_indices = @transform_0, window_bounds = array<i64: 16, 24>}, {pipeline_mode = #tpu.pipeline_mode<synchronous>, transform_indices = @transform_1, window_bounds = array<i64: 24, 192>}, {pipeline_mode = #tpu.pipeline_mode<synchronous>, transform_indices = @transform_2, window_bounds = array<i64: 1, 192>}, {transform_indices = @transform_3, window_bounds = array<i64: 16, 64>}, {transform_indices = @transform_4, window_bounds = array<i64: 16, 64>}, {transform_indices = @transform_5, window_bounds = array<i64: 16, 64>}]} {
    %c0 = arith.constant 0 : index
    %c0_0 = arith.constant 0 : index
    %0 = vector.load %arg1[%c0, %c0_0] : memref<16x24xbf16, #tpu.memory_space<vmem>>, vector<16x24xbf16>
    %c0_1 = arith.constant 0 : index
    %c0_2 = arith.constant 0 : index
    %1 = vector.load %arg2[%c0_1, %c0_2] : memref<24x192xbf16, #tpu.memory_space<vmem>>, vector<24x192xbf16>
    %cst = arith.constant dense<0.000000e+00> : vector<16x192xf32>
    %2 = tpu.matmul %0, %1, %cst {dimension_numbers = #tpu.dot_dimension_numbers<[1], [0], [0], [1], [0, 0, 1, 1], [], []>} : vector<16x24xbf16>, vector<24x192xbf16>, vector<16x192xf32> -> vector<16x192xf32>
    %c0_3 = arith.constant 0 : index
    %c0_4 = arith.constant 0 : index
    %3 = vector.load %arg3[%c0_3, %c0_4] : memref<1x192xf32, #tpu.memory_space<vmem>>, vector<1x192xf32>
    %4 = vector.broadcast %3 : vector<1x192xf32> to vector<16x192xf32>
    %5 = arith.addf %2, %4 : vector<16x192xf32>
    %6 = vector.extract_strided_slice %5 {offsets = [0, 0], sizes = [16, 64], strides = [1, 1]} : vector<16x192xf32> to vector<16x64xf32>
    %c0_5 = arith.constant 0 : index
    %c0_6 = arith.constant 0 : index
    %7 = vector.load %arg4[%c0_5, %c0_6] : memref<16x64xf32, #tpu.memory_space<vmem>>, vector<16x64xf32>
    tpu.vector_store %arg4[%c0_5, %c0_6], %6 {strides = array<i32>} : memref<16x64xf32, #tpu.memory_space<vmem>>, vector<16x64xf32>,
    %8 = vector.extract_strided_slice %5 {offsets = [0, 64], sizes = [16, 64], strides = [1, 1]} : vector<16x192xf32> to vector<16x64xf32>
    %c0_7 = arith.constant 0 : index
    %c0_8 = arith.constant 0 : index
    %9 = vector.load %arg5[%c0_7, %c0_8] : memref<16x64xf32, #tpu.memory_space<vmem>>, vector<16x64xf32>
    tpu.vector_store %arg5[%c0_7, %c0_8], %8 {strides = array<i32>} : memref<16x64xf32, #tpu.memory_space<vmem>>, vector<16x64xf32>,
    %10 = vector.extract_strided_slice %5 {offsets = [0, 128], sizes = [16, 64], strides = [1, 1]} : vector<16x192xf32> to vector<16x64xf32>
    %c0_9 = arith.constant 0 : index
    %c0_10 = arith.constant 0 : index
    %11 = vector.load %arg6[%c0_9, %c0_10] : memref<16x64xf32, #tpu.memory_space<vmem>>, vector<16x64xf32>
    tpu.vector_store %arg6[%c0_9, %c0_10], %10 {strides = array<i32>} : memref<16x64xf32, #tpu.memory_space<vmem>>, vector<16x64xf32>,
    return
  }
  func.func @transform_0(%arg0: i32) -> (i32, i32) {
    %c0_i32 = arith.constant 0 : i32
    %c0_i32_0 = arith.constant 0 : i32
    return %arg0, %c0_i32 : i32, i32
  }
  func.func @transform_1(%arg0: i32) -> (i32, i32) {
    %c0_i32 = arith.constant 0 : i32
    %c0_i32_0 = arith.constant 0 : i32
    %c0_i32_1 = arith.constant 0 : i32
    return %c0_i32, %c0_i32_0 : i32, i32
  }
  func.func @transform_2(%arg0: i32) -> (i32, i32) {
    %c0_i32 = arith.constant 0 : i32
    %c0_i32_0 = arith.constant 0 : i32
    %c0_i32_1 = arith.constant 0 : i32
    return %c0_i32, %c0_i32_0 : i32, i32
  }
  func.func @transform_3(%arg0: i32) -> (i32, i32) {
    %c0_i32 = arith.constant 0 : i32
    %c0_i32_0 = arith.constant 0 : i32
    return %arg0, %c0_i32 : i32, i32
  }
  func.func @transform_4(%arg0: i32) -> (i32, i32) {
    %c0_i32 = arith.constant 0 : i32
    %c0_i32_0 = arith.constant 0 : i32
    return %arg0, %c0_i32 : i32, i32
  }
  func.func @transform_5(%arg0: i32) -> (i32, i32) {
    %c0_i32 = arith.constant 0 : i32
    %c0_i32_0 = arith.constant 0 : i32
    return %arg0, %c0_i32 : i32, i32
  }
}

module attributes {stable_mosaic.version = 11 : i64} {
  func.func @_linear_kernel(%arg0: i32, %arg1: memref<16x24xbf16, #tpu.memory_space<vmem>>, %arg2: memref<24x8xbf16, #tpu.memory_space<vmem>>, %arg3: memref<1x8xf32, #tpu.memory_space<vmem>>, %arg4: memref<16x8xbf16, #tpu.memory_space<vmem>>) attributes {dimension_semantics = [#tpu.dimension_semantics<parallel>], iteration_bounds = array<i64: 1>, scalar_prefetch = 0 : i64, scratch_operands = 0 : i64, tpu.core_type = #tpu.core_type<tc>, window_params = [{transform_indices = @transform_0, window_bounds = array<i64: 16, 24>}, {pipeline_mode = #tpu.pipeline_mode<synchronous>, transform_indices = @transform_1, window_bounds = array<i64: 24, 8>}, {pipeline_mode = #tpu.pipeline_mode<synchronous>, transform_indices = @transform_2, window_bounds = array<i64: 1, 8>}, {transform_indices = @transform_3, window_bounds = array<i64: 16, 8>}]} {
    %c0 = arith.constant 0 : index
    %c0_0 = arith.constant 0 : index
    %0 = vector.load %arg1[%c0, %c0_0] : memref<16x24xbf16, #tpu.memory_space<vmem>>, vector<16x24xbf16>
    %c0_1 = arith.constant 0 : index
    %c0_2 = arith.constant 0 : index
    %1 = vector.load %arg2[%c0_1, %c0_2] : memref<24x8xbf16, #tpu.memory_space<vmem>>, vector<24x8xbf16>
    %cst = arith.constant dense<0.000000e+00> : vector<16x8xf32>
    %2 = tpu.matmul %0, %1, %cst {dimension_numbers = #tpu.dot_dimension_numbers<[1], [0], [0], [1], [0, 0, 1, 1], [], []>} : vector<16x24xbf16>, vector<24x8xbf16>, vector<16x8xf32> -> vector<16x8xf32>
    %c0_3 = arith.constant 0 : index
    %c0_4 = arith.constant 0 : index
    %3 = vector.load %arg3[%c0_3, %c0_4] : memref<1x8xf32, #tpu.memory_space<vmem>>, vector<1x8xf32>
    %4 = vector.broadcast %3 : vector<1x8xf32> to vector<16x8xf32>
    %5 = arith.addf %2, %4 : vector<16x8xf32>
    %6 = arith.truncf %5 : vector<16x8xf32> to vector<16x8xbf16>
    %c0_5 = arith.constant 0 : index
    %c0_6 = arith.constant 0 : index
    %7 = vector.load %arg4[%c0_5, %c0_6] : memref<16x8xbf16, #tpu.memory_space<vmem>>, vector<16x8xbf16>
    tpu.vector_store %arg4[%c0_5, %c0_6], %6 {strides = array<i32>} : memref<16x8xbf16, #tpu.memory_space<vmem>>, vector<16x8xbf16>,
    return
  }
  func.func @transform_0(%arg0: i32) -> (i32, i32) {
    %c0_i32 = arith.constant 0 : i32
    %c0_i32_0 = arith.constant 0 : i32
    return %arg0, %c0_i32 : i32, i32
  }
  func.func @transform_1(%arg0: i32) -> (i32, i32) {
    %c0_i32 = arith.constant 0 : i32
    %c0_i32_0 = arith.constant 0 : i32
    %c0_i32_1 = arith.constant 0 : i32
    return %c0_i32, %c0_i32_0 : i32, i32
  }
  func.func @transform_2(%arg0: i32) -> (i32, i32) {
    %c0_i32 = arith.constant 0 : i32
    %c0_i32_0 = arith.constant 0 : i32
    %c0_i32_1 = arith.constant 0 : i32
    return %c0_i32, %c0_i32_0 : i32, i32
  }
  func.func @transform_3(%arg0: i32) -> (i32, i32) {
    %c0_i32 = arith.constant 0 : i32
    %c0_i32_0 = arith.constant 0 : i32
    return %arg0, %c0_i32 : i32, i32
  }
}

module attributes {stable_mosaic.version = 11 : i64} {
  func.func @_combine_kernel(%arg0: i32, %arg1: memref<16x16xf32, #tpu.memory_space<vmem>>, %arg2: memref<16x16xf32, #tpu.memory_space<vmem>>, %arg3: memref<16x64xf32, #tpu.memory_space<vmem>>, %arg4: memref<16x1xf32, #tpu.memory_space<vmem>>, %arg5: memref<16x32xbf16, #tpu.memory_space<vmem>>) attributes {dimension_semantics = [#tpu.dimension_semantics<parallel>], iteration_bounds = array<i64: 1>, scalar_prefetch = 0 : i64, scratch_operands = 0 : i64, tpu.core_type = #tpu.core_type<tc>, window_params = [{transform_indices = @transform_0, window_bounds = array<i64: 16, 16>}, {transform_indices = @transform_1, window_bounds = array<i64: 16, 16>}, {transform_indices = @transform_2, window_bounds = array<i64: 16, 64>}, {transform_indices = @transform_3, window_bounds = array<i64: 16, 1>}, {transform_indices = @transform_4, window_bounds = array<i64: 16, 32>}]} {
    %c0 = arith.constant 0 : index
    %c0_0 = arith.constant 0 : index
    %0 = vector.load %arg3[%c0, %c0_0] : memref<16x64xf32, #tpu.memory_space<vmem>>, vector<16x64xf32>
    %1 = vector.extract_strided_slice %0 {offsets = [0, 0], sizes = [16, 32], strides = [1, 1]} : vector<16x64xf32> to vector<16x32xf32>
    %2 = arith.negf %1 : vector<16x32xf32>
    %3 = math.exp %2 : vector<16x32xf32>
    %cst = arith.constant 1.000000e+00 : f32
    %4 = vector.broadcast %cst : f32 to vector<16x32xf32>
    %5 = arith.addf %4, %3 : vector<16x32xf32>
    %6 = arith.divf %4, %5 : vector<16x32xf32>
    %7 = vector.extract_strided_slice %0 {offsets = [0, 32], sizes = [16, 32], strides = [1, 1]} : vector<16x64xf32> to vector<16x32xf32>
    %8 = math.tanh %7 : vector<16x32xf32>
    %c0_1 = arith.constant 0 : index
    %c0_2 = arith.constant 0 : index
    %9 = vector.load %arg1[%c0_1, %c0_2] : memref<16x16xf32, #tpu.memory_space<vmem>>, vector<16x16xf32>
    %c0_3 = arith.constant 0 : index
    %c0_4 = arith.constant 0 : index
    %10 = vector.load %arg2[%c0_3, %c0_4] : memref<16x16xf32, #tpu.memory_space<vmem>>, vector<16x16xf32>
    %11 = tpu.concatenate %9, %10 in 1 : vector<16x16xf32>, vector<16x16xf32> -> vector<16x32xf32>
    %12 = arith.mulf %6, %8 : vector<16x32xf32>
    %13 = arith.addf %11, %12 : vector<16x32xf32>
    %c0_5 = arith.constant 0 : index
    %c0_6 = arith.constant 0 : index
    %14 = vector.load %arg4[%c0_5, %c0_6] : memref<16x1xf32, #tpu.memory_space<vmem>>, vector<16x1xf32>
    %15 = vector.broadcast %14 : vector<16x1xf32> to vector<16x32xf32>
    %16 = arith.mulf %13, %15 : vector<16x32xf32>
    %17 = arith.truncf %16 : vector<16x32xf32> to vector<16x32xbf16>
    %c0_7 = arith.constant 0 : index
    %c0_8 = arith.constant 0 : index
    %18 = vector.load %arg5[%c0_7, %c0_8] : memref<16x32xbf16, #tpu.memory_space<vmem>>, vector<16x32xbf16>
    tpu.vector_store %arg5[%c0_7, %c0_8], %17 {strides = array<i32>} : memref<16x32xbf16, #tpu.memory_space<vmem>>, vector<16x32xbf16>,
    return
  }
  func.func @transform_0(%arg0: i32) -> (i32, i32) {
    %c0_i32 = arith.constant 0 : i32
    %c0_i32_0 = arith.constant 0 : i32
    return %arg0, %c0_i32 : i32, i32
  }
  func.func @transform_1(%arg0: i32) -> (i32, i32) {
    %c0_i32 = arith.constant 0 : i32
    %c0_i32_0 = arith.constant 0 : i32
    return %arg0, %c0_i32 : i32, i32
  }
  func.func @transform_2(%arg0: i32) -> (i32, i32) {
    %c0_i32 = arith.constant 0 : i32
    %c0_i32_0 = arith.constant 0 : i32
    return %arg0, %c0_i32 : i32, i32
  }
  func.func @transform_3(%arg0: i32) -> (i32, i32) {
    %c0_i32 = arith.constant 0 : i32
    %c0_i32_0 = arith.constant 0 : i32
    return %arg0, %c0_i32 : i32, i32
  }
  func.func @transform_4(%arg0: i32) -> (i32, i32) {
    %c0_i32 = arith.constant 0 : i32
    %c0_i32_0 = arith.constant 0 : i32
    return %arg0, %c0_i32 : i32, i32
  }
}

module attributes {stable_mosaic.version = 11 : i64} {
  func.func @_bilstm_kernel(%arg0: i32, %arg1: memref<1x2x64xf32, #tpu.memory_space<vmem>>, %arg2: memref<1x2x64xf32, #tpu.memory_space<vmem>>, %arg3: memref<1x2x1xf32, #tpu.memory_space<vmem>>, %arg4: memref<1x2x1xf32, #tpu.memory_space<vmem>>, %arg5: memref<16x64xf32, #tpu.memory_space<vmem>>, %arg6: memref<16x64xf32, #tpu.memory_space<vmem>>, %arg7: memref<1x2x16xf32, #tpu.memory_space<vmem>>, %arg8: memref<1x2x16xf32, #tpu.memory_space<vmem>>, %arg9: memref<2x16xf32, #tpu.memory_space<vmem>>, %arg10: memref<2x16xf32, #tpu.memory_space<vmem>>, %arg11: memref<2x16xf32, #tpu.memory_space<vmem>>, %arg12: memref<2x16xf32, #tpu.memory_space<vmem>>) attributes {dimension_semantics = [#tpu.dimension_semantics<arbitrary>], iteration_bounds = array<i64: 8>, scalar_prefetch = 0 : i64, scratch_operands = 4 : i64, tpu.core_type = #tpu.core_type<tc>, window_params = [{transform_indices = @transform_0, window_bounds = array<i64: 1, 2, 64>}, {transform_indices = @transform_1, window_bounds = array<i64: 1, 2, 64>}, {transform_indices = @transform_2, window_bounds = array<i64: 1, 2, 1>}, {transform_indices = @transform_3, window_bounds = array<i64: 1, 2, 1>}, {pipeline_mode = #tpu.pipeline_mode<synchronous>, transform_indices = @transform_4, window_bounds = array<i64: 16, 64>}, {pipeline_mode = #tpu.pipeline_mode<synchronous>, transform_indices = @transform_5, window_bounds = array<i64: 16, 64>}, {transform_indices = @transform_6, window_bounds = array<i64: 1, 2, 16>}, {transform_indices = @transform_7, window_bounds = array<i64: 1, 2, 16>}]} {
    %c0_i32 = arith.constant 0 : i32
    %0 = arith.cmpi eq, %arg0, %c0_i32 : i32
    %1 = arith.extui %0 : i1 to i32
    %c0_i32_0 = arith.constant 0 : i32
    %2 = arith.cmpi ne, %1, %c0_i32_0 : i32
    scf.if %2 {
      %cst_61 = arith.constant 0.000000e+00 : f32
      %115 = vector.broadcast %cst_61 : f32 to vector<2x16xf32>
      %c0_62 = arith.constant 0 : index
      %c0_63 = arith.constant 0 : index
      %116 = vector.load %arg9[%c0_62, %c0_63] : memref<2x16xf32, #tpu.memory_space<vmem>>, vector<2x16xf32>
      tpu.vector_store %arg9[%c0_62, %c0_63], %115 {strides = array<i32>} : memref<2x16xf32, #tpu.memory_space<vmem>>, vector<2x16xf32>,
      %cst_64 = arith.constant 0.000000e+00 : f32
      %117 = vector.broadcast %cst_64 : f32 to vector<2x16xf32>
      %c0_65 = arith.constant 0 : index
      %c0_66 = arith.constant 0 : index
      %118 = vector.load %arg10[%c0_65, %c0_66] : memref<2x16xf32, #tpu.memory_space<vmem>>, vector<2x16xf32>
      tpu.vector_store %arg10[%c0_65, %c0_66], %117 {strides = array<i32>} : memref<2x16xf32, #tpu.memory_space<vmem>>, vector<2x16xf32>,
      %cst_67 = arith.constant 0.000000e+00 : f32
      %119 = vector.broadcast %cst_67 : f32 to vector<2x16xf32>
      %c0_68 = arith.constant 0 : index
      %c0_69 = arith.constant 0 : index
      %120 = vector.load %arg11[%c0_68, %c0_69] : memref<2x16xf32, #tpu.memory_space<vmem>>, vector<2x16xf32>
      tpu.vector_store %arg11[%c0_68, %c0_69], %119 {strides = array<i32>} : memref<2x16xf32, #tpu.memory_space<vmem>>, vector<2x16xf32>,
      %cst_70 = arith.constant 0.000000e+00 : f32
      %121 = vector.broadcast %cst_70 : f32 to vector<2x16xf32>
      %c0_71 = arith.constant 0 : index
      %c0_72 = arith.constant 0 : index
      %122 = vector.load %arg12[%c0_71, %c0_72] : memref<2x16xf32, #tpu.memory_space<vmem>>, vector<2x16xf32>
      tpu.vector_store %arg12[%c0_71, %c0_72], %121 {strides = array<i32>} : memref<2x16xf32, #tpu.memory_space<vmem>>, vector<2x16xf32>,
    } else {
    }
    %c0 = arith.constant 0 : index
    %c0_1 = arith.constant 0 : index
    %c0_2 = arith.constant 0 : index
    %3 = vector.load %arg3[%c0, %c0_1, %c0_2] : memref<1x2x1xf32, #tpu.memory_space<vmem>>, vector<1x2x1xf32>
    %4 = vector.shape_cast %3 : vector<1x2x1xf32> to vector<2x1xf32>
    %c0_3 = arith.constant 0 : index
    %c0_4 = arith.constant 0 : index
    %c0_5 = arith.constant 0 : index
    %5 = vector.load %arg1[%c0_3, %c0_4, %c0_5] : memref<1x2x64xf32, #tpu.memory_space<vmem>>, vector<1x2x64xf32>
    %6 = vector.shape_cast %5 : vector<1x2x64xf32> to vector<2x64xf32>
    %c0_6 = arith.constant 0 : index
    %c0_7 = arith.constant 0 : index
    %7 = vector.load %arg9[%c0_6, %c0_7] : memref<2x16xf32, #tpu.memory_space<vmem>>, vector<2x16xf32>
    %c0_8 = arith.constant 0 : index
    %c0_9 = arith.constant 0 : index
    %8 = vector.load %arg10[%c0_8, %c0_9] : memref<2x16xf32, #tpu.memory_space<vmem>>, vector<2x16xf32>
    %c0_10 = arith.constant 0 : index
    %c0_11 = arith.constant 0 : index
    %9 = vector.load %arg5[%c0_10, %c0_11] : memref<16x64xf32, #tpu.memory_space<vmem>>, vector<16x64xf32>
    %cst = arith.constant dense<0.000000e+00> : vector<2x64xf32>
    %10 = tpu.matmul %7, %9, %cst {dimension_numbers = #tpu.dot_dimension_numbers<[1], [0], [0], [1], [0, 0, 1, 1], [], []>} : vector<2x16xf32>, vector<16x64xf32>, vector<2x64xf32> -> vector<2x64xf32>
    %11 = arith.addf %6, %10 : vector<2x64xf32>
    %12 = vector.extract_strided_slice %11 {offsets = [0, 0], sizes = [2, 16], strides = [1, 1]} : vector<2x64xf32> to vector<2x16xf32>
    %13 = arith.negf %12 : vector<2x16xf32>
    %14 = math.exp %13 : vector<2x16xf32>
    %cst_12 = arith.constant 1.000000e+00 : f32
    %15 = vector.broadcast %cst_12 : f32 to vector<2x16xf32>
    %16 = arith.addf %15, %14 : vector<2x16xf32>
    %17 = arith.divf %15, %16 : vector<2x16xf32>
    %18 = vector.extract_strided_slice %11 {offsets = [0, 16], sizes = [2, 16], strides = [1, 1]} : vector<2x64xf32> to vector<2x16xf32>
    %19 = arith.negf %18 : vector<2x16xf32>
    %20 = math.exp %19 : vector<2x16xf32>
    %cst_13 = arith.constant 1.000000e+00 : f32
    %21 = vector.broadcast %cst_13 : f32 to vector<2x16xf32>
    %22 = arith.addf %21, %20 : vector<2x16xf32>
    %23 = arith.divf %21, %22 : vector<2x16xf32>
    %24 = vector.extract_strided_slice %11 {offsets = [0, 32], sizes = [2, 16], strides = [1, 1]} : vector<2x64xf32> to vector<2x16xf32>
    %25 = math.tanh %24 : vector<2x16xf32>
    %26 = vector.extract_strided_slice %11 {offsets = [0, 48], sizes = [2, 16], strides = [1, 1]} : vector<2x64xf32> to vector<2x16xf32>
    %27 = arith.negf %26 : vector<2x16xf32>
    %28 = math.exp %27 : vector<2x16xf32>
    %cst_14 = arith.constant 1.000000e+00 : f32
    %29 = vector.broadcast %cst_14 : f32 to vector<2x16xf32>
    %30 = arith.addf %29, %28 : vector<2x16xf32>
    %31 = arith.divf %29, %30 : vector<2x16xf32>
    %32 = arith.mulf %23, %8 : vector<2x16xf32>
    %33 = arith.mulf %17, %25 : vector<2x16xf32>
    %34 = arith.addf %32, %33 : vector<2x16xf32>
    %35 = math.tanh %34 : vector<2x16xf32>
    %36 = arith.mulf %31, %35 : vector<2x16xf32>
    %37 = vector.broadcast %4 : vector<2x1xf32> to vector<2x16xf32>
    %38 = arith.mulf %37, %36 : vector<2x16xf32>
    %cst_15 = arith.constant 1.000000e+00 : f32
    %39 = vector.broadcast %cst_15 : f32 to vector<2x1xf32>
    %40 = arith.subf %39, %4 : vector<2x1xf32>
    %c0_16 = arith.constant 0 : index
    %c0_17 = arith.constant 0 : index
    %41 = vector.load %arg9[%c0_16, %c0_17] : memref<2x16xf32, #tpu.memory_space<vmem>>, vector<2x16xf32>
    %42 = vector.broadcast %40 : vector<2x1xf32> to vector<2x16xf32>
    %43 = arith.mulf %42, %41 : vector<2x16xf32>
    %44 = arith.addf %38, %43 : vector<2x16xf32>
    %c0_18 = arith.constant 0 : index
    %c0_19 = arith.constant 0 : index
    %45 = vector.load %arg9[%c0_18, %c0_19] : memref<2x16xf32, #tpu.memory_space<vmem>>, vector<2x16xf32>
    tpu.vector_store %arg9[%c0_18, %c0_19], %44 {strides = array<i32>} : memref<2x16xf32, #tpu.memory_space<vmem>>, vector<2x16xf32>,
    %46 = vector.broadcast %4 : vector<2x1xf32> to vector<2x16xf32>
    %47 = arith.mulf %46, %34 : vector<2x16xf32>
    %cst_20 = arith.constant 1.000000e+00 : f32
    %48 = vector.broadcast %cst_20 : f32 to vector<2x1xf32>
    %49 = arith.subf %48, %4 : vector<2x1xf32>
    %c0_21 = arith.constant 0 : index
    %c0_22 = arith.constant 0 : index
    %50 = vector.load %arg10[%c0_21, %c0_22] : memref<2x16xf32, #tpu.memory_space<vmem>>, vector<2x16xf32>
    %51 = vector.broadcast %49 : vector<2x1xf32> to vector<2x16xf32>
    %52 = arith.mulf %51, %50 : vector<2x16xf32>
    %53 = arith.addf %47, %52 : vector<2x16xf32>
    %c0_23 = arith.constant 0 : index
    %c0_24 = arith.constant 0 : index
    %54 = vector.load %arg10[%c0_23, %c0_24] : memref<2x16xf32, #tpu.memory_space<vmem>>, vector<2x16xf32>
    tpu.vector_store %arg10[%c0_23, %c0_24], %53 {strides = array<i32>} : memref<2x16xf32, #tpu.memory_space<vmem>>, vector<2x16xf32>,
    %c0_25 = arith.constant 0 : index
    %c0_26 = arith.constant 0 : index
    %55 = vector.load %arg9[%c0_25, %c0_26] : memref<2x16xf32, #tpu.memory_space<vmem>>, vector<2x16xf32>
    %c0_27 = arith.constant 0 : index
    %c0_28 = arith.constant 0 : index
    %c0_29 = arith.constant 0 : index
    %56 = vector.load %arg7[%c0_27, %c0_28, %c0_29] : memref<1x2x16xf32, #tpu.memory_space<vmem>>, vector<1x2x16xf32>
    %57 = vector.shape_cast %56 : vector<1x2x16xf32> to vector<2x16xf32>
    %58 = vector.shape_cast %55 : vector<2x16xf32> to vector<1x2x16xf32>
    tpu.vector_store %arg7[%c0_27, %c0_28, %c0_29], %58 {strides = array<i32>} : memref<1x2x16xf32, #tpu.memory_space<vmem>>, vector<1x2x16xf32>,
    %c0_30 = arith.constant 0 : index
    %c0_31 = arith.constant 0 : index
    %c0_32 = arith.constant 0 : index
    %59 = vector.load %arg4[%c0_30, %c0_31, %c0_32] : memref<1x2x1xf32, #tpu.memory_space<vmem>>, vector<1x2x1xf32>
    %60 = vector.shape_cast %59 : vector<1x2x1xf32> to vector<2x1xf32>
    %c0_33 = arith.constant 0 : index
    %c0_34 = arith.constant 0 : index
    %c0_35 = arith.constant 0 : index
    %61 = vector.load %arg2[%c0_33, %c0_34, %c0_35] : memref<1x2x64xf32, #tpu.memory_space<vmem>>, vector<1x2x64xf32>
    %62 = vector.shape_cast %61 : vector<1x2x64xf32> to vector<2x64xf32>
    %c0_36 = arith.constant 0 : index
    %c0_37 = arith.constant 0 : index
    %63 = vector.load %arg11[%c0_36, %c0_37] : memref<2x16xf32, #tpu.memory_space<vmem>>, vector<2x16xf32>
    %c0_38 = arith.constant 0 : index
    %c0_39 = arith.constant 0 : index
    %64 = vector.load %arg12[%c0_38, %c0_39] : memref<2x16xf32, #tpu.memory_space<vmem>>, vector<2x16xf32>
    %c0_40 = arith.constant 0 : index
    %c0_41 = arith.constant 0 : index
    %65 = vector.load %arg6[%c0_40, %c0_41] : memref<16x64xf32, #tpu.memory_space<vmem>>, vector<16x64xf32>
    %cst_42 = arith.constant dense<0.000000e+00> : vector<2x64xf32>
    %66 = tpu.matmul %63, %65, %cst_42 {dimension_numbers = #tpu.dot_dimension_numbers<[1], [0], [0], [1], [0, 0, 1, 1], [], []>} : vector<2x16xf32>, vector<16x64xf32>, vector<2x64xf32> -> vector<2x64xf32>
    %67 = arith.addf %62, %66 : vector<2x64xf32>
    %68 = vector.extract_strided_slice %67 {offsets = [0, 0], sizes = [2, 16], strides = [1, 1]} : vector<2x64xf32> to vector<2x16xf32>
    %69 = arith.negf %68 : vector<2x16xf32>
    %70 = math.exp %69 : vector<2x16xf32>
    %cst_43 = arith.constant 1.000000e+00 : f32
    %71 = vector.broadcast %cst_43 : f32 to vector<2x16xf32>
    %72 = arith.addf %71, %70 : vector<2x16xf32>
    %73 = arith.divf %71, %72 : vector<2x16xf32>
    %74 = vector.extract_strided_slice %67 {offsets = [0, 16], sizes = [2, 16], strides = [1, 1]} : vector<2x64xf32> to vector<2x16xf32>
    %75 = arith.negf %74 : vector<2x16xf32>
    %76 = math.exp %75 : vector<2x16xf32>
    %cst_44 = arith.constant 1.000000e+00 : f32
    %77 = vector.broadcast %cst_44 : f32 to vector<2x16xf32>
    %78 = arith.addf %77, %76 : vector<2x16xf32>
    %79 = arith.divf %77, %78 : vector<2x16xf32>
    %80 = vector.extract_strided_slice %67 {offsets = [0, 32], sizes = [2, 16], strides = [1, 1]} : vector<2x64xf32> to vector<2x16xf32>
    %81 = math.tanh %80 : vector<2x16xf32>
    %82 = vector.extract_strided_slice %67 {offsets = [0, 48], sizes = [2, 16], strides = [1, 1]} : vector<2x64xf32> to vector<2x16xf32>
    %83 = arith.negf %82 : vector<2x16xf32>
    %84 = math.exp %83 : vector<2x16xf32>
    %cst_45 = arith.constant 1.000000e+00 : f32
    %85 = vector.broadcast %cst_45 : f32 to vector<2x16xf32>
    %86 = arith.addf %85, %84 : vector<2x16xf32>
    %87 = arith.divf %85, %86 : vector<2x16xf32>
    %88 = arith.mulf %79, %64 : vector<2x16xf32>
    %89 = arith.mulf %73, %81 : vector<2x16xf32>
    %90 = arith.addf %88, %89 : vector<2x16xf32>
    %91 = math.tanh %90 : vector<2x16xf32>
    %92 = arith.mulf %87, %91 : vector<2x16xf32>
    %93 = vector.broadcast %60 : vector<2x1xf32> to vector<2x16xf32>
    %94 = arith.mulf %93, %92 : vector<2x16xf32>
    %cst_46 = arith.constant 1.000000e+00 : f32
    %95 = vector.broadcast %cst_46 : f32 to vector<2x1xf32>
    %96 = arith.subf %95, %60 : vector<2x1xf32>
    %c0_47 = arith.constant 0 : index
    %c0_48 = arith.constant 0 : index
    %97 = vector.load %arg11[%c0_47, %c0_48] : memref<2x16xf32, #tpu.memory_space<vmem>>, vector<2x16xf32>
    %98 = vector.broadcast %96 : vector<2x1xf32> to vector<2x16xf32>
    %99 = arith.mulf %98, %97 : vector<2x16xf32>
    %100 = arith.addf %94, %99 : vector<2x16xf32>
    %c0_49 = arith.constant 0 : index
    %c0_50 = arith.constant 0 : index
    %101 = vector.load %arg11[%c0_49, %c0_50] : memref<2x16xf32, #tpu.memory_space<vmem>>, vector<2x16xf32>
    tpu.vector_store %arg11[%c0_49, %c0_50], %100 {strides = array<i32>} : memref<2x16xf32, #tpu.memory_space<vmem>>, vector<2x16xf32>,
    %102 = vector.broadcast %60 : vector<2x1xf32> to vector<2x16xf32>
    %103 = arith.mulf %102, %90 : vector<2x16xf32>
    %cst_51 = arith.constant 1.000000e+00 : f32
    %104 = vector.broadcast %cst_51 : f32 to vector<2x1xf32>
    %105 = arith.subf %104, %60 : vector<2x1xf32>
    %c0_52 = arith.constant 0 : index
    %c0_53 = arith.constant 0 : index
    %106 = vector.load %arg12[%c0_52, %c0_53] : memref<2x16xf32, #tpu.memory_space<vmem>>, vector<2x16xf32>
    %107 = vector.broadcast %105 : vector<2x1xf32> to vector<2x16xf32>
    %108 = arith.mulf %107, %106 : vector<2x16xf32>
    %109 = arith.addf %103, %108 : vector<2x16xf32>
    %c0_54 = arith.constant 0 : index
    %c0_55 = arith.constant 0 : index
    %110 = vector.load %arg12[%c0_54, %c0_55] : memref<2x16xf32, #tpu.memory_space<vmem>>, vector<2x16xf32>
    tpu.vector_store %arg12[%c0_54, %c0_55], %109 {strides = array<i32>} : memref<2x16xf32, #tpu.memory_space<vmem>>, vector<2x16xf32>,
    %c0_56 = arith.constant 0 : index
    %c0_57 = arith.constant 0 : index
    %111 = vector.load %arg11[%c0_56, %c0_57] : memref<2x16xf32, #tpu.memory_space<vmem>>, vector<2x16xf32>
    %c0_58 = arith.constant 0 : index
    %c0_59 = arith.constant 0 : index
    %c0_60 = arith.constant 0 : index
    %112 = vector.load %arg8[%c0_58, %c0_59, %c0_60] : memref<1x2x16xf32, #tpu.memory_space<vmem>>, vector<1x2x16xf32>
    %113 = vector.shape_cast %112 : vector<1x2x16xf32> to vector<2x16xf32>
    %114 = vector.shape_cast %111 : vector<2x16xf32> to vector<1x2x16xf32>
    tpu.vector_store %arg8[%c0_58, %c0_59, %c0_60], %114 {strides = array<i32>} : memref<1x2x16xf32, #tpu.memory_space<vmem>>, vector<1x2x16xf32>,
    return
  }
  func.func @transform_0(%arg0: i32) -> (i32, i32, i32) {
    %c0_i32 = arith.constant 0 : i32
    %c0_i32_0 = arith.constant 0 : i32
    %c0_i32_1 = arith.constant 0 : i32
    return %arg0, %c0_i32, %c0_i32_0 : i32, i32, i32
  }
  func.func @transform_1(%arg0: i32) -> (i32, i32, i32) {
    %c7_i32 = arith.constant 7 : i32
    %0 = arith.subi %c7_i32, %arg0 : i32
    %c0_i32 = arith.constant 0 : i32
    %c0_i32_0 = arith.constant 0 : i32
    %c0_i32_1 = arith.constant 0 : i32
    return %0, %c0_i32, %c0_i32_0 : i32, i32, i32
  }
  func.func @transform_2(%arg0: i32) -> (i32, i32, i32) {
    %c0_i32 = arith.constant 0 : i32
    %c0_i32_0 = arith.constant 0 : i32
    %c0_i32_1 = arith.constant 0 : i32
    return %arg0, %c0_i32, %c0_i32_0 : i32, i32, i32
  }
  func.func @transform_3(%arg0: i32) -> (i32, i32, i32) {
    %c7_i32 = arith.constant 7 : i32
    %0 = arith.subi %c7_i32, %arg0 : i32
    %c0_i32 = arith.constant 0 : i32
    %c0_i32_0 = arith.constant 0 : i32
    %c0_i32_1 = arith.constant 0 : i32
    return %0, %c0_i32, %c0_i32_0 : i32, i32, i32
  }
  func.func @transform_4(%arg0: i32) -> (i32, i32) {
    %c0_i32 = arith.constant 0 : i32
    %c0_i32_0 = arith.constant 0 : i32
    %c0_i32_1 = arith.constant 0 : i32
    return %c0_i32, %c0_i32_0 : i32, i32
  }
  func.func @transform_5(%arg0: i32) -> (i32, i32) {
    %c0_i32 = arith.constant 0 : i32
    %c0_i32_0 = arith.constant 0 : i32
    %c0_i32_1 = arith.constant 0 : i32
    return %c0_i32, %c0_i32_0 : i32, i32
  }
  func.func @transform_6(%arg0: i32) -> (i32, i32, i32) {
    %c0_i32 = arith.constant 0 : i32
    %c0_i32_0 = arith.constant 0 : i32
    %c0_i32_1 = arith.constant 0 : i32
    return %arg0, %c0_i32, %c0_i32_0 : i32, i32, i32
  }
  func.func @transform_7(%arg0: i32) -> (i32, i32, i32) {
    %c7_i32 = arith.constant 7 : i32
    %0 = arith.subi %c7_i32, %arg0 : i32
    %c0_i32 = arith.constant 0 : i32
    %c0_i32_0 = arith.constant 0 : i32
    %c0_i32_1 = arith.constant 0 : i32
    return %0, %c0_i32, %c0_i32_0 : i32, i32, i32
  }
}

module attributes {stable_mosaic.version = 11 : i64} {
  func.func @_layer_proj_kernel(%arg0: i32, %arg1: memref<16x32xbf16, #tpu.memory_space<vmem>>, %arg2: memref<32x192xbf16, #tpu.memory_space<vmem>>, %arg3: memref<1x192xf32, #tpu.memory_space<vmem>>, %arg4: memref<16x64xf32, #tpu.memory_space<vmem>>, %arg5: memref<16x64xf32, #tpu.memory_space<vmem>>, %arg6: memref<16x64xf32, #tpu.memory_space<vmem>>) attributes {dimension_semantics = [#tpu.dimension_semantics<parallel>], iteration_bounds = array<i64: 1>, scalar_prefetch = 0 : i64, scratch_operands = 0 : i64, tpu.core_type = #tpu.core_type<tc>, window_params = [{transform_indices = @transform_0, window_bounds = array<i64: 16, 32>}, {pipeline_mode = #tpu.pipeline_mode<synchronous>, transform_indices = @transform_1, window_bounds = array<i64: 32, 192>}, {pipeline_mode = #tpu.pipeline_mode<synchronous>, transform_indices = @transform_2, window_bounds = array<i64: 1, 192>}, {transform_indices = @transform_3, window_bounds = array<i64: 16, 64>}, {transform_indices = @transform_4, window_bounds = array<i64: 16, 64>}, {transform_indices = @transform_5, window_bounds = array<i64: 16, 64>}]} {
    %c0 = arith.constant 0 : index
    %c0_0 = arith.constant 0 : index
    %0 = vector.load %arg1[%c0, %c0_0] : memref<16x32xbf16, #tpu.memory_space<vmem>>, vector<16x32xbf16>
    %c0_1 = arith.constant 0 : index
    %c0_2 = arith.constant 0 : index
    %1 = vector.load %arg2[%c0_1, %c0_2] : memref<32x192xbf16, #tpu.memory_space<vmem>>, vector<32x192xbf16>
    %cst = arith.constant dense<0.000000e+00> : vector<16x192xf32>
    %2 = tpu.matmul %0, %1, %cst {dimension_numbers = #tpu.dot_dimension_numbers<[1], [0], [0], [1], [0, 0, 1, 1], [], []>} : vector<16x32xbf16>, vector<32x192xbf16>, vector<16x192xf32> -> vector<16x192xf32>
    %c0_3 = arith.constant 0 : index
    %c0_4 = arith.constant 0 : index
    %3 = vector.load %arg3[%c0_3, %c0_4] : memref<1x192xf32, #tpu.memory_space<vmem>>, vector<1x192xf32>
    %4 = vector.broadcast %3 : vector<1x192xf32> to vector<16x192xf32>
    %5 = arith.addf %2, %4 : vector<16x192xf32>
    %6 = vector.extract_strided_slice %5 {offsets = [0, 0], sizes = [16, 64], strides = [1, 1]} : vector<16x192xf32> to vector<16x64xf32>
    %c0_5 = arith.constant 0 : index
    %c0_6 = arith.constant 0 : index
    %7 = vector.load %arg4[%c0_5, %c0_6] : memref<16x64xf32, #tpu.memory_space<vmem>>, vector<16x64xf32>
    tpu.vector_store %arg4[%c0_5, %c0_6], %6 {strides = array<i32>} : memref<16x64xf32, #tpu.memory_space<vmem>>, vector<16x64xf32>,
    %8 = vector.extract_strided_slice %5 {offsets = [0, 64], sizes = [16, 64], strides = [1, 1]} : vector<16x192xf32> to vector<16x64xf32>
    %c0_7 = arith.constant 0 : index
    %c0_8 = arith.constant 0 : index
    %9 = vector.load %arg5[%c0_7, %c0_8] : memref<16x64xf32, #tpu.memory_space<vmem>>, vector<16x64xf32>
    tpu.vector_store %arg5[%c0_7, %c0_8], %8 {strides = array<i32>} : memref<16x64xf32, #tpu.memory_space<vmem>>, vector<16x64xf32>,
    %10 = vector.extract_strided_slice %5 {offsets = [0, 128], sizes = [16, 64], strides = [1, 1]} : vector<16x192xf32> to vector<16x64xf32>
    %c0_9 = arith.constant 0 : index
    %c0_10 = arith.constant 0 : index
    %11 = vector.load %arg6[%c0_9, %c0_10] : memref<16x64xf32, #tpu.memory_space<vmem>>, vector<16x64xf32>
    tpu.vector_store %arg6[%c0_9, %c0_10], %10 {strides = array<i32>} : memref<16x64xf32, #tpu.memory_space<vmem>>, vector<16x64xf32>,
    return
  }
  func.func @transform_0(%arg0: i32) -> (i32, i32) {
    %c0_i32 = arith.constant 0 : i32
    %c0_i32_0 = arith.constant 0 : i32
    return %arg0, %c0_i32 : i32, i32
  }
  func.func @transform_1(%arg0: i32) -> (i32, i32) {
    %c0_i32 = arith.constant 0 : i32
    %c0_i32_0 = arith.constant 0 : i32
    %c0_i32_1 = arith.constant 0 : i32
    return %c0_i32, %c0_i32_0 : i32, i32
  }
  func.func @transform_2(%arg0: i32) -> (i32, i32) {
    %c0_i32 = arith.constant 0 : i32
    %c0_i32_0 = arith.constant 0 : i32
    %c0_i32_1 = arith.constant 0 : i32
    return %c0_i32, %c0_i32_0 : i32, i32
  }
  func.func @transform_3(%arg0: i32) -> (i32, i32) {
    %c0_i32 = arith.constant 0 : i32
    %c0_i32_0 = arith.constant 0 : i32
    return %arg0, %c0_i32 : i32, i32
  }
  func.func @transform_4(%arg0: i32) -> (i32, i32) {
    %c0_i32 = arith.constant 0 : i32
    %c0_i32_0 = arith.constant 0 : i32
    return %arg0, %c0_i32 : i32, i32
  }
  func.func @transform_5(%arg0: i32) -> (i32, i32) {
    %c0_i32 = arith.constant 0 : i32
    %c0_i32_0 = arith.constant 0 : i32
    return %arg0, %c0_i32 : i32, i32
  }
}

module attributes {stable_mosaic.version = 11 : i64} {
  func.func @_heads_kernel(%arg0: i32, %arg1: memref<16x32xbf16, #tpu.memory_space<vmem>>, %arg2: memref<32x128xbf16, #tpu.memory_space<vmem>>, %arg3: memref<1x128xf32, #tpu.memory_space<vmem>>, %arg4: memref<16x5xi32, #tpu.memory_space<vmem>>, %arg5: memref<16x128xf32, #tpu.memory_space<vmem>>, %arg6: memref<8x128xf32, #tpu.memory_space<vmem>>) attributes {dimension_semantics = [#tpu.dimension_semantics<parallel>], iteration_bounds = array<i64: 1>, scalar_prefetch = 0 : i64, scratch_operands = 0 : i64, tpu.core_type = #tpu.core_type<tc>, window_params = [{transform_indices = @transform_0, window_bounds = array<i64: 16, 32>}, {pipeline_mode = #tpu.pipeline_mode<synchronous>, transform_indices = @transform_1, window_bounds = array<i64: 32, 128>}, {pipeline_mode = #tpu.pipeline_mode<synchronous>, transform_indices = @transform_2, window_bounds = array<i64: 1, 128>}, {transform_indices = @transform_3, window_bounds = array<i64: 16, 5>}, {transform_indices = @transform_4, window_bounds = array<i64: 16, 128>}, {transform_indices = @transform_5, window_bounds = array<i64: 8, 128>}]} {
    %c0 = arith.constant 0 : index
    %c0_0 = arith.constant 0 : index
    %0 = vector.load %arg1[%c0, %c0_0] : memref<16x32xbf16, #tpu.memory_space<vmem>>, vector<16x32xbf16>
    %c0_1 = arith.constant 0 : index
    %c0_2 = arith.constant 0 : index
    %1 = vector.load %arg2[%c0_1, %c0_2] : memref<32x128xbf16, #tpu.memory_space<vmem>>, vector<32x128xbf16>
    %cst = arith.constant dense<0.000000e+00> : vector<16x128xf32>
    %2 = tpu.matmul %0, %1, %cst {dimension_numbers = #tpu.dot_dimension_numbers<[1], [0], [0], [1], [0, 0, 1, 1], [], []>} : vector<16x32xbf16>, vector<32x128xbf16>, vector<16x128xf32> -> vector<16x128xf32>
    %c0_3 = arith.constant 0 : index
    %c0_4 = arith.constant 0 : index
    %3 = vector.load %arg3[%c0_3, %c0_4] : memref<1x128xf32, #tpu.memory_space<vmem>>, vector<1x128xf32>
    %4 = vector.broadcast %3 : vector<1x128xf32> to vector<16x128xf32>
    %5 = arith.addf %2, %4 : vector<16x128xf32>
    %c0_5 = arith.constant 0 : index
    %c0_6 = arith.constant 0 : index
    %6 = vector.load %arg4[%c0_5, %c0_6] : memref<16x5xi32, #tpu.memory_space<vmem>>, vector<16x5xi32>
    %7 = vector.extract_strided_slice %5 {offsets = [0, 0], sizes = [16, 10], strides = [1, 1]} : vector<16x128xf32> to vector<16x10xf32>
    %8 = vector.extract_strided_slice %6 {offsets = [0, 0], sizes = [16, 1], strides = [1, 1]} : vector<16x5xi32> to vector<16x1xi32>
    %cst_7 = arith.constant dense<0xFF800000> : vector<16xf32>
    %9 = vector.multi_reduction <maximumf>, %7, %cst_7 [1] : vector<16x10xf32> to vector<16xf32>
    %10 = vector.shape_cast %9 : vector<16xf32> to vector<16x1xf32>
    %11 = vector.broadcast %10 : vector<16x1xf32> to vector<16x10xf32>
    %12 = arith.subf %7, %11 : vector<16x10xf32>
    %13 = math.exp %12 : vector<16x10xf32>
    %cst_8 = arith.constant dense<0.000000e+00> : vector<16xf32>
    %14 = vector.multi_reduction <add>, %13, %cst_8 [1] : vector<16x10xf32> to vector<16xf32>
    %15 = vector.shape_cast %14 : vector<16xf32> to vector<16x1xf32>
    %16 = tpu.reciprocal %15 {approx = true} : vector<16x1xf32> -> vector<16x1xf32>
    %17 = vector.broadcast %16 : vector<16x1xf32> to vector<16x10xf32>
    %18 = arith.mulf %13, %17 : vector<16x10xf32>
    %19 = math.log %15 : vector<16x1xf32>
    %20 = arith.addf %10, %19 : vector<16x1xf32>
    %21 = tpu.iota {dimensions = array<i32: 1>} : vector<16x10xi32>
    %22 = vector.broadcast %8 : vector<16x1xi32> to vector<16x10xi32>
    %23 = arith.cmpi eq, %21, %22 : vector<16x10xi32>
    %cst_9 = arith.constant 0.000000e+00 : f32
    %24 = vector.broadcast %cst_9 : f32 to vector<16x10xf32>
    %25 = arith.select %23, %7, %24 : vector<16x10xi1>, vector<16x10xf32>
    %cst_10 = arith.constant dense<0.000000e+00> : vector<16xf32>
    %26 = vector.multi_reduction <add>, %25, %cst_10 [1] : vector<16x10xf32> to vector<16xf32>
    %27 = vector.shape_cast %26 : vector<16xf32> to vector<16x1xf32>
    %c0_i32 = arith.constant 0 : i32
    %28 = vector.broadcast %c0_i32 : i32 to vector<16x1xi32>
    %29 = arith.cmpi ne, %8, %28 : vector<16x1xi32>
    %30 = arith.extui %29 : vector<16x1xi1> to vector<16x1xi32>
    %31 = arith.sitofp %30 : vector<16x1xi32> to vector<16x1xf32>
    %32 = arith.subf %20, %27 : vector<16x1xf32>
    %33 = arith.mulf %32, %31 : vector<16x1xf32>
    %cst_11 = arith.constant dense<0.000000e+00> : vector<1xf32>
    %34 = vector.multi_reduction <add>, %33, %cst_11 [0] : vector<16x1xf32> to vector<1xf32>
    %35 = vector.shape_cast %34 : vector<1xf32> to vector<1x1xf32>
    %cst_12 = arith.constant dense<0.000000e+00> : vector<1xf32>
    %36 = vector.multi_reduction <add>, %31, %cst_12 [0] : vector<16x1xf32> to vector<1xf32>
    %37 = vector.shape_cast %36 : vector<1xf32> to vector<1x1xf32>
    %38 = vector.extract_strided_slice %5 {offsets = [0, 10], sizes = [16, 12], strides = [1, 1]} : vector<16x128xf32> to vector<16x12xf32>
    %39 = vector.extract_strided_slice %6 {offsets = [0, 1], sizes = [16, 1], strides = [1, 1]} : vector<16x5xi32> to vector<16x1xi32>
    %cst_13 = arith.constant dense<0xFF800000> : vector<16xf32>
    %40 = vector.multi_reduction <maximumf>, %38, %cst_13 [1] : vector<16x12xf32> to vector<16xf32>
    %41 = vector.shape_cast %40 : vector<16xf32> to vector<16x1xf32>
    %42 = vector.broadcast %41 : vector<16x1xf32> to vector<16x12xf32>
    %43 = arith.subf %38, %42 : vector<16x12xf32>
    %44 = math.exp %43 : vector<16x12xf32>
    %cst_14 = arith.constant dense<0.000000e+00> : vector<16xf32>
    %45 = vector.multi_reduction <add>, %44, %cst_14 [1] : vector<16x12xf32> to vector<16xf32>
    %46 = vector.shape_cast %45 : vector<16xf32> to vector<16x1xf32>
    %47 = tpu.reciprocal %46 {approx = true} : vector<16x1xf32> -> vector<16x1xf32>
    %48 = vector.broadcast %47 : vector<16x1xf32> to vector<16x12xf32>
    %49 = arith.mulf %44, %48 : vector<16x12xf32>
    %50 = math.log %46 : vector<16x1xf32>
    %51 = arith.addf %41, %50 : vector<16x1xf32>
    %52 = tpu.iota {dimensions = array<i32: 1>} : vector<16x12xi32>
    %53 = vector.broadcast %39 : vector<16x1xi32> to vector<16x12xi32>
    %54 = arith.cmpi eq, %52, %53 : vector<16x12xi32>
    %cst_15 = arith.constant 0.000000e+00 : f32
    %55 = vector.broadcast %cst_15 : f32 to vector<16x12xf32>
    %56 = arith.select %54, %38, %55 : vector<16x12xi1>, vector<16x12xf32>
    %cst_16 = arith.constant dense<0.000000e+00> : vector<16xf32>
    %57 = vector.multi_reduction <add>, %56, %cst_16 [1] : vector<16x12xf32> to vector<16xf32>
    %58 = vector.shape_cast %57 : vector<16xf32> to vector<16x1xf32>
    %c0_i32_17 = arith.constant 0 : i32
    %59 = vector.broadcast %c0_i32_17 : i32 to vector<16x1xi32>
    %60 = arith.cmpi ne, %39, %59 : vector<16x1xi32>
    %61 = arith.extui %60 : vector<16x1xi1> to vector<16x1xi32>
    %62 = arith.sitofp %61 : vector<16x1xi32> to vector<16x1xf32>
    %63 = arith.subf %51, %58 : vector<16x1xf32>
    %64 = arith.mulf %63, %62 : vector<16x1xf32>
    %cst_18 = arith.constant dense<0.000000e+00> : vector<1xf32>
    %65 = vector.multi_reduction <add>, %64, %cst_18 [0] : vector<16x1xf32> to vector<1xf32>
    %66 = vector.shape_cast %65 : vector<1xf32> to vector<1x1xf32>
    %cst_19 = arith.constant dense<0.000000e+00> : vector<1xf32>
    %67 = vector.multi_reduction <add>, %62, %cst_19 [0] : vector<16x1xf32> to vector<1xf32>
    %68 = vector.shape_cast %67 : vector<1xf32> to vector<1x1xf32>
    %69 = vector.extract_strided_slice %5 {offsets = [0, 22], sizes = [16, 4], strides = [1, 1]} : vector<16x128xf32> to vector<16x4xf32>
    %70 = vector.extract_strided_slice %6 {offsets = [0, 2], sizes = [16, 1], strides = [1, 1]} : vector<16x5xi32> to vector<16x1xi32>
    %cst_20 = arith.constant dense<0xFF800000> : vector<16xf32>
    %71 = vector.multi_reduction <maximumf>, %69, %cst_20 [1] : vector<16x4xf32> to vector<16xf32>
    %72 = vector.shape_cast %71 : vector<16xf32> to vector<16x1xf32>
    %73 = vector.broadcast %72 : vector<16x1xf32> to vector<16x4xf32>
    %74 = arith.subf %69, %73 : vector<16x4xf32>
    %75 = math.exp %74 : vector<16x4xf32>
    %cst_21 = arith.constant dense<0.000000e+00> : vector<16xf32>
    %76 = vector.multi_reduction <add>, %75, %cst_21 [1] : vector<16x4xf32> to vector<16xf32>
    %77 = vector.shape_cast %76 : vector<16xf32> to vector<16x1xf32>
    %78 = tpu.reciprocal %77 {approx = true} : vector<16x1xf32> -> vector<16x1xf32>
    %79 = vector.broadcast %78 : vector<16x1xf32> to vector<16x4xf32>
    %80 = arith.mulf %75, %79 : vector<16x4xf32>
    %81 = math.log %77 : vector<16x1xf32>
    %82 = arith.addf %72, %81 : vector<16x1xf32>
    %83 = tpu.iota {dimensions = array<i32: 1>} : vector<16x4xi32>
    %84 = vector.broadcast %70 : vector<16x1xi32> to vector<16x4xi32>
    %85 = arith.cmpi eq, %83, %84 : vector<16x4xi32>
    %cst_22 = arith.constant 0.000000e+00 : f32
    %86 = vector.broadcast %cst_22 : f32 to vector<16x4xf32>
    %87 = arith.select %85, %69, %86 : vector<16x4xi1>, vector<16x4xf32>
    %cst_23 = arith.constant dense<0.000000e+00> : vector<16xf32>
    %88 = vector.multi_reduction <add>, %87, %cst_23 [1] : vector<16x4xf32> to vector<16xf32>
    %89 = vector.shape_cast %88 : vector<16xf32> to vector<16x1xf32>
    %c0_i32_24 = arith.constant 0 : i32
    %90 = vector.broadcast %c0_i32_24 : i32 to vector<16x1xi32>
    %91 = arith.cmpi ne, %70, %90 : vector<16x1xi32>
    %92 = arith.extui %91 : vector<16x1xi1> to vector<16x1xi32>
    %93 = arith.sitofp %92 : vector<16x1xi32> to vector<16x1xf32>
    %94 = arith.subf %82, %89 : vector<16x1xf32>
    %95 = arith.mulf %94, %93 : vector<16x1xf32>
    %cst_25 = arith.constant dense<0.000000e+00> : vector<1xf32>
    %96 = vector.multi_reduction <add>, %95, %cst_25 [0] : vector<16x1xf32> to vector<1xf32>
    %97 = vector.shape_cast %96 : vector<1xf32> to vector<1x1xf32>
    %cst_26 = arith.constant dense<0.000000e+00> : vector<1xf32>
    %98 = vector.multi_reduction <add>, %93, %cst_26 [0] : vector<16x1xf32> to vector<1xf32>
    %99 = vector.shape_cast %98 : vector<1xf32> to vector<1x1xf32>
    %100 = vector.extract_strided_slice %5 {offsets = [0, 26], sizes = [16, 6], strides = [1, 1]} : vector<16x128xf32> to vector<16x6xf32>
    %101 = vector.extract_strided_slice %6 {offsets = [0, 3], sizes = [16, 1], strides = [1, 1]} : vector<16x5xi32> to vector<16x1xi32>
    %cst_27 = arith.constant dense<0xFF800000> : vector<16xf32>
    %102 = vector.multi_reduction <maximumf>, %100, %cst_27 [1] : vector<16x6xf32> to vector<16xf32>
    %103 = vector.shape_cast %102 : vector<16xf32> to vector<16x1xf32>
    %104 = vector.broadcast %103 : vector<16x1xf32> to vector<16x6xf32>
    %105 = arith.subf %100, %104 : vector<16x6xf32>
    %106 = math.exp %105 : vector<16x6xf32>
    %cst_28 = arith.constant dense<0.000000e+00> : vector<16xf32>
    %107 = vector.multi_reduction <add>, %106, %cst_28 [1] : vector<16x6xf32> to vector<16xf32>
    %108 = vector.shape_cast %107 : vector<16xf32> to vector<16x1xf32>
    %109 = tpu.reciprocal %108 {approx = true} : vector<16x1xf32> -> vector<16x1xf32>
    %110 = vector.broadcast %109 : vector<16x1xf32> to vector<16x6xf32>
    %111 = arith.mulf %106, %110 : vector<16x6xf32>
    %112 = math.log %108 : vector<16x1xf32>
    %113 = arith.addf %103, %112 : vector<16x1xf32>
    %114 = tpu.iota {dimensions = array<i32: 1>} : vector<16x6xi32>
    %115 = vector.broadcast %101 : vector<16x1xi32> to vector<16x6xi32>
    %116 = arith.cmpi eq, %114, %115 : vector<16x6xi32>
    %cst_29 = arith.constant 0.000000e+00 : f32
    %117 = vector.broadcast %cst_29 : f32 to vector<16x6xf32>
    %118 = arith.select %116, %100, %117 : vector<16x6xi1>, vector<16x6xf32>
    %cst_30 = arith.constant dense<0.000000e+00> : vector<16xf32>
    %119 = vector.multi_reduction <add>, %118, %cst_30 [1] : vector<16x6xf32> to vector<16xf32>
    %120 = vector.shape_cast %119 : vector<16xf32> to vector<16x1xf32>
    %c0_i32_31 = arith.constant 0 : i32
    %121 = vector.broadcast %c0_i32_31 : i32 to vector<16x1xi32>
    %122 = arith.cmpi ne, %101, %121 : vector<16x1xi32>
    %123 = arith.extui %122 : vector<16x1xi1> to vector<16x1xi32>
    %124 = arith.sitofp %123 : vector<16x1xi32> to vector<16x1xf32>
    %125 = arith.subf %113, %120 : vector<16x1xf32>
    %126 = arith.mulf %125, %124 : vector<16x1xf32>
    %cst_32 = arith.constant dense<0.000000e+00> : vector<1xf32>
    %127 = vector.multi_reduction <add>, %126, %cst_32 [0] : vector<16x1xf32> to vector<1xf32>
    %128 = vector.shape_cast %127 : vector<1xf32> to vector<1x1xf32>
    %cst_33 = arith.constant dense<0.000000e+00> : vector<1xf32>
    %129 = vector.multi_reduction <add>, %124, %cst_33 [0] : vector<16x1xf32> to vector<1xf32>
    %130 = vector.shape_cast %129 : vector<1xf32> to vector<1x1xf32>
    %131 = vector.extract_strided_slice %5 {offsets = [0, 32], sizes = [16, 3], strides = [1, 1]} : vector<16x128xf32> to vector<16x3xf32>
    %132 = vector.extract_strided_slice %6 {offsets = [0, 4], sizes = [16, 1], strides = [1, 1]} : vector<16x5xi32> to vector<16x1xi32>
    %cst_34 = arith.constant dense<0xFF800000> : vector<16xf32>
    %133 = vector.multi_reduction <maximumf>, %131, %cst_34 [1] : vector<16x3xf32> to vector<16xf32>
    %134 = vector.shape_cast %133 : vector<16xf32> to vector<16x1xf32>
    %135 = vector.broadcast %134 : vector<16x1xf32> to vector<16x3xf32>
    %136 = arith.subf %131, %135 : vector<16x3xf32>
    %137 = math.exp %136 : vector<16x3xf32>
    %cst_35 = arith.constant dense<0.000000e+00> : vector<16xf32>
    %138 = vector.multi_reduction <add>, %137, %cst_35 [1] : vector<16x3xf32> to vector<16xf32>
    %139 = vector.shape_cast %138 : vector<16xf32> to vector<16x1xf32>
    %140 = tpu.reciprocal %139 {approx = true} : vector<16x1xf32> -> vector<16x1xf32>
    %141 = vector.broadcast %140 : vector<16x1xf32> to vector<16x3xf32>
    %142 = arith.mulf %137, %141 : vector<16x3xf32>
    %143 = math.log %139 : vector<16x1xf32>
    %144 = arith.addf %134, %143 : vector<16x1xf32>
    %145 = tpu.iota {dimensions = array<i32: 1>} : vector<16x3xi32>
    %146 = vector.broadcast %132 : vector<16x1xi32> to vector<16x3xi32>
    %147 = arith.cmpi eq, %145, %146 : vector<16x3xi32>
    %cst_36 = arith.constant 0.000000e+00 : f32
    %148 = vector.broadcast %cst_36 : f32 to vector<16x3xf32>
    %149 = arith.select %147, %131, %148 : vector<16x3xi1>, vector<16x3xf32>
    %cst_37 = arith.constant dense<0.000000e+00> : vector<16xf32>
    %150 = vector.multi_reduction <add>, %149, %cst_37 [1] : vector<16x3xf32> to vector<16xf32>
    %151 = vector.shape_cast %150 : vector<16xf32> to vector<16x1xf32>
    %c0_i32_38 = arith.constant 0 : i32
    %152 = vector.broadcast %c0_i32_38 : i32 to vector<16x1xi32>
    %153 = arith.cmpi ne, %132, %152 : vector<16x1xi32>
    %154 = arith.extui %153 : vector<16x1xi1> to vector<16x1xi32>
    %155 = arith.sitofp %154 : vector<16x1xi32> to vector<16x1xf32>
    %156 = arith.subf %144, %151 : vector<16x1xf32>
    %157 = arith.mulf %156, %155 : vector<16x1xf32>
    %cst_39 = arith.constant dense<0.000000e+00> : vector<1xf32>
    %158 = vector.multi_reduction <add>, %157, %cst_39 [0] : vector<16x1xf32> to vector<1xf32>
    %159 = vector.shape_cast %158 : vector<1xf32> to vector<1x1xf32>
    %cst_40 = arith.constant dense<0.000000e+00> : vector<1xf32>
    %160 = vector.multi_reduction <add>, %155, %cst_40 [0] : vector<16x1xf32> to vector<1xf32>
    %161 = vector.shape_cast %160 : vector<1xf32> to vector<1x1xf32>
    %cst_41 = arith.constant 0.000000e+00 : f32
    %162 = vector.broadcast %cst_41 : f32 to vector<16x93xf32>
    %163 = tpu.concatenate %18, %49, %80, %111, %142, %162 in 1 : vector<16x10xf32>, vector<16x12xf32>, vector<16x4xf32>, vector<16x6xf32>, vector<16x3xf32>, vector<16x93xf32> -> vector<16x128xf32>
    %c0_42 = arith.constant 0 : index
    %c0_43 = arith.constant 0 : index
    %164 = vector.load %arg5[%c0_42, %c0_43] : memref<16x128xf32, #tpu.memory_space<vmem>>, vector<16x128xf32>
    tpu.vector_store %arg5[%c0_42, %c0_43], %163 {strides = array<i32>} : memref<16x128xf32, #tpu.memory_space<vmem>>, vector<16x128xf32>,
    %165 = tpu.concatenate %35, %37, %66, %68, %97, %99, %128, %130, %159, %161 in 1 : vector<1x1xf32>, vector<1x1xf32>, vector<1x1xf32>, vector<1x1xf32>, vector<1x1xf32>, vector<1x1xf32>, vector<1x1xf32>, vector<1x1xf32>, vector<1x1xf32>, vector<1x1xf32> -> vector<1x10xf32>
    %cst_44 = arith.constant 0.000000e+00 : f32
    %166 = vector.broadcast %cst_44 : f32 to vector<1x118xf32>
    %167 = tpu.concatenate %165, %166 in 1 : vector<1x10xf32>, vector<1x118xf32> -> vector<1x128xf32>
    %cst_45 = arith.constant 0.000000e+00 : f32
    %168 = vector.broadcast %cst_45 : f32 to vector<7x128xf32>
    %169 = tpu.concatenate %167, %168 in 0 : vector<1x128xf32>, vector<7x128xf32> -> vector<8x128xf32>
    %c0_46 = arith.constant 0 : index
    %c0_47 = arith.constant 0 : index
    %170 = vector.load %arg6[%c0_46, %c0_47] : memref<8x128xf32, #tpu.memory_space<vmem>>, vector<8x128xf32>
    tpu.vector_store %arg6[%c0_46, %c0_47], %169 {strides = array<i32>} : memref<8x128xf32, #tpu.memory_space<vmem>>, vector<8x128xf32>,
    return
  }
  func.func @transform_0(%arg0: i32) -> (i32, i32) {
    %c0_i32 = arith.constant 0 : i32
    %c0_i32_0 = arith.constant 0 : i32
    return %arg0, %c0_i32 : i32, i32
  }
  func.func @transform_1(%arg0: i32) -> (i32, i32) {
    %c0_i32 = arith.constant 0 : i32
    %c0_i32_0 = arith.constant 0 : i32
    %c0_i32_1 = arith.constant 0 : i32
    return %c0_i32, %c0_i32_0 : i32, i32
  }
  func.func @transform_2(%arg0: i32) -> (i32, i32) {
    %c0_i32 = arith.constant 0 : i32
    %c0_i32_0 = arith.constant 0 : i32
    %c0_i32_1 = arith.constant 0 : i32
    return %c0_i32, %c0_i32_0 : i32, i32
  }
  func.func @transform_3(%arg0: i32) -> (i32, i32) {
    %c0_i32 = arith.constant 0 : i32
    %c0_i32_0 = arith.constant 0 : i32
    return %arg0, %c0_i32 : i32, i32
  }
  func.func @transform_4(%arg0: i32) -> (i32, i32) {
    %c0_i32 = arith.constant 0 : i32
    %c0_i32_0 = arith.constant 0 : i32
    return %arg0, %c0_i32 : i32, i32
  }
  func.func @transform_5(%arg0: i32) -> (i32, i32) {
    %c0_i32 = arith.constant 0 : i32
    %c0_i32_0 = arith.constant 0 : i32
    return %arg0, %c0_i32 : i32, i32
  }
}

module attributes {stable_mosaic.version = 11 : i64} {
  func.func @_linear_kernel(%arg0: i32, %arg1: memref<16x32xbf16, #tpu.memory_space<vmem>>, %arg2: memref<32x32xbf16, #tpu.memory_space<vmem>>, %arg3: memref<1x32xf32, #tpu.memory_space<vmem>>, %arg4: memref<16x32xbf16, #tpu.memory_space<vmem>>) attributes {dimension_semantics = [#tpu.dimension_semantics<parallel>], iteration_bounds = array<i64: 1>, scalar_prefetch = 0 : i64, scratch_operands = 0 : i64, tpu.core_type = #tpu.core_type<tc>, window_params = [{transform_indices = @transform_0, window_bounds = array<i64: 16, 32>}, {pipeline_mode = #tpu.pipeline_mode<synchronous>, transform_indices = @transform_1, window_bounds = array<i64: 32, 32>}, {pipeline_mode = #tpu.pipeline_mode<synchronous>, transform_indices = @transform_2, window_bounds = array<i64: 1, 32>}, {transform_indices = @transform_3, window_bounds = array<i64: 16, 32>}]} {
    %c0 = arith.constant 0 : index
    %c0_0 = arith.constant 0 : index
    %0 = vector.load %arg1[%c0, %c0_0] : memref<16x32xbf16, #tpu.memory_space<vmem>>, vector<16x32xbf16>
    %c0_1 = arith.constant 0 : index
    %c0_2 = arith.constant 0 : index
    %1 = vector.load %arg2[%c0_1, %c0_2] : memref<32x32xbf16, #tpu.memory_space<vmem>>, vector<32x32xbf16>
    %cst = arith.constant dense<0.000000e+00> : vector<16x32xf32>
    %2 = tpu.matmul %0, %1, %cst {dimension_numbers = #tpu.dot_dimension_numbers<[1], [0], [0], [1], [0, 0, 1, 1], [], []>} : vector<16x32xbf16>, vector<32x32xbf16>, vector<16x32xf32> -> vector<16x32xf32>
    %c0_3 = arith.constant 0 : index
    %c0_4 = arith.constant 0 : index
    %3 = vector.load %arg3[%c0_3, %c0_4] : memref<1x32xf32, #tpu.memory_space<vmem>>, vector<1x32xf32>
    %4 = vector.broadcast %3 : vector<1x32xf32> to vector<16x32xf32>
    %5 = arith.addf %2, %4 : vector<16x32xf32>
    %cst_5 = arith.constant 0.000000e+00 : f32
    %6 = vector.broadcast %cst_5 : f32 to vector<16x32xf32>
    %7 = arith.maximumf %5, %6 : vector<16x32xf32>
    %8 = arith.truncf %7 : vector<16x32xf32> to vector<16x32xbf16>
    %c0_6 = arith.constant 0 : index
    %c0_7 = arith.constant 0 : index
    %9 = vector.load %arg4[%c0_6, %c0_7] : memref<16x32xbf16, #tpu.memory_space<vmem>>, vector<16x32xbf16>
    tpu.vector_store %arg4[%c0_6, %c0_7], %8 {strides = array<i32>} : memref<16x32xbf16, #tpu.memory_space<vmem>>, vector<16x32xbf16>,
    return
  }
  func.func @transform_0(%arg0: i32) -> (i32, i32) {
    %c0_i32 = arith.constant 0 : i32
    %c0_i32_0 = arith.constant 0 : i32
    return %arg0, %c0_i32 : i32, i32
  }
  func.func @transform_1(%arg0: i32) -> (i32, i32) {
    %c0_i32 = arith.constant 0 : i32
    %c0_i32_0 = arith.constant 0 : i32
    %c0_i32_1 = arith.constant 0 : i32
    return %c0_i32, %c0_i32_0 : i32, i32
  }
  func.func @transform_2(%arg0: i32) -> (i32, i32) {
    %c0_i32 = arith.constant 0 : i32
    %c0_i32_0 = arith.constant 0 : i32
    %c0_i32_1 = arith.constant 0 : i32
    return %c0_i32, %c0_i32_0 : i32, i32
  }
  func.func @transform_3(%arg0: i32) -> (i32, i32) {
    %c0_i32 = arith.constant 0 : i32
    %c0_i32_0 = arith.constant 0 : i32
    return %arg0, %c0_i32 : i32, i32
  }
}

</mosaic_0001>

<llo_original>
// kernel: _lambda_.10
$region0: #{_lambda_.10}
  #allocation0 [shape = 'u32[]', space=smem, size = 0x4, offset = 0x4, fixed_abs, tag = 'smem constant byte address 0x4 - core index']
  #allocation1 [shape = 'u32[144,128]{1,0:T(1,128)}', space=vmem, size = 0x12000, scoped, tag = 'internal scratch']
  %s0 = inlined_call_operand.vmem [shape: bf16[16,24], index: 0, kind: input, shape index: {}]
  %s1 = inlined_call_operand.vmem [shape: bf16[24,192], index: 1, kind: input, shape index: {}]
  %s2 = inlined_call_operand.vmem [shape: f32[1,192], index: 2, kind: input, shape index: {}]
  %s3 = inlined_call_operand.vmem [shape: f32[16,64], index: 3, kind: output, shape index: {0}]
  %s4 = inlined_call_operand.vmem [shape: f32[16,64], index: 4, kind: output, shape index: {1}]
  %s5 = inlined_call_operand.vmem [shape: f32[16,64], index: 5, kind: output, shape index: {2}]
  %6 = xla_tuple %s3, %s4, %s5
  %s7 = sld [smem:[#allocation0]]
  $region38: #{_lambda_.10} parent=0
    _
  %s9 = ssub.s32 1, %s7
  %s10 = scalar_select 0, %s9, %s7
  // Predicated region
  $region2: #{_lambda_.10} parent=0 // pred_check
    _
  $region3: #{_lambda_.10} parent=0 // pred_check_branch
    %12 = sbr.rel (0) target = $region5
  $region4: #{_lambda_.10} parent=0 // pred_region
    _
  $region5: #{_lambda_.10} parent=0 // pred_fallthru
    _
  // Predicated region
  $region6: #{_lambda_.10} parent=0 // pred_check
    _
  $region7: #{_lambda_.10} parent=0 // pred_check_branch
    %14 = sbr.rel (0) target = $region9
  $region8: #{_lambda_.10} parent=0 // pred_region
    _
  $region9: #{_lambda_.10} parent=0 // pred_fallthru
    _
  // Predicated region
  $region10: #{_lambda_.10} parent=0 // pred_check
    _
  $region11: #{_lambda_.10} parent=0 // pred_check_branch
    %16 = sbr.rel (0) target = $region13
  $region12: #{_lambda_.10} parent=0 // pred_region
    _
  $region13: #{_lambda_.10} parent=0 // pred_fallthru
    _
  %v18 = vld [vmem:[%s0] sm:$0xf]
  %v19 = vld [vmem:[%s0 + $0x4] sm:$0xf]
  %v20 = vld [vmem:[%s1] sm:$0xff]
  %v21 = vld [vmem:[%s1 + $0x8] sm:$0xff]
  %v22 = vld [vmem:[%s1 + $0x10] sm:$0xff]
  %v23 = vld [vmem:[%s2] sm:$0x3]
  %v25 = vlaneseq
  %v26 = vshrl.u32 %v25, 7
  %v27 = vsub.s32 0, %v26
  %v28 = vrot.slane %v23, %v27
  %v29 = vlaneseq
  %v30 = vshrl.u32 %v29, 7
  %v31 = vsub.s32 1, %v30
  %v32 = vrot.slane %v23, %v31
  %v37 = vunpack.c.l.b16 %v18
  %v38 = vunpack.c.l.b16 %v19
  %v39 = vpack.c.b16 %v38, %v37
  %v43 = vunpack.c.l.b16 %v20
  %v44 = vunpack.c.h.b16 %v20
  %v45 = vunpack.c.l.b16 %v21
  %v46 = vunpack.c.h.b16 %v21
  %v47 = vunpack.c.l.b16 %v22
  %v48 = vunpack.c.h.b16 %v22
  %v49 = vpack.c.b16 %v45, %v43
  %v50 = vpack.c.b16 %v46, %v44
  %v51 = vpack.c.b16 %v47, %v47
  %v52 = vpack.c.b16 %v48, %v48
  %vm55 = vcmask 195584
  %v57 = vsel %vm55, %v39, 0
  %vm59 = vcmask 1043456
  %v61 = vsel %vm59, %v51, 0
  %v64 = vsel %vm59, %v52, 0
  %66 = vmatprep.subr.bf16.mxu0 %v50
  %67 = vmatpush1.bf16.msra.mxu0 %v49
  %68 = vmatprep.subr.bf16.mxu0 %v64
  %69 = vmatpush1.bf16.msra.mxu0 %v61
  %70 = vmatprep.subr.bf16.mxu0 0
  %71 = vmatpush1.bf16.msra.mxu0 0
  %72 = vmatprep.subr.bf16.mxu0 0
  %73 = vmatpush1.bf16.msra.mxu0 0
  %74 = vmatprep.subr.bf16.mxu0 0
  %75 = vmatpush1.bf16.msra.mxu0 0
  %76 = vmatprep.subr.bf16.mxu0 0
  %77 = vmatpush1.bf16.msra.mxu0 0
  %78 = vmatprep.subr.bf16.mxu0 0
  %79 = vmatpush1.bf16.msra.mxu0 0
  %80 = vmatprep.subr.bf16.mxu0 0
  %81 = vmatpush1.bf16.msra.mxu0 0
  %82 = vmatprep.subr.bf16.mxu0 0
  %83 = vmatpush1.bf16.msra.mxu0 0
  %84 = vmatprep.subr.bf16.mxu0 0
  %85 = vmatpush1.bf16.msra.mxu0 0
  %86 = vmatprep.subr.bf16.mxu0 0
  %87 = vmatpush1.bf16.msra.mxu0 0
  %88 = vmatprep.subr.bf16.mxu0 0
  %89 = vmatpush1.bf16.msra.mxu0 0
  %90 = vmatprep.subr.bf16.mxu0 0
  %91 = vmatpush1.bf16.msra.mxu0 0
  %92 = vmatprep.subr.bf16.mxu0 0
  %93 = vmatpush1.bf16.msra.mxu0 0
  %94 = vmatprep.subr.bf16.mxu0 0
  %95 = vmatpush1.bf16.msra.mxu0 0
  %96 = vmatprep.subr.bf16.mxu0 0
  %97 = vmatpush1.bf16.msra.mxu0 0
  %98 = vmatprep.mubr.bf16.mxu0 0
  %99 = vmatmul.mubr.bf16.gmra.mrb[0].mxu0 %v57
  %v100 = vpop.f32.mrb[0].mxu0
  %v101 = vadd.f32 %v28, %v100
  %v102 = vpop.f32.mrb[0].mxu0
  %v103 = vadd.f32 %v32, %v102
  %v104 = vpop.f32.mrb[0].mxu0
  %v105 = vadd.f32 %v28, %v104
  %v106 = vpop.f32.mrb[0].mxu0
  %v107 = vadd.f32 %v32, %v106
  %108 = vdwg.mxu0
  %vm109 = vcmask 523264
  %110 = vst.msk [vmem:[%s3] sm:$0xff] %vm109, %v101
  %111 = vst.msk [vmem:[%s3 + $0x8] sm:$0xff] %vm109, %v105
  %114 = vrot.lane.b32.xlu0 %v101, 64
  %v115 = vpop.permute.xlu0 %114
  %116 = vrot.lane.b32.xlu0 %v105, 64
  %v117 = vpop.permute.xlu0 %116
  %120 = vst.msk [vmem:[%s4] sm:$0xff] %vm109, %v115
  %121 = vst.msk [vmem:[%s4 + $0x8] sm:$0xff] %vm109, %v117
  %122 = vst.msk [vmem:[%s5] sm:$0xff] %vm109, %v103
  %123 = vst.msk [vmem:[%s5 + $0x8] sm:$0xff] %vm109, %v107
  // Predicated region
  $region14: #{_lambda_.10} parent=0 // pred_check
    _
  $region15: #{_lambda_.10} parent=0 // pred_check_branch
    %125 = sbr.rel (0) target = $region17
  $region16: #{_lambda_.10} parent=0 // pred_region
    _
  $region17: #{_lambda_.10} parent=0 // pred_fallthru
    _
  // Predicated region
  $region18: #{_lambda_.10} parent=0 // pred_check
    _
  $region19: #{_lambda_.10} parent=0 // pred_check_branch
    %127 = sbr.rel (0) target = $region21
  $region20: #{_lambda_.10} parent=0 // pred_region
    _
  $region21: #{_lambda_.10} parent=0 // pred_fallthru
    _
  // Predicated region
  $region22: #{_lambda_.10} parent=0 // pred_check
    _
  $region23: #{_lambda_.10} parent=0 // pred_check_branch
    %129 = sbr.rel (0) target = $region25
  $region24: #{_lambda_.10} parent=0 // pred_region
    _
  $region25: #{_lambda_.10} parent=0 // pred_fallthru
    _
  // Predicated region
  $region26: #{_lambda_.10} parent=0 // pred_check
    _
  $region27: #{_lambda_.10} parent=0 // pred_check_branch
    %131 = sbr.rel (0) target = $region29
  $region28: #{_lambda_.10} parent=0 // pred_region
    _
  $region29: #{_lambda_.10} parent=0 // pred_fallthru
    _
  // Predicated region
  $region30: #{_lambda_.10} parent=0 // pred_check
    _
  $region31: #{_lambda_.10} parent=0 // pred_check_branch
    %133 = sbr.rel (0) target = $region33
  $region32: #{_lambda_.10} parent=0 // pred_region
    _
  $region33: #{_lambda_.10} parent=0 // pred_fallthru
    _
  // Predicated region
  $region34: #{_lambda_.10} parent=0 // pred_check
    _
  $region35: #{_lambda_.10} parent=0 // pred_check_branch
    %135 = sbr.rel (0) target = $region37
  $region36: #{_lambda_.10} parent=0 // pred_region
    _
  $region37: #{_lambda_.10} parent=0 // pred_fallthru
    _

// kernel: _lambda_.9
$region0: #{_lambda_.9}
  #allocation0 [shape = 'u32[]', space=smem, size = 0x4, offset = 0x4, fixed_abs, tag = 'smem constant byte address 0x4 - core index']
  #allocation1 [shape = 'u32[144,128]{1,0:T(1,128)}', space=vmem, size = 0x12000, scoped, tag = 'internal scratch']
  %s0 = inlined_call_operand.vmem [shape: bf16[16,24], index: 0, kind: input, shape index: {}]
  %s1 = inlined_call_operand.vmem [shape: bf16[24,8], index: 1, kind: input, shape index: {}]
  %s2 = inlined_call_operand.vmem [shape: f32[1,8], index: 2, kind: input, shape index: {}]
  %s3 = inlined_call_operand.vmem [shape: bf16[16,8], index: 3, kind: output, shape index: {}]
  %s4 = sld [smem:[#allocation0]]
  $region22: #{_lambda_.9} parent=0
    _
  %s6 = ssub.s32 1, %s4
  %s7 = scalar_select 0, %s6, %s4
  // Predicated region
  $region2: #{_lambda_.9} parent=0 // pred_check
    _
  $region3: #{_lambda_.9} parent=0 // pred_check_branch
    %9 = sbr.rel (0) target = $region5
  $region4: #{_lambda_.9} parent=0 // pred_region
    _
  $region5: #{_lambda_.9} parent=0 // pred_fallthru
    _
  // Predicated region
  $region6: #{_lambda_.9} parent=0 // pred_check
    _
  $region7: #{_lambda_.9} parent=0 // pred_check_branch
    %11 = sbr.rel (0) target = $region9
  $region8: #{_lambda_.9} parent=0 // pred_region
    _
  $region9: #{_lambda_.9} parent=0 // pred_fallthru
    _
  // Predicated region
  $region10: #{_lambda_.9} parent=0 // pred_check
    _
  $region11: #{_lambda_.9} parent=0 // pred_check_branch
    %13 = sbr.rel (0) target = $region13
  $region12: #{_lambda_.9} parent=0 // pred_region
    _
  $region13: #{_lambda_.9} parent=0 // pred_fallthru
    _
  %v15 = vld [vmem:[%s0] sm:$0xf]
  %v16 = vld [vmem:[%s0 + $0x4] sm:$0xf]
  %v17 = vld [vmem:[%s1] sm:$0xf]
  %v18 = vld [vmem:[%s1 + $0x4] sm:$0xf]
  %v19 = vld [vmem:[%s1 + $0x8] sm:$0xf]
  %v20 = vld [vmem:[%s2] sm:$0x1]
  %v22 = vlaneseq
  %v23 = vshrl.u32 %v22, 7
  %v24 = vsub.s32 0, %v23
  %v25 = vrot.slane %v20, %v24
  %v29 = vunpack.c.l.b16 %v15
  %v30 = vunpack.c.l.b16 %v16
  %v31 = vpack.c.b16 %v30, %v29
  %v35 = vunpack.c.l.b16 %v17
  %v36 = vunpack.c.l.b16 %v18
  %v37 = vunpack.c.l.b16 %v19
  %v38 = vpack.c.b16 %v36, %v35
  %v39 = vpack.c.b16 %v37, %v37
  %vm41 = vcmask 195584
  %v43 = vsel %vm41, %v31, 0
  %vm45 = vcmask 1043456
  %v47 = vsel %vm45, %v39, 0
  %49 = vmatprep.subr.bf16.mxu0 0
  %50 = vmatpush1.bf16.msra.mxu0 %v38
  %51 = vmatprep.subr.bf16.mxu0 0
  %52 = vmatpush1.bf16.msra.mxu0 %v47
  %53 = vmatprep.subr.bf16.mxu0 0
  %54 = vmatpush1.bf16.msra.mxu0 0
  %55 = vmatprep.subr.bf16.mxu0 0
  %56 = vmatpush1.bf16.msra.mxu0 0
  %57 = vmatprep.subr.bf16.mxu0 0
  %58 = vmatpush1.bf16.msra.mxu0 0
  %59 = vmatprep.subr.bf16.mxu0 0
  %60 = vmatpush1.bf16.msra.mxu0 0
  %61 = vmatprep.subr.bf16.mxu0 0
  %62 = vmatpush1.bf16.msra.mxu0 0
  %63 = vmatprep.subr.bf16.mxu0 0
  %64 = vmatpush1.bf16.msra.mxu0 0
  %65 = vmatprep.subr.bf16.mxu0 0
  %66 = vmatpush1.bf16.msra.mxu0 0
  %67 = vmatprep.subr.bf16.mxu0 0
  %68 = vmatpush1.bf16.msra.mxu0 0
  %69 = vmatprep.subr.bf16.mxu0 0
  %70 = vmatpush1.bf16.msra.mxu0 0
  %71 = vmatprep.subr.bf16.mxu0 0
  %72 = vmatpush1.bf16.msra.mxu0 0
  %73 = vmatprep.subr.bf16.mxu0 0
  %74 = vmatpush1.bf16.msra.mxu0 0
  %75 = vmatprep.subr.bf16.mxu0 0
  %76 = vmatpush1.bf16.msra.mxu0 0
  %77 = vmatprep.subr.bf16.mxu0 0
  %78 = vmatpush1.bf16.msra.mxu0 0
  %79 = vmatprep.subr.bf16.mxu0 0
  %80 = vmatpush1.bf16.msra.mxu0 0
  %81 = vmatprep.mubr.bf16.mxu0 0
  %82 = vmatmul.mubr.bf16.gmra.mrb[0].mxu0 %v43
  %v83 = vpop.f32.mrb[0].mxu0
  %v84 = vadd.f32 %v25, %v83
  %v85 = vpop.f32.mrb[0].mxu0
  %v86 = vpop.f32.mrb[0].mxu0
  %v87 = vadd.f32 %v25, %v86
  %v88 = vpop.f32.mrb[0].mxu0
  %89 = vdwg.mxu0
  %v90 = vpack.c.bf16 %v87, %v84
  %v92 = vunpack.c.l.b16 %v90
  %v93 = vunpack.c.h.b16 %v90
  %v94 = vpack.c.b16 %v92, %v92
  %v95 = vpack.c.b16 %v93, %v93
  %vm98 = vcmask 60416
  %99 = vst.msk [vmem:[%s3] sm:$0xf] %vm98, %v94
  %100 = vst.msk [vmem:[%s3 + $0x4] sm:$0xf] %vm98, %v95
  // Predicated region
  $region14: #{_lambda_.9} parent=0 // pred_check
    _
  $region15: #{_lambda_.9} parent=0 // pred_check_branch
    %102 = sbr.rel (0) target = $region17
  $region16: #{_lambda_.9} parent=0 // pred_region
    _
  $region17: #{_lambda_.9} parent=0 // pred_fallthru
    _
  // Predicated region
  $region18: #{_lambda_.9} parent=0 // pred_check
    _
  $region19: #{_lambda_.9} parent=0 // pred_check_branch
    %104 = sbr.rel (0) target = $region21
  $region20: #{_lambda_.9} parent=0 // pred_region
    _
  $region21: #{_lambda_.9} parent=0 // pred_fallthru
    _

// kernel: _lambda_.12
$region0: #{_lambda_.12}
  #allocation0 [shape = 'u32[]', space=smem, size = 0x4, offset = 0x4, fixed_abs, tag = 'smem constant byte address 0x4 - core index']
  #allocation1 [shape = 'u32[144,128]{1,0:T(1,128)}', space=vmem, size = 0x12000, scoped, tag = 'internal scratch']
  %s0 = inlined_call_operand.vmem [shape: f32[16,16], index: 0, kind: input, shape index: {}]
  %s1 = inlined_call_operand.vmem [shape: f32[16,16], index: 1, kind: input, shape index: {}]
  %s2 = inlined_call_operand.vmem [shape: f32[16,64], index: 2, kind: input, shape index: {}]
  %s3 = inlined_call_operand.vmem [shape: f32[16,1], index: 3, kind: input, shape index: {}]
  %s4 = inlined_call_operand.vmem [shape: bf16[16,32], index: 4, kind: output, shape index: {}]
  %s5 = sld [smem:[#allocation0]]
  $region26: #{_lambda_.12} parent=0
    _
  %s7 = ssub.s32 1, %s5
  %s8 = scalar_select 0, %s7, %s5
  // Predicated region
  $region2: #{_lambda_.12} parent=0 // pred_check
    _
  $region3: #{_lambda_.12} parent=0 // pred_check_branch
    %10 = sbr.rel (0) target = $region5
  $region4: #{_lambda_.12} parent=0 // pred_region
    _
  $region5: #{_lambda_.12} parent=0 // pred_fallthru
    _
  // Predicated region
  $region6: #{_lambda_.12} parent=0 // pred_check
    _
  $region7: #{_lambda_.12} parent=0 // pred_check_branch
    %12 = sbr.rel (0) target = $region9
  $region8: #{_lambda_.12} parent=0 // pred_region
    _
  $region9: #{_lambda_.12} parent=0 // pred_fallthru
    _
  // Predicated region
  $region10: #{_lambda_.12} parent=0 // pred_check
    _
  $region11: #{_lambda_.12} parent=0 // pred_check_branch
    %14 = sbr.rel (0) target = $region13
  $region12: #{_lambda_.12} parent=0 // pred_region
    _
  $region13: #{_lambda_.12} parent=0 // pred_fallthru
    _
  // Predicated region
  $region14: #{_lambda_.12} parent=0 // pred_check
    _
  $region15: #{_lambda_.12} parent=0 // pred_check_branch
    %16 = sbr.rel (0) target = $region17
  $region16: #{_lambda_.12} parent=0 // pred_region
    _
  $region17: #{_lambda_.12} parent=0 // pred_fallthru
    _
  %v17 = vld [vmem:[%s2] sm:$0xff]
  %v18 = vld [vmem:[%s2 + $0x8] sm:$0xff]
  %v19 = vxor.u32 %v17, 2147483648
  %v20 = vxor.u32 %v18, 2147483648
  %v21 = vmul.f32 %v19, 1.442695
  %v22 = vpow.pop %v21
  %v23 = vmul.f32 %v20, 1.442695
  %v24 = vpow.pop %v23
  %v25 = vadd.f32 %v22, 1.0
  %v26 = vadd.f32 %v24, 1.0
  %v27 = vrcp.pop %v25
  %v28 = vmul.f32 1.0, %v27
  %v29 = vrcp.pop %v26
  %v30 = vmul.f32 1.0, %v29
  %v31 = vtanh.pop %v17
  %v32 = vtanh.pop %v18
  %v33 = vld [vmem:[%s0] sm:$0xff]
  %v34 = vld [vmem:[%s0 + $0x8] sm:$0xff]
  %v35 = vld [vmem:[%s1] sm:$0xff]
  %v36 = vld [vmem:[%s1 + $0x8] sm:$0xff]
  %39 = vrot.lane.b32.xlu0 %v35, 16
  %v40 = vpop.permute.xlu0 %39
  %41 = vrot.lane.b32.xlu0 %v36, 16
  %v42 = vpop.permute.xlu0 %41
  %vm45 = vcmask 130048
  %v46 = vsel %vm45, %v33, %v40
  %v47 = vsel %vm45, %v34, %v42
  %50 = vrot.lane.b32.xlu0 %v31, 96
  %v51 = vpop.permute.xlu0 %50
  %52 = vrot.lane.b32.xlu0 %v32, 96
  %v53 = vpop.permute.xlu0 %52
  %v56 = vmul.f32 %v28, %v51
  %v57 = vmul.f32 %v30, %v53
  %v58 = vadd.f32 %v46, %v56
  %v59 = vadd.f32 %v47, %v57
  %v60 = vld [vmem:[%s3] sm:$0xff]
  %v61 = vld [vmem:[%s3 + $0x8] sm:$0xff]
  %63 = vset.pattern.permute.xlu0 0
  %64 = vperm.xlu0 %63, %v60
  %v65 = vpop.permute.xlu0 %64
  %68 = vset.pattern.permute.xlu0 0
  %69 = vperm.xlu0 %68, %v61
  %v70 = vpop.permute.xlu0 %69
  %v72 = vmul.f32 %v58, %v65
  %v73 = vmul.f32 %v59, %v70
  %v74 = vpack.c.bf16 %v73, %v72
  %v76 = vunpack.c.l.b16 %v74
  %v77 = vunpack.c.h.b16 %v74
  %v78 = vpack.c.b16 %v76, %v76
  %v79 = vpack.c.b16 %v77, %v77
  %vm82 = vcmask 257024
  %83 = vst.msk [vmem:[%s4] sm:$0xf] %vm82, %v78
  %84 = vst.msk [vmem:[%s4 + $0x4] sm:$0xf] %vm82, %v79
  // Predicated region
  $region18: #{_lambda_.12} parent=0 // pred_check
    _
  $region19: #{_lambda_.12} parent=0 // pred_check_branch
    %86 = sbr.rel (0) target = $region21
  $region20: #{_lambda_.12} parent=0 // pred_region
    _
  $region21: #{_lambda_.12} parent=0 // pred_fallthru
    _
  // Predicated region
  $region22: #{_lambda_.12} parent=0 // pred_check
    _
  $region23: #{_lambda_.12} parent=0 // pred_check_branch
    %88 = sbr.rel (0) target = $region25
  $region24: #{_lambda_.12} parent=0 // pred_region
    _
  $region25: #{_lambda_.12} parent=0 // pred_fallthru
    _

// kernel: _lambda_.11
$region0: #{_lambda_.11}
  #allocation0 [shape = 'u32[]', space=smem, size = 0x4, offset = 0x4, fixed_abs, tag = 'smem constant byte address 0x4 - core index']
  #allocation1 [shape = 'u32[144,128]{1,0:T(1,128)}', space=vmem, size = 0x12000, scoped, tag = 'internal scratch']
  #allocation2 [shape = 'f32[2,16]{1,0:T(2,128)}', space=vmem, size = 0x400, scoped, tag = 'scratch operand']
  #allocation3 [shape = 'f32[2,16]{1,0:T(2,128)}', space=vmem, size = 0x400, scoped, tag = 'scratch operand']
  #allocation4 [shape = 'f32[2,16]{1,0:T(2,128)}', space=vmem, size = 0x400, scoped, tag = 'scratch operand']
  #allocation5 [shape = 'f32[2,16]{1,0:T(2,128)}', space=vmem, size = 0x400, scoped, tag = 'scratch operand']
  %s0 = inlined_call_operand.vmem [shape: f32[8,2,64], index: 0, kind: input, shape index: {}]
  %s1 = inlined_call_operand.vmem [shape: f32[8,2,64], index: 1, kind: input, shape index: {}]
  %s2 = inlined_call_operand.vmem [shape: f32[8,2,1], index: 2, kind: input, shape index: {}, may-alias: {2,3}]
  %s3 = inlined_call_operand.vmem [shape: f32[8,2,1], index: 3, kind: input, shape index: {}, may-alias: {2,3}]
  %s4 = inlined_call_operand.vmem [shape: f32[16,64], index: 4, kind: input, shape index: {}]
  %s5 = inlined_call_operand.vmem [shape: f32[16,64], index: 5, kind: input, shape index: {}]
  %s6 = inlined_call_operand.vmem [shape: f32[8,2,16], index: 6, kind: output, shape index: {0}]
  %s7 = inlined_call_operand.vmem [shape: f32[8,2,16], index: 7, kind: output, shape index: {1}]
  %8 = xla_tuple %s6, %s7
  %s9 = sld [smem:[#allocation0]]
  $region69: #{_lambda_.11} parent=0
    _
  %s11 = ssub.s32 1, %s9
  %s12 = scalar_select 0, %s11, %s9
  loop: start=0, step=1, limit=10
  $region2: #{_lambda_.11} parent=0 // loop_pre_header
    _
  $region3: #{_lambda_.11} parent=0 // loop_header
    %s14 = sphi 0, %s18
    %p15 = scmp.ge.s32.totalorder %s14, 10
    %s24 = sphi 0, %s26
    %s27 = sphi 0, %s24
    %s28 = sphi 0, %s27
    %s44 = sphi 0, %s28
    %s52 = sphi 0, %s54
    %s55 = sphi 0, %s52
    %s56 = sphi 0, %s55
    %s72 = sphi 0, %s56
    %s78 = sphi 0, %s80
    %s81 = sphi 0, %s78
    %s82 = sphi 0, %s81
    %s98 = sphi 0, %s82
    %s106 = sphi 0, %s108
    %s109 = sphi 0, %s106
    %s110 = sphi 0, %s109
    %s126 = sphi 0, %s110
    %s130 = sphi 0, %s130
    %s132 = sphi 0, %s130
    %s133 = sphi 0, %s132
    %s147 = sphi 0, %s133
    %s151 = sphi 0, %s151
    %s153 = sphi 0, %s151
    %s154 = sphi 0, %s153
    %s168 = sphi 0, %s154
    %s174 = sphi 0, %s176
    %s177 = sphi 0, %s174
    %s178 = sphi 0, %s177
    %s194 = sphi 0, %s178
    %s202 = sphi 0, %s204
    %s205 = sphi 0, %s202
    %s206 = sphi 0, %s205
    %s222 = sphi 0, %s206
  $region4: #{_lambda_.11} parent=0 // loop_header_branch
    %17 = sbr.rel (%p15) target = $region8
  $region5: #{_lambda_.11} parent=0 // loop_body
    %s19 = ssub.s32 %s14, 1
    %s20 = ssub.s32 %s14, 2
    %s21 = sadd.s32 %s14, 1
    %s22 = ssub.s32 %s14, %s21
    %p23 = scmp.eq.s32.totalorder %s22, 0
    %s25 = sadd.s32 %s24, 1
    %s26 = scalar_select %p23, %s24, %s25
    %p29 = pneg %p23
    %p30 = scmp.eq.s32.totalorder %s14, 7
    %p31 = por %p29, %p30
    %p32 = scmp.ne.s32.totalorder %s24, %s27
    %p33 = scmp.eq.s32.totalorder %s14, 0
    %p34 = por %p32, %p33
    %p35 = scmp.ne.s32.totalorder %s24, %s27
    %p36 = scmp.eq.s32.totalorder %s19, 7
    %p37 = por %p35, %p36
    %p38 = scmp.ne.s32.totalorder %s27, %s28
    %p39 = scmp.eq.s32.totalorder %s19, 0
    %p40 = por %p38, %p39
    %p41 = scmp.ne.s32.totalorder %s27, %s28
    %p42 = scmp.eq.s32.totalorder %s20, 7
    %p43 = por %p41, %p42
    %p45 = scmp.ne.s32.totalorder %s28, %s44
    %p46 = scmp.eq.s32.totalorder %s20, 0
    %p47 = por %p45, %p46
    %s48 = ssub.s32 7, %s14
    %s49 = ssub.s32 7, %s21
    %s50 = ssub.s32 %s48, %s49
    %p51 = scmp.eq.s32.totalorder %s50, 0
    %s53 = sadd.s32 %s52, 1
    %s54 = scalar_select %p51, %s52, %s53
    %p57 = pneg %p51
    %p58 = scmp.eq.s32.totalorder %s14, 7
    %p59 = por %p57, %p58
    %p60 = scmp.ne.s32.totalorder %s52, %s55
    %p61 = scmp.eq.s32.totalorder %s14, 0
    %p62 = por %p60, %p61
    %p63 = scmp.ne.s32.totalorder %s52, %s55
    %p64 = scmp.eq.s32.totalorder %s19, 7
    %p65 = por %p63, %p64
    %p66 = scmp.ne.s32.totalorder %s55, %s56
    %p67 = scmp.eq.s32.totalorder %s19, 0
    %p68 = por %p66, %p67
    %p69 = scmp.ne.s32.totalorder %s55, %s56
    %p70 = scmp.eq.s32.totalorder %s20, 7
    %p71 = por %p69, %p70
    %p73 = scmp.ne.s32.totalorder %s56, %s72
    %p74 = scmp.eq.s32.totalorder %s20, 0
    %p75 = por %p73, %p74
    %s76 = ssub.s32 %s14, %s21
    %p77 = scmp.eq.s32.totalorder %s76, 0
    %s79 = sadd.s32 %s78, 1
    %s80 = scalar_select %p77, %s78, %s79
    %p83 = pneg %p77
    %p84 = scmp.eq.s32.totalorder %s14, 7
    %p85 = por %p83, %p84
    %p86 = scmp.ne.s32.totalorder %s78, %s81
    %p87 = scmp.eq.s32.totalorder %s14, 0
    %p88 = por %p86, %p87
    %p89 = scmp.ne.s32.totalorder %s78, %s81
    %p90 = scmp.eq.s32.totalorder %s19, 7
    %p91 = por %p89, %p90
    %p92 = scmp.ne.s32.totalorder %s81, %s82
    %p93 = scmp.eq.s32.totalorder %s19, 0
    %p94 = por %p92, %p93
    %p95 = scmp.ne.s32.totalorder %s81, %s82
    %p96 = scmp.eq.s32.totalorder %s20, 7
    %p97 = por %p95, %p96
    %p99 = scmp.ne.s32.totalorder %s82, %s98
    %p100 = scmp.eq.s32.totalorder %s20, 0
    %p101 = por %p99, %p100
    %s102 = ssub.s32 7, %s14
    %s103 = ssub.s32 7, %s21
    %s104 = ssub.s32 %s102, %s103
    %p105 = scmp.eq.s32.totalorder %s104, 0
    %s107 = sadd.s32 %s106, 1
    %s108 = scalar_select %p105, %s106, %s107
    %p111 = pneg %p105
    %p112 = scmp.eq.s32.totalorder %s14, 7
    %p113 = por %p111, %p112
    %p114 = scmp.ne.s32.totalorder %s106, %s109
    %p115 = scmp.eq.s32.totalorder %s14, 0
    %p116 = por %p114, %p115
    %p117 = scmp.ne.s32.totalorder %s106, %s109
    %p118 = scmp.eq.s32.totalorder %s19, 7
    %p119 = por %p117, %p118
    %p120 = scmp.ne.s32.totalorder %s109, %s110
    %p121 = scmp.eq.s32.totalorder %s19, 0
    %p122 = por %p120, %p121
    %p123 = scmp.ne.s32.totalorder %s109, %s110
    %p124 = scmp.eq.s32.totalorder %s20, 7
    %p125 = por %p123, %p124
    %p127 = scmp.ne.s32.totalorder %s110, %s126
    %p128 = scmp.eq.s32.totalorder %s20, 0
    %p129 = por %p127, %p128
    %s131 = sadd.s32 %s130, 1
    %p134 = scmp.eq.s32.totalorder %s14, 7
    %p135 = scmp.ne.s32.totalorder %s130, %s132
    %p136 = scmp.eq.s32.totalorder %s14, 0
    %p137 = por %p135, %p136
    %p138 = scmp.ne.s32.totalorder %s130, %s132
    %p139 = scmp.eq.s32.totalorder %s19, 7
    %p140 = por %p138, %p139
    %p141 = scmp.ne.s32.totalorder %s132, %s133
    %p142 = scmp.eq.s32.totalorder %s19, 0
    %p143 = por %p141, %p142
    %p144 = scmp.ne.s32.totalorder %s132, %s133
    %p145 = scmp.eq.s32.totalorder %s20, 7
    %p146 = por %p144, %p145
    %p148 = scmp.ne.s32.totalorder %s133, %s147
    %p149 = scmp.eq.s32.totalorder %s20, 0
    %p150 = por %p148, %p149
    %s152 = sadd.s32 %s151, 1
    %p155 = scmp.eq.s32.totalorder %s14, 7
    %p156 = scmp.ne.s32.totalorder %s151, %s153
    %p157 = scmp.eq.s32.totalorder %s14, 0
    %p158 = por %p156, %p157
    %p159 = scmp.ne.s32.totalorder %s151, %s153
    %p160 = scmp.eq.s32.totalorder %s19, 7
    %p161 = por %p159, %p160
    %p162 = scmp.ne.s32.totalorder %s153, %s154
    %p163 = scmp.eq.s32.totalorder %s19, 0
    %p164 = por %p162, %p163
    %p165 = scmp.ne.s32.totalorder %s153, %s154
    %p166 = scmp.eq.s32.totalorder %s20, 7
    %p167 = por %p165, %p166
    %p169 = scmp.ne.s32.totalorder %s154, %s168
    %p170 = scmp.eq.s32.totalorder %s20, 0
    %p171 = por %p169, %p170
    %s172 = ssub.s32 %s14, %s21
    %p173 = scmp.eq.s32.totalorder %s172, 0
    %s175 = sadd.s32 %s174, 1
    %s176 = scalar_select %p173, %s174, %s175
    %p179 = pneg %p173
    %p180 = scmp.eq.s32.totalorder %s14, 7
    %p181 = por %p179, %p180
    %p182 = scmp.ne.s32.totalorder %s174, %s177
    %p183 = scmp.eq.s32.totalorder %s14, 0
    %p184 = por %p182, %p183
    %p185 = scmp.ne.s32.totalorder %s174, %s177
    %p186 = scmp.eq.s32.totalorder %s19, 7
    %p187 = por %p185, %p186
    %p188 = scmp.ne.s32.totalorder %s177, %s178
    %p189 = scmp.eq.s32.totalorder %s19, 0
    %p190 = por %p188, %p189
    %p191 = scmp.ne.s32.totalorder %s177, %s178
    %p192 = scmp.eq.s32.totalorder %s20, 7
    %p193 = por %p191, %p192
    %p195 = scmp.ne.s32.totalorder %s178, %s194
    %p196 = scmp.eq.s32.totalorder %s20, 0
    %p197 = por %p195, %p196
    %s198 = ssub.s32 7, %s14
    %s199 = ssub.s32 7, %s21
    %s200 = ssub.s32 %s198, %s199
    %p201 = scmp.eq.s32.totalorder %s200, 0
    %s203 = sadd.s32 %s202, 1
    %s204 = scalar_select %p201, %s202, %s203
    %p207 = pneg %p201
    %p208 = scmp.eq.s32.totalorder %s14, 7
    %p209 = por %p207, %p208
    %p210 = scmp.ne.s32.totalorder %s202, %s205
    %p211 = scmp.eq.s32.totalorder %s14, 0
    %p212 = por %p210, %p211
    %p213 = scmp.ne.s32.totalorder %s202, %s205
    %p214 = scmp.eq.s32.totalorder %s19, 7
    %p215 = por %p213, %p214
    %p216 = scmp.ne.s32.totalorder %s205, %s206
    %p217 = scmp.eq.s32.totalorder %s19, 0
    %p218 = por %p216, %p217
    %p219 = scmp.ne.s32.totalorder %s205, %s206
    %p220 = scmp.eq.s32.totalorder %s20, 7
    %p221 = por %p219, %p220
    %p223 = scmp.ne.s32.totalorder %s206, %s222
    %p224 = scmp.eq.s32.totalorder %s20, 0
    %p225 = por %p223, %p224
    %p226 = scmp.le.s32.totalorder 1, %s14
    %p227 = scmp.lt.s32.totalorder %s14, 9
    %p228 = pnand %p226, %p227
    %p229 = pneg %p228
    // Predicated region
    $region9: #{_lambda_.11} parent=5 // pred_check
      _
    $region10: #{_lambda_.11} parent=5 // pred_check_branch
      %231 = sbr.rel (%p228) target = $region12
    $region11: #{_lambda_.11} parent=5 // pred_region
      %s232 = ssub.s32 %s14, 1
      // Predicated region
      $region13: #{_lambda_.11} parent=11 // pred_check
        %p233 = pneg %p143
      $region14: #{_lambda_.11} parent=11 // pred_check_branch
        %235 = sbr.rel (%p233) target = $region16
      $region15: #{_lambda_.11} parent=11 // pred_region
        _
      $region16: #{_lambda_.11} parent=11 // pred_fallthru
        _
      // Predicated region
      $region17: #{_lambda_.11} parent=11 // pred_check
        %p236 = pneg %p164
      $region18: #{_lambda_.11} parent=11 // pred_check_branch
        %238 = sbr.rel (%p236) target = $region20
      $region19: #{_lambda_.11} parent=11 // pred_region
        _
      $region20: #{_lambda_.11} parent=11 // pred_fallthru
        _
    $region12: #{_lambda_.11} parent=5 // pred_fallthru
      _
    %p239 = scmp.lt.s32.totalorder %s14, 8
    // Predicated region
    $region21: #{_lambda_.11} parent=5 // pred_check
      %p240 = pneg %p239
    $region22: #{_lambda_.11} parent=5 // pred_check_branch
      %242 = sbr.rel (%p240) target = $region24
    $region23: #{_lambda_.11} parent=5 // pred_region
      // Predicated region
      $region25: #{_lambda_.11} parent=23 // pred_check
        %p243 = pneg %p34
      $region26: #{_lambda_.11} parent=23 // pred_check_branch
        %245 = sbr.rel (%p243) target = $region28
      $region27: #{_lambda_.11} parent=23 // pred_region
        %p246 = scmp.lt.s32.totalorder %s14, 7
        %s247 = scalar_select %p246, %s14, 7
        %s248 = smul.addr %s247, 2
        %s249 = scalar_lea.vmem %s0, %s248
      $region28: #{_lambda_.11} parent=23 // pred_fallthru
        _
      // Predicated region
      $region29: #{_lambda_.11} parent=23 // pred_check
        %p250 = pneg %p62
      $region30: #{_lambda_.11} parent=23 // pred_check_branch
        %252 = sbr.rel (%p250) target = $region32
      $region31: #{_lambda_.11} parent=23 // pred_region
        %s253 = ssub.s32 7, %s14
        %p254 = scmp.lt.s32.totalorder %s253, 7
        %s255 = scalar_select %p254, %s253, 7
        %s256 = smul.addr %s255, 2
        %s257 = scalar_lea.vmem %s1, %s256
        %s258 = ssub.s32 7, %s14
      $region32: #{_lambda_.11} parent=23 // pred_fallthru
        _
      // Predicated region
      $region33: #{_lambda_.11} parent=23 // pred_check
        %p259 = pneg %p88
      $region34: #{_lambda_.11} parent=23 // pred_check_branch
        %261 = sbr.rel (%p259) target = $region36
      $region35: #{_lambda_.11} parent=23 // pred_region
        %p262 = scmp.lt.s32.totalorder %s14, 7
        %s263 = scalar_select %p262, %s14, 7
        %s264 = smul.addr %s263, 2
        %s265 = scalar_lea.vmem %s2, %s264
      $region36: #{_lambda_.11} parent=23 // pred_fallthru
        _
      // Predicated region
      $region37: #{_lambda_.11} parent=23 // pred_check
        %p266 = pneg %p116
      $region38: #{_lambda_.11} parent=23 // pred_check_branch
        %268 = sbr.rel (%p266) target = $region40
      $region39: #{_lambda_.11} parent=23 // pred_region
        %s269 = ssub.s32 7, %s14
        %p270 = scmp.lt.s32.totalorder %s269, 7
        %s271 = scalar_select %p270, %s269, 7
        %s272 = smul.addr %s271, 2
        %s273 = scalar_lea.vmem %s3, %s272
        %s274 = ssub.s32 7, %s14
      $region40: #{_lambda_.11} parent=23 // pred_fallthru
        _
    $region24: #{_lambda_.11} parent=5 // pred_fallthru
      _
    %p275 = scmp.le.s32.totalorder 1, %s14
    %p276 = scmp.lt.s32.totalorder %s14, 9
    %p277 = pnand %p275, %p276
    %p278 = pneg %p277
    // Predicated region
    $region41: #{_lambda_.11} parent=5 // pred_check
      _
    $region42: #{_lambda_.11} parent=5 // pred_check_branch
      %280 = sbr.rel (%p277) target = $region44
    $region43: #{_lambda_.11} parent=5 // pred_region
      %s281 = ssub.s32 %s14, 1
      %p282 = scmp.lt.s32.totalorder %s19, 7
      %s283 = scalar_select %p282, %s19, 7
      %s284 = smul.addr %s283, 2
      %s285 = scalar_lea.vmem %s0, %s284
      %p286 = pneg %p40
      %p287 = pneg %p37
      %s288 = ssub.s32 7, %s19
      %p289 = scmp.lt.s32.totalorder %s288, 7
      %s290 = scalar_select %p289, %s288, 7
      %s291 = smul.addr %s290, 2
      %s292 = scalar_lea.vmem %s1, %s291
      %p293 = pneg %p68
      %p294 = pneg %p65
      %p295 = scmp.lt.s32.totalorder %s19, 7
      %s296 = scalar_select %p295, %s19, 7
      %s297 = smul.addr %s296, 2
      %s298 = scalar_lea.vmem %s2, %s297
      %p299 = pneg %p94
      %p300 = pneg %p91
      %s301 = ssub.s32 7, %s19
      %p302 = scmp.lt.s32.totalorder %s301, 7
      %s303 = scalar_select %p302, %s301, 7
      %s304 = smul.addr %s303, 2
      %s305 = scalar_lea.vmem %s3, %s304
      %p306 = pneg %p122
      %p307 = pneg %p119
      %p308 = pneg %p143
      %p309 = pneg %p140
      %p310 = pneg %p164
      %p311 = pneg %p161
      %p312 = pneg %p190
      %p313 = pneg %p187
      %p314 = scmp.lt.s32.totalorder %s19, 7
      %s315 = scalar_select %p314, %s19, 7
      %s316 = smul.addr %s315, 2
      %s317 = scalar_lea.vmem %s6, %s316
      %p318 = pneg %p218
      %p319 = pneg %p215
      %s320 = ssub.s32 7, %s19
      %p321 = scmp.lt.s32.totalorder %s320, 7
      %s322 = scalar_select %p321, %s320, 7
      %s323 = smul.addr %s322, 2
      %s324 = scalar_lea.vmem %s7, %s323
      %p325 = scmp.lt.s32.totalorder %s19, 7
      %s326 = scalar_select %p325, %s19, 7
      %s327 = smul.addr %s326, 2
      %s328 = scalar_lea.vmem %s0, %s327
      %s329 = ssub.s32 7, %s19
      %p330 = scmp.lt.s32.totalorder %s329, 7
      %s331 = scalar_select %p330, %s329, 7
      %s332 = smul.addr %s331, 2
      %s333 = scalar_lea.vmem %s1, %s332
      %s334 = ssub.s32 7, %s19
      %p335 = scmp.lt.s32.totalorder %s19, 7
      %s336 = scalar_select %p335, %s19, 7
      %s337 = smul.addr %s336, 2
      %s338 = scalar_lea.vmem %s2, %s337
      %s339 = ssub.s32 7, %s19
      %p340 = scmp.lt.s32.totalorder %s339, 7
      %s341 = scalar_select %p340, %s339, 7
      %s342 = smul.addr %s341, 2
      %s343 = scalar_lea.vmem %s3, %s342
      %s344 = ssub.s32 7, %s19
      %p345 = scmp.lt.s32.totalorder %s19, 7
      %s346 = scalar_select %p345, %s19, 7
      %s347 = smul.addr %s346, 2
      %s348 = scalar_lea.vmem %s6, %s347
      %s349 = ssub.s32 7, %s19
      %p350 = scmp.lt.s32.totalorder %s349, 7
      %s351 = scalar_select %p350, %s349, 7
      %s352 = smul.addr %s351, 2
      %s353 = scalar_lea.vmem %s7, %s352
      %s354 = ssub.s32 7, %s19
      %p355 = scmp.eq.s32.totalorder %s19, 0
      // Predicated region
      $region45: #{_lambda_.11} parent=43 // pred_check
        %p356 = pneg %p355
      $region46: #{_lambda_.11} parent=43 // pred_check_branch
        %358 = sbr.rel (%p356) target = $region48
      $region47: #{_lambda_.11} parent=43 // pred_region
        %vm359 = vcmask 123904
        %360 = vst.msk [vmem:[#allocation2] sm:$0x3] %vm359, 0.0
        %361 = vst.msk [vmem:[#allocation3] sm:$0x3] %vm359, 0.0
        %362 = vst.msk [vmem:[#allocation4] sm:$0x3] %vm359, 0.0
        %363 = vst.msk [vmem:[#allocation5] sm:$0x3] %vm359, 0.0
      $region48: #{_lambda_.11} parent=43 // pred_fallthru
        _
      %v364 = vld [vmem:[%s338] sm:$0x3]
      %v365 = vld [vmem:[%s328] sm:$0x3]
      %v366 = vld [vmem:[#allocation2] sm:$0x3]
      %v367 = vld [vmem:[#allocation3] sm:$0x3]
      %v368 = vld [vmem:[%s4] sm:$0xff]
      %v369 = vld [vmem:[%s4 + $0x8] sm:$0xff]
      %vm370 = vcmask 130048
      %v372 = vsel %vm370, %v366, 0
      %374 = vmatprep.subr.mxu0 0.0
      %375 = vmatpush1.msra.mxu0 %v368
      %376 = vmatprep.subr.mxu0 0.0
      %377 = vmatpush1.msra.mxu0 %v369
      %378 = vmatprep.subr.mxu0 0.0
      %379 = vmatpush1.msra.mxu0 0.0
      %380 = vmatprep.subr.mxu0 0.0
      %381 = vmatpush1.msra.mxu0 0.0
      %382 = vmatprep.subr.mxu0 0.0
      %383 = vmatpush1.msra.mxu0 0.0
      %384 = vmatprep.subr.mxu0 0.0
      %385 = vmatpush1.msra.mxu0 0.0
      %386 = vmatprep.subr.mxu0 0.0
      %387 = vmatpush1.msra.mxu0 0.0
      %388 = vmatprep.subr.mxu0 0.0
      %389 = vmatpush1.msra.mxu0 0.0
      %390 = vmatprep.subr.mxu0 0.0
      %391 = vmatpush1.msra.mxu0 0.0
      %392 = vmatprep.subr.mxu0 0.0
      %393 = vmatpush1.msra.mxu0 0.0
      %394 = vmatprep.subr.mxu0 0.0
      %395 = vmatpush1.msra.mxu0 0.0
      %396 = vmatprep.subr.mxu0 0.0
      %397 = vmatpush1.msra.mxu0 0.0
      %398 = vmatprep.subr.mxu0 0.0
      %399 = vmatpush1.msra.mxu0 0.0
      %400 = vmatprep.subr.mxu0 0.0
      %401 = vmatpush1.msra.mxu0 0.0
      %402 = vmatprep.subr.mxu0 0.0
      %403 = vmatpush1.msra.mxu0 0.0
      %404 = vmatprep.subr.mxu0 0.0
      %405 = vmatpush1.msra.mxu0 0.0
      %406 = vmatprep.subr.mxu0 0.0
      %407 = vmatpush1.msra.mxu0 0.0
      %408 = vmatprep.subr.mxu0 0.0
      %409 = vmatpush1.msra.mxu0 0.0
      %410 = vmatprep.subr.mxu0 0.0
      %411 = vmatpush1.msra.mxu0 0.0
      %412 = vmatprep.subr.mxu0 0.0
      %413 = vmatpush1.msra.mxu0 0.0
      %414 = vmatprep.subr.mxu0 0.0
      %415 = vmatpush1.msra.mxu0 0.0
      %416 = vmatprep.subr.mxu0 0.0
      %417 = vmatpush1.msra.mxu0 0.0
      %418 = vmatprep.subr.mxu0 0.0
      %419 = vmatpush1.msra.mxu0 0.0
      %420 = vmatprep.subr.mxu0 0.0
      %421 = vmatpush1.msra.mxu0 0.0
      %422 = vmatprep.subr.mxu0 0.0
      %423 = vmatpush1.msra.mxu0 0.0
      %424 = vmatprep.subr.mxu0 0.0
      %425 = vmatpush1.msra.mxu0 0.0
      %426 = vmatprep.subr.mxu0 0.0
      %427 = vmatpush1.msra.mxu0 0.0
      %428 = vmatprep.subr.mxu0 0.0
      %429 = vmatpush1.msra.mxu0 0.0
      %430 = vmatprep.subr.mxu0 0.0
      %431 = vmatpush1.msra.mxu0 0.0
      %432 = vmatprep.subr.mxu0 0.0
      %433 = vmatpush1.msra.mxu0 0.0
      %434 = vmatprep.subr.mxu0 0.0
      %435 = vmatpush1.msra.mxu0 0.0
      %436 = vmatprep.subr.mxu0 0.0
      %437 = vmatpush1.msra.mxu0 0.0
      %438 = vmatprep.mubr.f32.mxu0 0.0
      %439 = vmatmul.mubr.f32.gmra.mrb[0].mxu0 %v372
      %v440 = vpop.f32.mrb[0].mxu0
      %v441 = vadd.f32 0.0, %v440
      %v442 = vpop.f32.mrb[0].mxu0
      %443 = vdwg.mxu0
      %v444 = vadd.f32 %v365, %v441
      %v445 = vxor.u32 %v444, 2147483648
      %v446 = vmul.f32 %v445, 1.442695
      %v447 = vpow.pop %v446
      %v448 = vadd.f32 %v447, 1.0
      %v449 = vrcp.pop %v448
      %v450 = vmul.f32 1.0, %v449
      %v451 = vtanh.pop %v444
      %453 = vrot.lane.b32.xlu0 %v367, 16
      %v454 = vpop.permute.xlu0 %453
      %v456 = vmul.f32 %v450, %v454
      %458 = vrot.lane.b32.xlu0 %v451, 96
      %v459 = vpop.permute.xlu0 %458
      %v461 = vmul.f32 %v450, %v459
      %463 = vrot.lane.b32.xlu0 %v461, 16
      %v464 = vpop.permute.xlu0 %463
      %v466 = vadd.f32 %v456, %v464
      %v467 = vtanh.pop %v466
      %469 = vrot.lane.b32.xlu0 %v467, 32
      %v470 = vpop.permute.xlu0 %469
      %v472 = vmul.f32 %v450, %v470
      %474 = vset.pattern.permute.xlu0 0
      %475 = vperm.xlu0 %474, %v364
      %v476 = vpop.permute.xlu0 %475
      %v478 = vmul.f32 %v476, %v472
      %v479 = vsub.f32 1.0, %v364
      %481 = vset.pattern.permute.xlu0 0
      %482 = vperm.xlu0 %481, %v479
      %v483 = vpop.permute.xlu0 %482
      %v485 = vmul.f32 %v483, %v366
      %487 = vrot.lane.b32.xlu0 %v485, 48
      %v488 = vpop.permute.xlu0 %487
      %v490 = vadd.f32 %v478, %v488
      %492 = vrot.lane.b32.xlu0 %v490, 80
      %v493 = vpop.permute.xlu0 %492
      %vm495 = vcmask 123904
      %496 = vst.msk [vmem:[#allocation2] sm:$0x3] %vm495, %v493
      %v497 = vmul.f32 %v476, %v466
      %v498 = vld [vmem:[#allocation3] sm:$0x3]
      %v499 = vmul.f32 %v483, %v498
      %501 = vrot.lane.b32.xlu0 %v499, 16
      %v502 = vpop.permute.xlu0 %501
      %v504 = vadd.f32 %v497, %v502
      %506 = vrot.lane.b32.xlu0 %v504, 112
      %v507 = vpop.permute.xlu0 %506
      %509 = vst.msk [vmem:[#allocation3] sm:$0x3] %vm495, %v507
      %v510 = vld [vmem:[#allocation2] sm:$0x3]
      %511 = vst.msk [vmem:[%s348] sm:$0x3] %vm495, %v510
      %v512 = vld [vmem:[%s343] sm:$0x3]
      %v513 = vld [vmem:[%s333] sm:$0x3]
      %v514 = vld [vmem:[#allocation4] sm:$0x3]
      %v515 = vld [vmem:[#allocation5] sm:$0x3]
      %v516 = vld [vmem:[%s5] sm:$0xff]
      %v517 = vld [vmem:[%s5 + $0x8] sm:$0xff]
      %v519 = vsel %vm370, %v514, 0
      %521 = vmatprep.subr.mxu0 0.0
      %522 = vmatpush1.msra.mxu0 %v516
      %523 = vmatprep.subr.mxu0 0.0
      %524 = vmatpush1.msra.mxu0 %v517
      %525 = vmatprep.subr.mxu0 0.0
      %526 = vmatpush1.msra.mxu0 0.0
      %527 = vmatprep.subr.mxu0 0.0
      %528 = vmatpush1.msra.mxu0 0.0
      %529 = vmatprep.subr.mxu0 0.0
      %530 = vmatpush1.msra.mxu0 0.0
      %531 = vmatprep.subr.mxu0 0.0
      %532 = vmatpush1.msra.mxu0 0.0
      %533 = vmatprep.subr.mxu0 0.0
      %534 = vmatpush1.msra.mxu0 0.0
      %535 = vmatprep.subr.mxu0 0.0
      %536 = vmatpush1.msra.mxu0 0.0
      %537 = vmatprep.subr.mxu0 0.0
      %538 = vmatpush1.msra.mxu0 0.0
      %539 = vmatprep.subr.mxu0 0.0
      %540 = vmatpush1.msra.mxu0 0.0
      %541 = vmatprep.subr.mxu0 0.0
      %542 = vmatpush1.msra.mxu0 0.0
      %543 = vmatprep.subr.mxu0 0.0
      %544 = vmatpush1.msra.mxu0 0.0
      %545 = vmatprep.subr.mxu0 0.0
      %546 = vmatpush1.msra.mxu0 0.0
      %547 = vmatprep.subr.mxu0 0.0
      %548 = vmatpush1.msra.mxu0 0.0
      %549 = vmatprep.subr.mxu0 0.0
      %550 = vmatpush1.msra.mxu0 0.0
      %551 = vmatprep.subr.mxu0 0.0
      %552 = vmatpush1.msra.mxu0 0.0
      %553 = vmatprep.subr.mxu0 0.0
      %554 = vmatpush1.msra.mxu0 0.0
      %555 = vmatprep.subr.mxu0 0.0
      %556 = vmatpush1.msra.mxu0 0.0
      %557 = vmatprep.subr.mxu0 0.0
      %558 = vmatpush1.msra.mxu0 0.0
      %559 = vmatprep.subr.mxu0 0.0
      %560 = vmatpush1.msra.mxu0 0.0
      %561 = vmatprep.subr.mxu0 0.0
      %562 = vmatpush1.msra.mxu0 0.0
      %563 = vmatprep.subr.mxu0 0.0
      %564 = vmatpush1.msra.mxu0 0.0
      %565 = vmatprep.subr.mxu0 0.0
      %566 = vmatpush1.msra.mxu0 0.0
      %567 = vmatprep.subr.mxu0 0.0
      %568 = vmatpush1.msra.mxu0 0.0
      %569 = vmatprep.subr.mxu0 0.0
      %570 = vmatpush1.msra.mxu0 0.0
      %571 = vmatprep.subr.mxu0 0.0
      %572 = vmatpush1.msra.mxu0 0.0
      %573 = vmatprep.subr.mxu0 0.0
      %574 = vmatpush1.msra.mxu0 0.0
      %575 = vmatprep.subr.mxu0 0.0
      %576 = vmatpush1.msra.mxu0 0.0
      %577 = vmatprep.subr.mxu0 0.0
      %578 = vmatpush1.msra.mxu0 0.0
      %579 = vmatprep.subr.mxu0 0.0
      %580 = vmatpush1.msra.mxu0 0.0
      %581 = vmatprep.subr.mxu0 0.0
      %582 = vmatpush1.msra.mxu0 0.0
      %583 = vmatprep.subr.mxu0 0.0
      %584 = vmatpush1.msra.mxu0 0.0
      %585 = vmatprep.mubr.f32.mxu0 0.0
      %586 = vmatmul.mubr.f32.gmra.mrb[0].mxu0 %v519
      %v587 = vpop.f32.mrb[0].mxu0
      %v588 = vadd.f32 0.0, %v587
      %v589 = vpop.f32.mrb[0].mxu0
      %590 = vdwg.mxu0
      %v591 = vadd.f32 %v513, %v588
      %v592 = vxor.u32 %v591, 2147483648
      %v593 = vmul.f32 %v592, 1.442695
      %v594 = vpow.pop %v593
      %v595 = vadd.f32 %v594, 1.0
      %v596 = vrcp.pop %v595
      %v597 = vmul.f32 1.0, %v596
      %v598 = vtanh.pop %v591
      %600 = vrot.lane.b32.xlu0 %v515, 16
      %v601 = vpop.permute.xlu0 %600
      %v603 = vmul.f32 %v597, %v601
      %605 = vrot.lane.b32.xlu0 %v598, 96
      %v606 = vpop.permute.xlu0 %605
      %v608 = vmul.f32 %v597, %v606
      %610 = vrot.lane.b32.xlu0 %v608, 16
      %v611 = vpop.permute.xlu0 %610
      %v613 = vadd.f32 %v603, %v611
      %v614 = vtanh.pop %v613
      %616 = vrot.lane.b32.xlu0 %v614, 32
      %v617 = vpop.permute.xlu0 %616
      %v619 = vmul.f32 %v597, %v617
      %621 = vset.pattern.permute.xlu0 0
      %622 = vperm.xlu0 %621, %v512
      %v623 = vpop.permute.xlu0 %622
      %v625 = vmul.f32 %v623, %v619
      %v626 = vsub.f32 1.0, %v512
      %628 = vset.pattern.permute.xlu0 0
      %629 = vperm.xlu0 %628, %v626
      %v630 = vpop.permute.xlu0 %629
      %v632 = vmul.f32 %v630, %v514
      %634 = vrot.lane.b32.xlu0 %v632, 48
      %v635 = vpop.permute.xlu0 %634
      %v637 = vadd.f32 %v625, %v635
      %639 = vrot.lane.b32.xlu0 %v637, 80
      %v640 = vpop.permute.xlu0 %639
      %642 = vst.msk [vmem:[#allocation4] sm:$0x3] %vm495, %v640
      %v643 = vmul.f32 %v623, %v613
      %v644 = vld [vmem:[#allocation5] sm:$0x3]
      %v645 = vmul.f32 %v630, %v644
      %647 = vrot.lane.b32.xlu0 %v645, 16
      %v648 = vpop.permute.xlu0 %647
      %v650 = vadd.f32 %v643, %v648
      %652 = vrot.lane.b32.xlu0 %v650, 112
      %v653 = vpop.permute.xlu0 %652
      %655 = vst.msk [vmem:[#allocation5] sm:$0x3] %vm495, %v653
      %v656 = vld [vmem:[#allocation4] sm:$0x3]
      %657 = vst.msk [vmem:[%s353] sm:$0x3] %vm495, %v656
      %p658 = scmp.lt.s32.totalorder %s19, 7
      %s659 = scalar_select %p658, %s19, 7
      %s660 = smul.addr %s659, 2
      %s661 = scalar_lea.vmem %s6, %s660
      %s662 = ssub.s32 7, %s19
      %p663 = scmp.lt.s32.totalorder %s662, 7
      %s664 = scalar_select %p663, %s662, 7
      %s665 = smul.addr %s664, 2
      %s666 = scalar_lea.vmem %s7, %s665
      // Predicated region
      $region49: #{_lambda_.11} parent=43 // pred_check
        %p667 = pneg %p187
      $region50: #{_lambda_.11} parent=43 // pred_check_branch
        %669 = sbr.rel (%p667) target = $region52
      $region51: #{_lambda_.11} parent=43 // pred_region
        _
      $region52: #{_lambda_.11} parent=43 // pred_fallthru
        _
      // Predicated region
      $region53: #{_lambda_.11} parent=43 // pred_check
        %p670 = pneg %p215
      $region54: #{_lambda_.11} parent=43 // pred_check_branch
        %672 = sbr.rel (%p670) target = $region56
      $region55: #{_lambda_.11} parent=43 // pred_region
        %s673 = ssub.s32 7, %s19
      $region56: #{_lambda_.11} parent=43 // pred_fallthru
        _
    $region44: #{_lambda_.11} parent=5 // pred_fallthru
      _
    %p674 = scmp.le.s32.totalorder 2, %s14
    // Predicated region
    $region57: #{_lambda_.11} parent=5 // pred_check
      %p675 = pneg %p674
    $region58: #{_lambda_.11} parent=5 // pred_check_branch
      %677 = sbr.rel (%p675) target = $region60
    $region59: #{_lambda_.11} parent=5 // pred_region
      %s678 = ssub.s32 %s14, 2
      // Predicated region
      $region61: #{_lambda_.11} parent=59 // pred_check
        %p679 = pneg %p193
      $region62: #{_lambda_.11} parent=59 // pred_check_branch
        %681 = sbr.rel (%p679) target = $region64
      $region63: #{_lambda_.11} parent=59 // pred_region
        %p682 = scmp.lt.s32.totalorder %s20, 7
        %s683 = scalar_select %p682, %s20, 7
        %s684 = smul.addr %s683, 2
        %s685 = scalar_lea.vmem %s6, %s684
      $region64: #{_lambda_.11} parent=59 // pred_fallthru
        _
      // Predicated region
      $region65: #{_lambda_.11} parent=59 // pred_check
        %p686 = pneg %p221
      $region66: #{_lambda_.11} parent=59 // pred_check_branch
        %688 = sbr.rel (%p686) target = $region68
      $region67: #{_lambda_.11} parent=59 // pred_region
        %s689 = ssub.s32 7, %s20
        %p690 = scmp.lt.s32.totalorder %s689, 7
        %s691 = scalar_select %p690, %s689, 7
        %s692 = smul.addr %s691, 2
        %s693 = scalar_lea.vmem %s7, %s692
      $region68: #{_lambda_.11} parent=59 // pred_fallthru
        _
    $region60: #{_lambda_.11} parent=5 // pred_fallthru
      _
  $region6: #{_lambda_.11} parent=0 // loop_footer
    %s18 = sadd.s32 1, %s14
  $region7: #{_lambda_.11} parent=0 // loop_footer_branch
    %13 = sbr.rel target = $region3
  $region8: #{_lambda_.11} parent=0 // loop_exit
    _

// kernel: _lambda_.13
$region0: #{_lambda_.13}
  #allocation0 [shape = 'u32[]', space=smem, size = 0x4, offset = 0x4, fixed_abs, tag = 'smem constant byte address 0x4 - core index']
  #allocation1 [shape = 'u32[144,128]{1,0:T(1,128)}', space=vmem, size = 0x12000, scoped, tag = 'internal scratch']
  %s0 = inlined_call_operand.vmem [shape: bf16[16,32], index: 0, kind: input, shape index: {}]
  %s1 = inlined_call_operand.vmem [shape: bf16[32,192], index: 1, kind: input, shape index: {}]
  %s2 = inlined_call_operand.vmem [shape: f32[1,192], index: 2, kind: input, shape index: {}]
  %s3 = inlined_call_operand.vmem [shape: f32[16,64], index: 3, kind: output, shape index: {0}]
  %s4 = inlined_call_operand.vmem [shape: f32[16,64], index: 4, kind: output, shape index: {1}]
  %s5 = inlined_call_operand.vmem [shape: f32[16,64], index: 5, kind: output, shape index: {2}]
  %6 = xla_tuple %s3, %s4, %s5
  %s7 = sld [smem:[#allocation0]]
  $region38: #{_lambda_.13} parent=0
    _
  %s9 = ssub.s32 1, %s7
  %s10 = scalar_select 0, %s9, %s7
  // Predicated region
  $region2: #{_lambda_.13} parent=0 // pred_check
    _
  $region3: #{_lambda_.13} parent=0 // pred_check_branch
    %12 = sbr.rel (0) target = $region5
  $region4: #{_lambda_.13} parent=0 // pred_region
    _
  $region5: #{_lambda_.13} parent=0 // pred_fallthru
    _
  // Predicated region
  $region6: #{_lambda_.13} parent=0 // pred_check
    _
  $region7: #{_lambda_.13} parent=0 // pred_check_branch
    %14 = sbr.rel (0) target = $region9
  $region8: #{_lambda_.13} parent=0 // pred_region
    _
  $region9: #{_lambda_.13} parent=0 // pred_fallthru
    _
  // Predicated region
  $region10: #{_lambda_.13} parent=0 // pred_check
    _
  $region11: #{_lambda_.13} parent=0 // pred_check_branch
    %16 = sbr.rel (0) target = $region13
  $region12: #{_lambda_.13} parent=0 // pred_region
    _
  $region13: #{_lambda_.13} parent=0 // pred_fallthru
    _
  %v18 = vld [vmem:[%s0] sm:$0xf]
  %v19 = vld [vmem:[%s0 + $0x4] sm:$0xf]
  %v20 = vld [vmem:[%s1] sm:$0xff]
  %v21 = vld [vmem:[%s1 + $0x8] sm:$0xff]
  %v22 = vld [vmem:[%s1 + $0x10] sm:$0xff]
  %v23 = vld [vmem:[%s1 + $0x18] sm:$0xff]
  %v24 = vld [vmem:[%s2] sm:$0x3]
  %v26 = vlaneseq
  %v27 = vshrl.u32 %v26, 7
  %v28 = vsub.s32 0, %v27
  %v29 = vrot.slane %v24, %v28
  %v30 = vlaneseq
  %v31 = vshrl.u32 %v30, 7
  %v32 = vsub.s32 1, %v31
  %v33 = vrot.slane %v24, %v32
  %v38 = vunpack.c.l.b16 %v18
  %v39 = vunpack.c.l.b16 %v19
  %v40 = vpack.c.b16 %v39, %v38
  %v45 = vunpack.c.l.b16 %v20
  %v46 = vunpack.c.h.b16 %v20
  %v47 = vunpack.c.l.b16 %v21
  %v48 = vunpack.c.h.b16 %v21
  %v49 = vunpack.c.l.b16 %v22
  %v50 = vunpack.c.h.b16 %v22
  %v51 = vunpack.c.l.b16 %v23
  %v52 = vunpack.c.h.b16 %v23
  %v53 = vpack.c.b16 %v47, %v45
  %v54 = vpack.c.b16 %v48, %v46
  %v55 = vpack.c.b16 %v51, %v49
  %v56 = vpack.c.b16 %v52, %v50
  %vm61 = vcmask 261120
  %v63 = vsel %vm61, %v40, 0
  %65 = vmatprep.subr.bf16.mxu0 %v54
  %66 = vmatpush1.bf16.msra.mxu0 %v53
  %67 = vmatprep.subr.bf16.mxu0 %v56
  %68 = vmatpush1.bf16.msra.mxu0 %v55
  %69 = vmatprep.subr.bf16.mxu0 0
  %70 = vmatpush1.bf16.msra.mxu0 0
  %71 = vmatprep.subr.bf16.mxu0 0
  %72 = vmatpush1.bf16.msra.mxu0 0
  %73 = vmatprep.subr.bf16.mxu0 0
  %74 = vmatpush1.bf16.msra.mxu0 0
  %75 = vmatprep.subr.bf16.mxu0 0
  %76 = vmatpush1.bf16.msra.mxu0 0
  %77 = vmatprep.subr.bf16.mxu0 0
  %78 = vmatpush1.bf16.msra.mxu0 0
  %79 = vmatprep.subr.bf16.mxu0 0
  %80 = vmatpush1.bf16.msra.mxu0 0
  %81 = vmatprep.subr.bf16.mxu0 0
  %82 = vmatpush1.bf16.msra.mxu0 0
  %83 = vmatprep.subr.bf16.mxu0 0
  %84 = vmatpush1.bf16.msra.mxu0 0
  %85 = vmatprep.subr.bf16.mxu0 0
  %86 = vmatpush1.bf16.msra.mxu0 0
  %87 = vmatprep.subr.bf16.mxu0 0
  %88 = vmatpush1.bf16.msra.mxu0 0
  %89 = vmatprep.subr.bf16.mxu0 0
  %90 = vmatpush1.bf16.msra.mxu0 0
  %91 = vmatprep.subr.bf16.mxu0 0
  %92 = vmatpush1.bf16.msra.mxu0 0
  %93 = vmatprep.subr.bf16.mxu0 0
  %94 = vmatpush1.bf16.msra.mxu0 0
  %95 = vmatprep.subr.bf16.mxu0 0
  %96 = vmatpush1.bf16.msra.mxu0 0
  %97 = vmatprep.mubr.bf16.mxu0 0
  %98 = vmatmul.mubr.bf16.gmra.mrb[0].mxu0 %v63
  %v99 = vpop.f32.mrb[0].mxu0
  %v100 = vadd.f32 %v29, %v99
  %v101 = vpop.f32.mrb[0].mxu0
  %v102 = vadd.f32 %v33, %v101
  %v103 = vpop.f32.mrb[0].mxu0
  %v104 = vadd.f32 %v29, %v103
  %v105 = vpop.f32.mrb[0].mxu0
  %v106 = vadd.f32 %v33, %v105
  %107 = vdwg.mxu0
  %vm108 = vcmask 523264
  %109 = vst.msk [vmem:[%s3] sm:$0xff] %vm108, %v100
  %110 = vst.msk [vmem:[%s3 + $0x8] sm:$0xff] %vm108, %v104
  %113 = vrot.lane.b32.xlu0 %v100, 64
  %v114 = vpop.permute.xlu0 %113
  %115 = vrot.lane.b32.xlu0 %v104, 64
  %v116 = vpop.permute.xlu0 %115
  %119 = vst.msk [vmem:[%s4] sm:$0xff] %vm108, %v114
  %120 = vst.msk [vmem:[%s4 + $0x8] sm:$0xff] %vm108, %v116
  %121 = vst.msk [vmem:[%s5] sm:$0xff] %vm108, %v102
  %122 = vst.msk [vmem:[%s5 + $0x8] sm:$0xff] %vm108, %v106
  // Predicated region
  $region14: #{_lambda_.13} parent=0 // pred_check
    _
  $region15: #{_lambda_.13} parent=0 // pred_check_branch
    %124 = sbr.rel (0) target = $region17
  $region16: #{_lambda_.13} parent=0 // pred_region
    _
  $region17: #{_lambda_.13} parent=0 // pred_fallthru
    _
  // Predicated region
  $region18: #{_lambda_.13} parent=0 // pred_check
    _
  $region19: #{_lambda_.13} parent=0 // pred_check_branch
    %126 = sbr.rel (0) target = $region21
  $region20: #{_lambda_.13} parent=0 // pred_region
    _
  $region21: #{_lambda_.13} parent=0 // pred_fallthru
    _
  // Predicated region
  $region22: #{_lambda_.13} parent=0 // pred_check
    _
  $region23: #{_lambda_.13} parent=0 // pred_check_branch
    %128 = sbr.rel (0) target = $region25
  $region24: #{_lambda_.13} parent=0 // pred_region
    _
  $region25: #{_lambda_.13} parent=0 // pred_fallthru
    _
  // Predicated region
  $region26: #{_lambda_.13} parent=0 // pred_check
    _
  $region27: #{_lambda_.13} parent=0 // pred_check_branch
    %130 = sbr.rel (0) target = $region29
  $region28: #{_lambda_.13} parent=0 // pred_region
    _
  $region29: #{_lambda_.13} parent=0 // pred_fallthru
    _
  // Predicated region
  $region30: #{_lambda_.13} parent=0 // pred_check
    _
  $region31: #{_lambda_.13} parent=0 // pred_check_branch
    %132 = sbr.rel (0) target = $region33
  $region32: #{_lambda_.13} parent=0 // pred_region
    _
  $region33: #{_lambda_.13} parent=0 // pred_fallthru
    _
  // Predicated region
  $region34: #{_lambda_.13} parent=0 // pred_check
    _
  $region35: #{_lambda_.13} parent=0 // pred_check_branch
    %134 = sbr.rel (0) target = $region37
  $region36: #{_lambda_.13} parent=0 // pred_region
    _
  $region37: #{_lambda_.13} parent=0 // pred_fallthru
    _

// kernel: _lambda_.16
$region0: #{_lambda_.16}
  #allocation0 [shape = 'u32[]', space=smem, size = 0x4, offset = 0x4, fixed_abs, tag = 'smem constant byte address 0x4 - core index']
  #allocation1 [shape = 'u32[144,128]{1,0:T(1,128)}', space=vmem, size = 0x12000, scoped, tag = 'internal scratch']
  %s0 = inlined_call_operand.vmem [shape: bf16[16,32], index: 0, kind: input, shape index: {}]
  %s1 = inlined_call_operand.vmem [shape: bf16[32,32], index: 1, kind: input, shape index: {}]
  %s2 = inlined_call_operand.vmem [shape: f32[1,32], index: 2, kind: input, shape index: {}]
  %s3 = inlined_call_operand.vmem [shape: bf16[16,32], index: 3, kind: output, shape index: {}]
  %s4 = sld [smem:[#allocation0]]
  $region22: #{_lambda_.16} parent=0
    _
  %s6 = ssub.s32 1, %s4
  %s7 = scalar_select 0, %s6, %s4
  // Predicated region
  $region2: #{_lambda_.16} parent=0 // pred_check
    _
  $region3: #{_lambda_.16} parent=0 // pred_check_branch
    %9 = sbr.rel (0) target = $region5
  $region4: #{_lambda_.16} parent=0 // pred_region
    _
  $region5: #{_lambda_.16} parent=0 // pred_fallthru
    _
  // Predicated region
  $region6: #{_lambda_.16} parent=0 // pred_check
    _
  $region7: #{_lambda_.16} parent=0 // pred_check_branch
    %11 = sbr.rel (0) target = $region9
  $region8: #{_lambda_.16} parent=0 // pred_region
    _
  $region9: #{_lambda_.16} parent=0 // pred_fallthru
    _
  // Predicated region
  $region10: #{_lambda_.16} parent=0 // pred_check
    _
  $region11: #{_lambda_.16} parent=0 // pred_check_branch
    %13 = sbr.rel (0) target = $region13
  $region12: #{_lambda_.16} parent=0 // pred_region
    _
  $region13: #{_lambda_.16} parent=0 // pred_fallthru
    _
  %v15 = vld [vmem:[%s0] sm:$0xf]
  %v16 = vld [vmem:[%s0 + $0x4] sm:$0xf]
  %v17 = vld [vmem:[%s1] sm:$0xf]
  %v18 = vld [vmem:[%s1 + $0x4] sm:$0xf]
  %v19 = vld [vmem:[%s1 + $0x8] sm:$0xf]
  %v20 = vld [vmem:[%s1 + $0xc] sm:$0xf]
  %v21 = vld [vmem:[%s2] sm:$0x1]
  %v23 = vlaneseq
  %v24 = vshrl.u32 %v23, 7
  %v25 = vsub.s32 0, %v24
  %v26 = vrot.slane %v21, %v25
  %v30 = vunpack.c.l.b16 %v15
  %v31 = vunpack.c.l.b16 %v16
  %v32 = vpack.c.b16 %v31, %v30
  %v37 = vunpack.c.l.b16 %v17
  %v38 = vunpack.c.l.b16 %v18
  %v39 = vunpack.c.l.b16 %v19
  %v40 = vunpack.c.l.b16 %v20
  %v41 = vpack.c.b16 %v38, %v37
  %v42 = vpack.c.b16 %v40, %v39
  %vm45 = vcmask 261120
  %v47 = vsel %vm45, %v32, 0
  %49 = vmatprep.subr.bf16.mxu0 0
  %50 = vmatpush1.bf16.msra.mxu0 %v41
  %51 = vmatprep.subr.bf16.mxu0 0
  %52 = vmatpush1.bf16.msra.mxu0 %v42
  %53 = vmatprep.subr.bf16.mxu0 0
  %54 = vmatpush1.bf16.msra.mxu0 0
  %55 = vmatprep.subr.bf16.mxu0 0
  %56 = vmatpush1.bf16.msra.mxu0 0
  %57 = vmatprep.subr.bf16.mxu0 0
  %58 = vmatpush1.bf16.msra.mxu0 0
  %59 = vmatprep.subr.bf16.mxu0 0
  %60 = vmatpush1.bf16.msra.mxu0 0
  %61 = vmatprep.subr.bf16.mxu0 0
  %62 = vmatpush1.bf16.msra.mxu0 0
  %63 = vmatprep.subr.bf16.mxu0 0
  %64 = vmatpush1.bf16.msra.mxu0 0
  %65 = vmatprep.subr.bf16.mxu0 0
  %66 = vmatpush1.bf16.msra.mxu0 0
  %67 = vmatprep.subr.bf16.mxu0 0
  %68 = vmatpush1.bf16.msra.mxu0 0
  %69 = vmatprep.subr.bf16.mxu0 0
  %70 = vmatpush1.bf16.msra.mxu0 0
  %71 = vmatprep.subr.bf16.mxu0 0
  %72 = vmatpush1.bf16.msra.mxu0 0
  %73 = vmatprep.subr.bf16.mxu0 0
  %74 = vmatpush1.bf16.msra.mxu0 0
  %75 = vmatprep.subr.bf16.mxu0 0
  %76 = vmatpush1.bf16.msra.mxu0 0
  %77 = vmatprep.subr.bf16.mxu0 0
  %78 = vmatpush1.bf16.msra.mxu0 0
  %79 = vmatprep.subr.bf16.mxu0 0
  %80 = vmatpush1.bf16.msra.mxu0 0
  %81 = vmatprep.mubr.bf16.mxu0 0
  %82 = vmatmul.mubr.bf16.gmra.mrb[0].mxu0 %v47
  %v83 = vpop.f32.mrb[0].mxu0
  %v84 = vadd.f32 %v26, %v83
  %v85 = vpop.f32.mrb[0].mxu0
  %v86 = vpop.f32.mrb[0].mxu0
  %v87 = vadd.f32 %v26, %v86
  %v88 = vpop.f32.mrb[0].mxu0
  %89 = vdwg.mxu0
  %v90 = vmax.f32 %v84, 0.0
  %v91 = vmax.f32 %v87, 0.0
  %v92 = vpack.c.bf16 %v91, %v90
  %v94 = vunpack.c.l.b16 %v92
  %v95 = vunpack.c.h.b16 %v92
  %v96 = vpack.c.b16 %v94, %v94
  %v97 = vpack.c.b16 %v95, %v95
  %vm100 = vcmask 257024
  %101 = vst.msk [vmem:[%s3] sm:$0xf] %vm100, %v96
  %102 = vst.msk [vmem:[%s3 + $0x4] sm:$0xf] %vm100, %v97
  // Predicated region
  $region14: #{_lambda_.16} parent=0 // pred_check
    _
  $region15: #{_lambda_.16} parent=0 // pred_check_branch
    %104 = sbr.rel (0) target = $region17
  $region16: #{_lambda_.16} parent=0 // pred_region
    _
  $region17: #{_lambda_.16} parent=0 // pred_fallthru
    _
  // Predicated region
  $region18: #{_lambda_.16} parent=0 // pred_check
    _
  $region19: #{_lambda_.16} parent=0 // pred_check_branch
    %106 = sbr.rel (0) target = $region21
  $region20: #{_lambda_.16} parent=0 // pred_region
    _
  $region21: #{_lambda_.16} parent=0 // pred_fallthru
    _

// kernel: _lambda_.17
$region0: #{_lambda_.17}
  #allocation0 [shape = 'u32[]', space=smem, size = 0x4, offset = 0x4, fixed_abs, tag = 'smem constant byte address 0x4 - core index']
  #allocation1 [shape = 'u32[144,128]{1,0:T(1,128)}', space=vmem, size = 0x12000, scoped, tag = 'internal scratch']
  %s0 = inlined_call_operand.vmem [shape: bf16[16,32], index: 0, kind: input, shape index: {}]
  %s1 = inlined_call_operand.vmem [shape: bf16[32,128], index: 1, kind: input, shape index: {}]
  %s2 = inlined_call_operand.vmem [shape: f32[1,128], index: 2, kind: input, shape index: {}]
  %s3 = inlined_call_operand.vmem [shape: s32[16,5], index: 3, kind: input, shape index: {}]
  %s4 = inlined_call_operand.vmem [shape: f32[16,128], index: 4, kind: output, shape index: {0}]
  %s5 = inlined_call_operand.vmem [shape: f32[8,128], index: 5, kind: output, shape index: {1}]
  %6 = xla_tuple %s4, %s5
  %s7 = sld [smem:[#allocation0]]
  $region34: #{_lambda_.17} parent=0
    _
  %s9 = ssub.s32 1, %s7
  %s10 = scalar_select 0, %s9, %s7
  // Predicated region
  $region2: #{_lambda_.17} parent=0 // pred_check
    _
  $region3: #{_lambda_.17} parent=0 // pred_check_branch
    %12 = sbr.rel (0) target = $region5
  $region4: #{_lambda_.17} parent=0 // pred_region
    _
  $region5: #{_lambda_.17} parent=0 // pred_fallthru
    _
  // Predicated region
  $region6: #{_lambda_.17} parent=0 // pred_check
    _
  $region7: #{_lambda_.17} parent=0 // pred_check_branch
    %14 = sbr.rel (0) target = $region9
  $region8: #{_lambda_.17} parent=0 // pred_region
    _
  $region9: #{_lambda_.17} parent=0 // pred_fallthru
    _
  // Predicated region
  $region10: #{_lambda_.17} parent=0 // pred_check
    _
  $region11: #{_lambda_.17} parent=0 // pred_check_branch
    %16 = sbr.rel (0) target = $region13
  $region12: #{_lambda_.17} parent=0 // pred_region
    _
  $region13: #{_lambda_.17} parent=0 // pred_fallthru
    _
  // Predicated region
  $region14: #{_lambda_.17} parent=0 // pred_check
    _
  $region15: #{_lambda_.17} parent=0 // pred_check_branch
    %18 = sbr.rel (0) target = $region17
  $region16: #{_lambda_.17} parent=0 // pred_region
    _
  $region17: #{_lambda_.17} parent=0 // pred_fallthru
    _
  %v20 = vld [vmem:[%s0] sm:$0xf]
  %v21 = vld [vmem:[%s0 + $0x4] sm:$0xf]
  %v22 = vld [vmem:[%s1] sm:$0xf]
  %v23 = vld [vmem:[%s1 + $0x4] sm:$0xf]
  %v24 = vld [vmem:[%s1 + $0x8] sm:$0xf]
  %v25 = vld [vmem:[%s1 + $0xc] sm:$0xf]
  %v26 = vld [vmem:[%s2] sm:$0x1]
  %v28 = vlaneseq
  %v29 = vshrl.u32 %v28, 7
  %v30 = vsub.s32 0, %v29
  %v31 = vrot.slane %v26, %v30
  %v35 = vunpack.c.l.b16 %v20
  %v36 = vunpack.c.l.b16 %v21
  %v37 = vpack.c.b16 %v36, %v35
  %v42 = vunpack.c.l.b16 %v22
  %v43 = vunpack.c.l.b16 %v23
  %v44 = vunpack.c.l.b16 %v24
  %v45 = vunpack.c.l.b16 %v25
  %v46 = vpack.c.b16 %v43, %v42
  %v47 = vpack.c.b16 %v45, %v44
  %vm50 = vcmask 261120
  %v52 = vsel %vm50, %v37, 0
  %54 = vmatprep.subr.bf16.mxu0 0
  %55 = vmatpush1.bf16.msra.mxu0 %v46
  %56 = vmatprep.subr.bf16.mxu0 0
  %57 = vmatpush1.bf16.msra.mxu0 %v47
  %58 = vmatprep.subr.bf16.mxu0 0
  %59 = vmatpush1.bf16.msra.mxu0 0
  %60 = vmatprep.subr.bf16.mxu0 0
  %61 = vmatpush1.bf16.msra.mxu0 0
  %62 = vmatprep.subr.bf16.mxu0 0
  %63 = vmatpush1.bf16.msra.mxu0 0
  %64 = vmatprep.subr.bf16.mxu0 0
  %65 = vmatpush1.bf16.msra.mxu0 0
  %66 = vmatprep.subr.bf16.mxu0 0
  %67 = vmatpush1.bf16.msra.mxu0 0
  %68 = vmatprep.subr.bf16.mxu0 0
  %69 = vmatpush1.bf16.msra.mxu0 0
  %70 = vmatprep.subr.bf16.mxu0 0
  %71 = vmatpush1.bf16.msra.mxu0 0
  %72 = vmatprep.subr.bf16.mxu0 0
  %73 = vmatpush1.bf16.msra.mxu0 0
  %74 = vmatprep.subr.bf16.mxu0 0
  %75 = vmatpush1.bf16.msra.mxu0 0
  %76 = vmatprep.subr.bf16.mxu0 0
  %77 = vmatpush1.bf16.msra.mxu0 0
  %78 = vmatprep.subr.bf16.mxu0 0
  %79 = vmatpush1.bf16.msra.mxu0 0
  %80 = vmatprep.subr.bf16.mxu0 0
  %81 = vmatpush1.bf16.msra.mxu0 0
  %82 = vmatprep.subr.bf16.mxu0 0
  %83 = vmatpush1.bf16.msra.mxu0 0
  %84 = vmatprep.subr.bf16.mxu0 0
  %85 = vmatpush1.bf16.msra.mxu0 0
  %86 = vmatprep.mubr.bf16.mxu0 0
  %87 = vmatmul.mubr.bf16.gmra.mrb[0].mxu0 %v52
  %v88 = vpop.f32.mrb[0].mxu0
  %v89 = vadd.f32 %v31, %v88
  %v90 = vpop.f32.mrb[0].mxu0
  %v91 = vpop.f32.mrb[0].mxu0
  %v92 = vadd.f32 %v31, %v91
  %v93 = vpop.f32.mrb[0].mxu0
  %94 = vdwg.mxu0
  %v95 = vld [vmem:[%s3] sm:$0xff]
  %v96 = vld [vmem:[%s3 + $0x8] sm:$0xff]
  %vm97 = vcmask 80896
  %v98 = vsel %vm97, %v89, -inf
  %99 = vmax.xlane.f32.xlu0 %v98
  %v100 = vpop.xlane.xlu0 %99
  %v101 = vsel %vm97, %v92, -inf
  %102 = vmax.xlane.f32.xlu0 %v101
  %v103 = vpop.xlane.xlu0 %102
  %v104 = vsub.f32 %v89, %v100
  %v105 = vsub.f32 %v92, %v103
  %v106 = vmul.f32 %v104, 1.442695
  %v107 = vpow.pop %v106
  %v108 = vmul.f32 %v105, 1.442695
  %v109 = vpow.pop %v108
  %v110 = vsel %vm97, %v107, 0.0
  %111 = vadd.xlane.f32.xlu0 %v110
  %v112 = vpop.xlane.xlu0 %111
  %v113 = vsel %vm97, %v109, 0.0
  %114 = vadd.xlane.f32.xlu0 %v113
  %v115 = vpop.xlane.xlu0 %114
  %v116 = vrcp.pop %v112
  %v117 = vrcp.pop %v115
  %v118 = vmul.f32 %v107, %v116
  %v119 = vmul.f32 %v109, %v117
  %v120 = vlog2.pop %v112
  %v121 = vmul.f32 %v120, 0.6931472
  %v122 = vlog2.pop %v115
  %v123 = vmul.f32 %v122, 0.6931472
  %v124 = vadd.f32 %v100, %v121
  %v125 = vadd.f32 %v103, %v123
  %v126 = vlaneseq
  %v127 = vand.u32 %v126, 127
  %128 = vset.pattern.permute.xlu0 0
  %129 = vperm.xlu0 %128, %v95
  %v130 = vpop.permute.xlu0 %129
  %131 = vset.pattern.permute.xlu0 0
  %132 = vperm.xlu0 %131, %v96
  %v133 = vpop.permute.xlu0 %132
  %vm134 = vcmp.eq.s32.totalorder %v127, %v130
  %vm135 = vcmp.eq.s32.totalorder %v127, %v133
  %v136 = vsel %vm134, %v89, 0.0
  %v137 = vsel %vm135, %v92, 0.0
  %v138 = vsel %vm97, %v136, 0.0
  %139 = vadd.xlane.f32.xlu0 %v138
  %v140 = vpop.xlane.xlu0 %139
  %v141 = vsel %vm97, %v137, 0.0
  %142 = vadd.xlane.f32.xlu0 %v141
  %v143 = vpop.xlane.xlu0 %142
  %vm144 = vcmp.ne.s32.totalorder %v95, 0
  %vm145 = vcmp.ne.s32.totalorder %v96, 0
  %v146 = vsel %vm144, 1, 0
  %v147 = vsel %vm145, 1, 0
  %v148 = vcvt.s32.f32 %v146
  %v149 = vcvt.s32.f32 %v147
  %v150 = vsub.f32 %v124, %v140
  %v151 = vsub.f32 %v125, %v143
  %v152 = vmul.f32 %v150, %v148
  %v153 = vmul.f32 %v151, %v149
  %vm154 = vcmask 7168
  %v155 = vsel %vm154, %v152, 0.0
  %v156 = vsel %vm154, %v153, 0.0
  %v157 = vadd.f32 %v155, %v156
  %v158 = vrot.slane %v157, 4
  %v159 = vadd.f32 %v157, %v158
  %v160 = vrot.slane %v159, 2
  %v161 = vadd.f32 %v159, %v160
  %v162 = vrot.slane %v161, 1
  %v163 = vadd.f32 %v161, %v162
  %v164 = vsel %vm154, %v148, 0.0
  %v165 = vsel %vm154, %v149, 0.0
  %v166 = vadd.f32 %v164, %v165
  %v167 = vrot.slane %v166, 4
  %v168 = vadd.f32 %v166, %v167
  %v169 = vrot.slane %v168, 2
  %v170 = vadd.f32 %v168, %v169
  %v171 = vrot.slane %v170, 1
  %v172 = vadd.f32 %v170, %v171
  %vm173 = vcmask 179280
  %v174 = vsel %vm173, %v89, -inf
  %175 = vmax.xlane.f32.xlu0 %v174
  %v176 = vpop.xlane.xlu0 %175
  %v177 = vsel %vm173, %v92, -inf
  %178 = vmax.xlane.f32.xlu0 %v177
  %v179 = vpop.xlane.xlu0 %178
  %v180 = vsub.f32 %v89, %v176
  %v181 = vsub.f32 %v92, %v179
  %v182 = vmul.f32 %v180, 1.442695
  %v183 = vpow.pop %v182
  %v184 = vmul.f32 %v181, 1.442695
  %v185 = vpow.pop %v184
  %188 = vrot.lane.b32.xlu0 %v183, 118
  %v189 = vpop.permute.xlu0 %188
  %190 = vrot.lane.b32.xlu0 %v185, 118
  %v191 = vpop.permute.xlu0 %190
  %vm194 = vcmask 97280
  %v195 = vsel %vm194, %v189, 0.0
  %196 = vadd.xlane.f32.xlu0 %v195
  %v197 = vpop.xlane.xlu0 %196
  %v198 = vsel %vm194, %v191, 0.0
  %199 = vadd.xlane.f32.xlu0 %v198
  %v200 = vpop.xlane.xlu0 %199
  %v201 = vrcp.pop %v197
  %v202 = vrcp.pop %v200
  %v203 = vmul.f32 %v183, %v201
  %v204 = vmul.f32 %v185, %v202
  %v205 = vlog2.pop %v197
  %v206 = vmul.f32 %v205, 0.6931472
  %v207 = vlog2.pop %v200
  %v208 = vmul.f32 %v207, 0.6931472
  %v209 = vadd.f32 %v176, %v206
  %v210 = vadd.f32 %v179, %v208
  %211 = vset.pattern.permute.xlu0 1
  %212 = vperm.xlu0 %211, %v95
  %v213 = vpop.permute.xlu0 %212
  %214 = vset.pattern.permute.xlu0 1
  %215 = vperm.xlu0 %214, %v96
  %v216 = vpop.permute.xlu0 %215
  %vm217 = vcmp.eq.s32.totalorder %v127, %v213
  %vm218 = vcmp.eq.s32.totalorder %v127, %v216
  %221 = vrot.lane.b32.xlu0 %v89, 118
  %v222 = vpop.permute.xlu0 %221
  %223 = vrot.lane.b32.xlu0 %v92, 118
  %v224 = vpop.permute.xlu0 %223
  %v227 = vsel %vm217, %v222, 0.0
  %v228 = vsel %vm218, %v224, 0.0
  %v229 = vsel %vm194, %v227, 0.0
  %230 = vadd.xlane.f32.xlu0 %v229
  %v231 = vpop.xlane.xlu0 %230
  %v232 = vsel %vm194, %v228, 0.0
  %233 = vadd.xlane.f32.xlu0 %v232
  %v234 = vpop.xlane.xlu0 %233
  %v235 = vsub.f32 %v209, %v231
  %v236 = vsub.f32 %v210, %v234
  %v237 = vmul.f32 %v235, %v148
  %v238 = vmul.f32 %v236, %v149
  %vm239 = vcmask 15368
  %v240 = vsel %vm239, %v237, 0.0
  %v241 = vsel %vm239, %v238, 0.0
  %v242 = vadd.f32 %v240, %v241
  %v243 = vrot.slane %v242, 4
  %v244 = vadd.f32 %v242, %v243
  %v245 = vrot.slane %v244, 2
  %v246 = vadd.f32 %v244, %v245
  %v247 = vrot.slane %v246, 1
  %v248 = vadd.f32 %v246, %v247
  %v249 = vsel %vm239, %v148, 0.0
  %v250 = vsel %vm239, %v149, 0.0
  %v251 = vadd.f32 %v249, %v250
  %v252 = vrot.slane %v251, 4
  %v253 = vadd.f32 %v251, %v252
  %v254 = vrot.slane %v253, 2
  %v255 = vadd.f32 %v253, %v254
  %v256 = vrot.slane %v255, 1
  %v257 = vadd.f32 %v255, %v256
  %vm258 = vcmask 212144
  %v259 = vsel %vm258, %v89, -inf
  %260 = vmax.xlane.f32.xlu0 %v259
  %v261 = vpop.xlane.xlu0 %260
  %v262 = vsel %vm258, %v92, -inf
  %263 = vmax.xlane.f32.xlu0 %v262
  %v264 = vpop.xlane.xlu0 %263
  %v265 = vsub.f32 %v89, %v261
  %v266 = vsub.f32 %v92, %v264
  %v267 = vmul.f32 %v265, 1.442695
  %v268 = vpow.pop %v267
  %v269 = vmul.f32 %v266, 1.442695
  %v270 = vpow.pop %v269
  %273 = vrot.lane.b32.xlu0 %v268, 106
  %v274 = vpop.permute.xlu0 %273
  %275 = vrot.lane.b32.xlu0 %v270, 106
  %v276 = vpop.permute.xlu0 %275
  %vm279 = vcmask 31744
  %v280 = vsel %vm279, %v274, 0.0
  %281 = vadd.xlane.f32.xlu0 %v280
  %v282 = vpop.xlane.xlu0 %281
  %v283 = vsel %vm279, %v276, 0.0
  %284 = vadd.xlane.f32.xlu0 %v283
  %v285 = vpop.xlane.xlu0 %284
  %v286 = vrcp.pop %v282
  %v287 = vrcp.pop %v285
  %v288 = vmul.f32 %v268, %v286
  %v289 = vmul.f32 %v270, %v287
  %v290 = vlog2.pop %v282
  %v291 = vmul.f32 %v290, 0.6931472
  %v292 = vlog2.pop %v285
  %v293 = vmul.f32 %v292, 0.6931472
  %v294 = vadd.f32 %v261, %v291
  %v295 = vadd.f32 %v264, %v293
  %296 = vset.pattern.permute.xlu0 2
  %297 = vperm.xlu0 %296, %v95
  %v298 = vpop.permute.xlu0 %297
  %299 = vset.pattern.permute.xlu0 2
  %300 = vperm.xlu0 %299, %v96
  %v301 = vpop.permute.xlu0 %300
  %vm302 = vcmp.eq.s32.totalorder %v127, %v298
  %vm303 = vcmp.eq.s32.totalorder %v127, %v301
  %304 = vrot.lane.b32.xlu0 %v89, 106
  %v305 = vpop.permute.xlu0 %304
  %306 = vrot.lane.b32.xlu0 %v92, 106
  %v307 = vpop.permute.xlu0 %306
  %v310 = vsel %vm302, %v305, 0.0
  %v311 = vsel %vm303, %v307, 0.0
  %v312 = vsel %vm279, %v310, 0.0
  %313 = vadd.xlane.f32.xlu0 %v312
  %v314 = vpop.xlane.xlu0 %313
  %v315 = vsel %vm279, %v311, 0.0
  %316 = vadd.xlane.f32.xlu0 %v315
  %v317 = vpop.xlane.xlu0 %316
  %v318 = vsub.f32 %v294, %v314
  %v319 = vsub.f32 %v295, %v317
  %v320 = vmul.f32 %v318, %v148
  %v321 = vmul.f32 %v319, %v149
  %vm322 = vcmask 23568
  %v323 = vsel %vm322, %v320, 0.0
  %v324 = vsel %vm322, %v321, 0.0
  %v325 = vadd.f32 %v323, %v324
  %v326 = vrot.slane %v325, 4
  %v327 = vadd.f32 %v325, %v326
  %v328 = vrot.slane %v327, 2
  %v329 = vadd.f32 %v327, %v328
  %v330 = vrot.slane %v329, 1
  %v331 = vadd.f32 %v329, %v330
  %v332 = vsel %vm322, %v148, 0.0
  %v333 = vsel %vm322, %v149, 0.0
  %v334 = vadd.f32 %v332, %v333
  %v335 = vrot.slane %v334, 4
  %v336 = vadd.f32 %v334, %v335
  %v337 = vrot.slane %v336, 2
  %v338 = vadd.f32 %v336, %v337
  %v339 = vrot.slane %v338, 1
  %v340 = vadd.f32 %v338, %v339
  %vm341 = vcmask 261328
  %v342 = vsel %vm341, %v89, -inf
  %343 = vmax.xlane.f32.xlu0 %v342
  %v344 = vpop.xlane.xlu0 %343
  %v345 = vsel %vm341, %v92, -inf
  %346 = vmax.xlane.f32.xlu0 %v345
  %v347 = vpop.xlane.xlu0 %346
  %v348 = vsub.f32 %v89, %v344
  %v349 = vsub.f32 %v92, %v347
  %v350 = vmul.f32 %v348, 1.442695
  %v351 = vpow.pop %v350
  %v352 = vmul.f32 %v349, 1.442695
  %v353 = vpow.pop %v352
  %356 = vrot.lane.b32.xlu0 %v351, 102
  %v357 = vpop.permute.xlu0 %356
  %358 = vrot.lane.b32.xlu0 %v353, 102
  %v359 = vpop.permute.xlu0 %358
  %vm362 = vcmask 48128
  %v363 = vsel %vm362, %v357, 0.0
  %364 = vadd.xlane.f32.xlu0 %v363
  %v365 = vpop.xlane.xlu0 %364
  %v366 = vsel %vm362, %v359, 0.0
  %367 = vadd.xlane.f32.xlu0 %v366
  %v368 = vpop.xlane.xlu0 %367
  %v369 = vrcp.pop %v365
  %v370 = vrcp.pop %v368
  %v371 = vmul.f32 %v351, %v369
  %v372 = vmul.f32 %v353, %v370
  %v373 = vlog2.pop %v365
  %v374 = vmul.f32 %v373, 0.6931472
  %v375 = vlog2.pop %v368
  %v376 = vmul.f32 %v375, 0.6931472
  %v377 = vadd.f32 %v344, %v374
  %v378 = vadd.f32 %v347, %v376
  %379 = vset.pattern.permute.xlu0 3
  %380 = vperm.xlu0 %379, %v95
  %v381 = vpop.permute.xlu0 %380
  %382 = vset.pattern.permute.xlu0 3
  %383 = vperm.xlu0 %382, %v96
  %v384 = vpop.permute.xlu0 %383
  %vm385 = vcmp.eq.s32.totalorder %v127, %v381
  %vm386 = vcmp.eq.s32.totalorder %v127, %v384
  %387 = vrot.lane.b32.xlu0 %v89, 102
  %v388 = vpop.permute.xlu0 %387
  %389 = vrot.lane.b32.xlu0 %v92, 102
  %v390 = vpop.permute.xlu0 %389
  %v393 = vsel %vm385, %v388, 0.0
  %v394 = vsel %vm386, %v390, 0.0
  %v395 = vsel %vm362, %v393, 0.0
  %396 = vadd.xlane.f32.xlu0 %v395
  %v397 = vpop.xlane.xlu0 %396
  %v398 = vsel %vm362, %v394, 0.0
  %399 = vadd.xlane.f32.xlu0 %v398
  %v400 = vpop.xlane.xlu0 %399
  %v401 = vsub.f32 %v377, %v397
  %v402 = vsub.f32 %v378, %v400
  %v403 = vmul.f32 %v401, %v148
  %v404 = vmul.f32 %v402, %v149
  %vm405 = vcmask 31768
  %v406 = vsel %vm405, %v403, 0.0
  %v407 = vsel %vm405, %v404, 0.0
  %v408 = vadd.f32 %v406, %v407
  %v409 = vrot.slane %v408, 4
  %v410 = vadd.f32 %v408, %v409
  %v411 = vrot.slane %v410, 2
  %v412 = vadd.f32 %v410, %v411
  %v413 = vrot.slane %v412, 1
  %v414 = vadd.f32 %v412, %v413
  %v415 = vsel %vm405, %v148, 0.0
  %v416 = vsel %vm405, %v149, 0.0
  %v417 = vadd.f32 %v415, %v416
  %v418 = vrot.slane %v417, 4
  %v419 = vadd.f32 %v417, %v418
  %v420 = vrot.slane %v419, 2
  %v421 = vadd.f32 %v419, %v420
  %v422 = vrot.slane %v421, 1
  %v423 = vadd.f32 %v421, %v422
  %vm424 = vcmask 285952
  %v425 = vsel %vm424, %v89, -inf
  %426 = vmax.xlane.f32.xlu0 %v425
  %v427 = vpop.xlane.xlu0 %426
  %v428 = vsel %vm424, %v92, -inf
  %429 = vmax.xlane.f32.xlu0 %v428
  %v430 = vpop.xlane.xlu0 %429
  %v431 = vsub.f32 %v89, %v427
  %v432 = vsub.f32 %v92, %v430
  %v433 = vmul.f32 %v431, 1.442695
  %v434 = vpow.pop %v433
  %v435 = vmul.f32 %v432, 1.442695
  %v436 = vpow.pop %v435
  %439 = vrot.lane.b32.xlu0 %v434, 96
  %v440 = vpop.permute.xlu0 %439
  %441 = vrot.lane.b32.xlu0 %v436, 96
  %v442 = vpop.permute.xlu0 %441
  %vm445 = vcmask 23552
  %v446 = vsel %vm445, %v440, 0.0
  %447 = vadd.xlane.f32.xlu0 %v446
  %v448 = vpop.xlane.xlu0 %447
  %v449 = vsel %vm445, %v442, 0.0
  %450 = vadd.xlane.f32.xlu0 %v449
  %v451 = vpop.xlane.xlu0 %450
  %v452 = vrcp.pop %v448
  %v453 = vrcp.pop %v451
  %v454 = vmul.f32 %v434, %v452
  %v455 = vmul.f32 %v436, %v453
  %v456 = vlog2.pop %v448
  %v457 = vmul.f32 %v456, 0.6931472
  %v458 = vlog2.pop %v451
  %v459 = vmul.f32 %v458, 0.6931472
  %v460 = vadd.f32 %v427, %v457
  %v461 = vadd.f32 %v430, %v459
  %462 = vset.pattern.permute.xlu0 4
  %463 = vperm.xlu0 %462, %v95
  %v464 = vpop.permute.xlu0 %463
  %465 = vset.pattern.permute.xlu0 4
  %466 = vperm.xlu0 %465, %v96
  %v467 = vpop.permute.xlu0 %466
  %vm468 = vcmp.eq.s32.totalorder %v127, %v464
  %vm469 = vcmp.eq.s32.totalorder %v127, %v467
  %470 = vrot.lane.b32.xlu0 %v89, 96
  %v471 = vpop.permute.xlu0 %470
  %472 = vrot.lane.b32.xlu0 %v92, 96
  %v473 = vpop.permute.xlu0 %472
  %v476 = vsel %vm468, %v471, 0.0
  %v477 = vsel %vm469, %v473, 0.0
  %v478 = vsel %vm445, %v476, 0.0
  %479 = vadd.xlane.f32.xlu0 %v478
  %v480 = vpop.xlane.xlu0 %479
  %v481 = vsel %vm445, %v477, 0.0
  %482 = vadd.xlane.f32.xlu0 %v481
  %v483 = vpop.xlane.xlu0 %482
  %v484 = vsub.f32 %v460, %v480
  %v485 = vsub.f32 %v461, %v483
  %v486 = vmul.f32 %v484, %v148
  %v487 = vmul.f32 %v485, %v149
  %vm488 = vcmask 39968
  %v489 = vsel %vm488, %v486, 0.0
  %v490 = vsel %vm488, %v487, 0.0
  %v491 = vadd.f32 %v489, %v490
  %v492 = vrot.slane %v491, 4
  %v493 = vadd.f32 %v491, %v492
  %v494 = vrot.slane %v493, 2
  %v495 = vadd.f32 %v493, %v494
  %v496 = vrot.slane %v495, 1
  %v497 = vadd.f32 %v495, %v496
  %v498 = vsel %vm488, %v148, 0.0
  %v499 = vsel %vm488, %v149, 0.0
  %v500 = vadd.f32 %v498, %v499
  %v501 = vrot.slane %v500, 4
  %v502 = vadd.f32 %v500, %v501
  %v503 = vrot.slane %v502, 2
  %v504 = vadd.f32 %v502, %v503
  %v505 = vrot.slane %v504, 1
  %v506 = vadd.f32 %v504, %v505
  %v507 = vsel %vm97, %v118, %v203
  %v508 = vsel %vm97, %v119, %v204
  %vm509 = vcmask 179200
  %v510 = vsel %vm509, %v507, %v288
  %v511 = vsel %vm509, %v508, %v289
  %vm512 = vcmask 211968
  %v513 = vsel %vm512, %v510, %v371
  %v514 = vsel %vm512, %v511, %v372
  %v515 = vsel %vm50, %v513, %v454
  %v516 = vsel %vm50, %v514, %v455
  %vm517 = vcmask 285696
  %v518 = vsel %vm517, %v515, 0.0
  %v519 = vsel %vm517, %v516, 0.0
  %520 = vst [vmem:[%s4] sm:$0xff] %v518
  %521 = vst [vmem:[%s4 + $0x8] sm:$0xff] %v519
  %523 = vrot.lane.b32.xlu0 %v172, 1
  %v524 = vpop.permute.xlu0 %523
  %527 = vrot.lane.b32.xlu0 %v248, 1
  %v528 = vpop.permute.xlu0 %527
  %531 = vrot.lane.b32.xlu0 %v257, 2
  %v532 = vpop.permute.xlu0 %531
  %535 = vrot.lane.b32.xlu0 %v331, 2
  %v536 = vpop.permute.xlu0 %535
  %539 = vrot.lane.b32.xlu0 %v340, 3
  %v540 = vpop.permute.xlu0 %539
  %543 = vrot.lane.b32.xlu0 %v414, 3
  %v544 = vpop.permute.xlu0 %543
  %547 = vrot.lane.b32.xlu0 %v423, 4
  %v548 = vpop.permute.xlu0 %547
  %551 = vrot.lane.b32.xlu0 %v497, 4
  %v552 = vpop.permute.xlu0 %551
  %555 = vrot.lane.b32.xlu0 %v506, 5
  %v556 = vpop.permute.xlu0 %555
  %v558 = vsel %vm154, %v163, %v524
  %vm559 = vcmask 15360
  %v560 = vsel %vm559, %v558, %v528
  %v561 = vsel %vm445, %v560, %v532
  %v562 = vsel %vm279, %v561, %v536
  %vm563 = vcmask 39936
  %v564 = vsel %vm563, %v562, %v540
  %v565 = vsel %vm362, %v564, %v544
  %vm566 = vcmask 56320
  %v567 = vsel %vm566, %v565, %v548
  %vm568 = vcmask 64512
  %v569 = vsel %vm568, %v567, %v552
  %vm570 = vcmask 72704
  %v571 = vsel %vm570, %v569, %v556
  %v572 = vsel %vm97, %v571, 0.0
  %vm573 = vcmask 1040384
  %v574 = vsel %vm573, %v572, 0.0
  %575 = vst [vmem:[%s5] sm:$0xff] %v574
  // Predicated region
  $region18: #{_lambda_.17} parent=0 // pred_check
    _
  $region19: #{_lambda_.17} parent=0 // pred_check_branch
    %577 = sbr.rel (0) target = $region21
  $region20: #{_lambda_.17} parent=0 // pred_region
    _
  $region21: #{_lambda_.17} parent=0 // pred_fallthru
    _
  // Predicated region
  $region22: #{_lambda_.17} parent=0 // pred_check
    _
  $region23: #{_lambda_.17} parent=0 // pred_check_branch
    %579 = sbr.rel (0) target = $region25
  $region24: #{_lambda_.17} parent=0 // pred_region
    _
  $region25: #{_lambda_.17} parent=0 // pred_fallthru
    _
  // Predicated region
  $region26: #{_lambda_.17} parent=0 // pred_check
    _
  $region27: #{_lambda_.17} parent=0 // pred_check_branch
    %581 = sbr.rel (0) target = $region29
  $region28: #{_lambda_.17} parent=0 // pred_region
    _
  $region29: #{_lambda_.17} parent=0 // pred_fallthru
    _
  // Predicated region
  $region30: #{_lambda_.17} parent=0 // pred_check
    _
  $region31: #{_lambda_.17} parent=0 // pred_check_branch
    %583 = sbr.rel (0) target = $region33
  $region32: #{_lambda_.17} parent=0 // pred_region
    _
  $region33: #{_lambda_.17} parent=0 // pred_fallthru
    _

</llo_original>
